<compile_context>
chip_gen: v7x
topology: tpu7x:2x2x1
jax: 0.10.0
libtpu: 0.0.40
codegen_flags: <defaults>
</compile_context>

<pallas_src>
import jax
import jax.numpy as jnp
import numpy as np
from jax.experimental import pallas as pl
from jax.experimental.pallas import tpu as pltpu


# ----------------------------- fused Pallas kernel -------------------------- #

def _make_fused_kernel(plan, out_block):
    """plan: tuple of (kind, relu) per layer, kind in {"dense","conv_sel","conv_rows"}.

    Ref order: [patches, (layer tensors...), fc2_w_row, fc2_b_row, out].
      dense     : (w, b)        h = act(h_bf16 @ w + b)
      conv_sel  : (sel, w, b)   h = act( sum_k (sel[k] @ h_bf16) @ w[k] + b )
      conv_rows : (w, b)        h = act( sum_k h[k:k+1,:] @ w[k] + b )
    Epilogue (fc2): value = <h, w_row> + b via a lane reduction, broadcast into a
    lane-dense (8,128) block; the wrapper reads element [..., 0, 0].
    """

    def kernel(*refs):
        out_ref = refs[-1]
        h = refs[0][0]                       # (M1, K1) bf16 conv1 patches, this sample
        pos = 1
        for kind, relu in plan:
            if kind == "conv_sel":
                s_ref, w_ref, b_ref = refs[pos], refs[pos + 1], refs[pos + 2]
                pos += 3
                hb = h.astype(jnp.bfloat16)
                acc = None
                for k in range(s_ref.shape[0]):
                    gk = jnp.dot(s_ref[k], hb,
                                 preferred_element_type=jnp.float32)
                    t = jnp.dot(gk.astype(jnp.bfloat16), w_ref[k],
                                preferred_element_type=jnp.float32)
                    acc = t if acc is None else acc + t
            elif kind == "conv_rows":
                w_ref, b_ref = refs[pos], refs[pos + 1]
                pos += 2
                acc = None
                for k in range(w_ref.shape[0]):
                    t = jnp.dot(h[k:k + 1, :].astype(jnp.bfloat16), w_ref[k],
                                preferred_element_type=jnp.float32)
                    acc = t if acc is None else acc + t
            else:  # "dense"
                w_ref, b_ref = refs[pos], refs[pos + 1]
                pos += 2
                acc = jnp.dot(h.astype(jnp.bfloat16), w_ref[...],
                              preferred_element_type=jnp.float32)
            acc = acc + b_ref[...]           # f32 bias
            if relu:
                acc = jnp.maximum(acc, 0.0)  # f32 ReLU
            h = acc

        # fc2: lane reduction instead of a zero-padded (512,128) weight.
        w5_ref, b5_ref = refs[pos], refs[pos + 1]
        val = jnp.sum(h * w5_ref[...], axis=-1, keepdims=True)      # (1,1) f32
        out_ref[0] = jnp.broadcast_to(val, out_block) + b5_ref[...]  # lane-dense store

    return kernel


def _cost_estimate(inputs, plan, batch):
    """Advisory flops / bytes for XLA's scheduler."""
    bytes_accessed = sum(int(np.prod(t.shape)) * t.dtype.itemsize for t in inputs)
    bytes_accessed += batch * 8 * 128 * 4
    flops = 0
    m = int(inputs[0].shape[1])
    pos = 1
    for kind, _ in plan:
        if kind == "conv_sel":
            s, w = inputs[pos], inputs[pos + 1]
            pos += 3
            npos, mo, mi = (int(d) for d in s.shape)
            ic, oc = int(w.shape[1]), int(w.shape[2])
            flops += 2 * npos * mo * mi * ic + 2 * npos * mo * ic * oc
            m = mo
        elif kind == "conv_rows":
            w = inputs[pos]
            pos += 2
            npos, ic, oc = (int(d) for d in w.shape)
            flops += 2 * npos * ic * oc
            m = 1
        else:
            w = inputs[pos]
            pos += 2
            flops += 2 * m * int(w.shape[0]) * int(w.shape[1])
    flops += 2 * int(inputs[pos].shape[1])     # fc2 lane reduce
    return pl.CostEstimate(flops=int(flops * batch), transcendentals=0,
                           bytes_accessed=int(bytes_accessed))


# ------------------------------ wrapper (JAX) -------------------------------- #

def _im2col_per_sample(x_nhwc, kh, kw, stride):
    """(N,H,W,C) -> (N, OH*OW, KH*KW*C), column order (kh, kw, c)."""
    n, h, w, c = x_nhwc.shape
    oh = (h - kh) // stride + 1
    ow = (w - kw) // stride + 1
    cols = []
    for i in range(kh):
        for j in range(kw):
            cols.append(x_nhwc[:, i:i + stride * oh:stride, j:j + stride * ow:stride, :])
    p = jnp.stack(cols, axis=0).reshape(kh, kw, n, oh, ow, c)
    p = p.transpose(2, 3, 4, 0, 1, 5)          # (N, OH, OW, KH, KW, C)
    return p.reshape(n, oh * ow, kh * kw * c)


def _const_index_map(nd):
    return lambda b: (0,) * nd


def critic_forward(kernel_tensors, plan, x):
    """x: (N, C, H, W) float32 -> (N,) value estimates."""
    n = x.shape[0]
    x_nhwc = jnp.transpose(x, (0, 2, 3, 1)).astype(jnp.float32)
    p1 = _im2col_per_sample(x_nhwc, kh=8, kw=8, stride=4).astype(jnp.bfloat16)
    inputs = (p1,) + tuple(kernel_tensors)

    in_specs = [pl.BlockSpec((1,) + p1.shape[1:], lambda b: (b, 0, 0))]
    for t in kernel_tensors:   # weights / selections / biases: VMEM-resident, fetched once
        in_specs.append(pl.BlockSpec(t.shape, _const_index_map(t.ndim)))

    out_block = (8, 128)       # lane-dense, sublane-aligned per-sample output block
    out = pl.pallas_call(
        _make_fused_kernel(plan, out_block),
        grid=(n,),
        out_shape=jax.ShapeDtypeStruct((n,) + out_block, jnp.float32),
        in_specs=in_specs,
        out_specs=pl.BlockSpec((1,) + out_block, lambda b: (b, 0, 0)),
        compiler_params=pltpu.CompilerParams(
            dimension_semantics=("parallel",),
            vmem_limit_bytes=32 * 1024 * 1024),
        cost_estimate=_cost_estimate(inputs, plan, n),
    )(*inputs)
    return out[:, 0, 0]


# ------------------------- one-time parameter packing ------------------------ #

def _conv_selection_per_sample(ih, iw, kh, kw, stride):
    """Per-sample 0/1 selections S[k] (OH*OW, IH*IW); k = i*kw + j."""
    oh = (ih - kh) // stride + 1
    ow = (iw - kw) // stride + 1
    s = np.zeros((kh * kw, oh * ow, ih * iw), np.float32)
    for y in range(oh):
        for xx in range(ow):
            r = y * ow + xx
            for i in range(kh):
                for j in range(kw):
                    s[i * kw + j, r, (y * stride + i) * iw + (xx * stride + j)] = 1.0
    return s


def pack_params(params, img_size):
    """Pre-reshape / pre-transpose all weights ONCE into bf16 kernel layouts and
    build the per-sample (batch-independent) conv2 selection tensor."""
    c_in, h, w = img_size
    oh1, ow1 = (h - 8) // 4 + 1, (w - 8) // 4 + 1
    oh2, ow2 = (oh1 - 4) // 2 + 1, (ow1 - 4) // 2 + 1
    oh3, ow3 = (oh2 - 3) // 1 + 1, (ow2 - 3) // 1 + 1
    p3 = oh3 * ow3
    bf, f32 = jnp.bfloat16, jnp.float32

    tensors, plan = [], []

    # conv1: single GEMM on pre-gathered (kh,kw,c)-ordered bf16 patches.
    w1 = jnp.transpose(params["conv1_w"], (2, 3, 1, 0)).reshape(8 * 8 * c_in, 32).astype(bf)
    tensors += [w1, params["conv1_b"].reshape(1, 32).astype(f32)]
    plan.append(("dense", True))

    # conv2: per-sample selection conv (O(1) in batch; ~18 KB bf16, fetched once).
    s2 = jnp.asarray(_conv_selection_per_sample(oh1, ow1, 4, 4, 2)).astype(bf)
    w2 = jnp.transpose(params["conv2_w"], (2, 3, 1, 0)).reshape(16, 32, 64).astype(bf)
    tensors += [s2, w2, params["conv2_b"].reshape(1, 64).astype(f32)]
    plan.append(("conv_sel", True))

    # conv3: its 3x3 kernel covers the whole 3x3 conv2 output here, so kernel
    # position k reads exactly row k of h2 -> no selection tensor needed.
    w3 = jnp.transpose(params["conv3_w"], (2, 3, 1, 0)).reshape(9, 64, 64).astype(bf)
    if oh3 == 1 and ow3 == 1:
        tensors += [w3, params["conv3_b"].reshape(1, 64).astype(f32)]
        plan.append(("conv_rows", True))
    else:
        s3 = jnp.asarray(_conv_selection_per_sample(oh2, ow2, 3, 3, 1)).astype(bf)
        tensors += [s3, w3, params["conv3_b"].reshape(1, 64).astype(f32)]
        plan.append(("conv_sel", True))

    # fc1: PyTorch flattens (C, H, W) -> column index = c * p3 + spatial.
    w4_full = params["fc1_w"].reshape(512, 64, p3)                    # (out, c, s)
    if p3 == 1:
        w4 = jnp.transpose(w4_full[:, :, 0], (1, 0)).astype(bf)       # (64, 512)
        tensors += [w4, params["fc1_b"].reshape(1, 512).astype(f32)]
        plan.append(("dense", True))
    else:
        w4 = jnp.transpose(w4_full, (2, 1, 0)).astype(bf)             # (p3, 64, 512)
        tensors += [w4, params["fc1_b"].reshape(1, 512).astype(f32)]
        plan.append(("conv_rows", True))

    # fc2: keep as an f32 row (2 KB) and a lane-replicated bias row; the kernel
    # does the dot as a lane reduction (no zero-padded weight, no MXU push).
    w5 = params["fc2_w"].reshape(1, 512).astype(f32)
    b5 = jnp.broadcast_to(params["fc2_b"].reshape(1, 1), (1, 128)).astype(f32)
    tensors += [w5, b5]

    return tuple(tensors), tuple(plan)


# --------------------------- parameter construction -------------------------- #

def _orthogonal(key, shape, gain):
    """torch.nn.init.orthogonal_ equivalent (deterministic given key)."""
    rows = shape[0]
    cols = int(np.prod(shape[1:]))
    flat = jax.random.normal(key, (rows, cols), dtype=jnp.float32)
    if rows < cols:
        flat = flat.T
    q, r = jnp.linalg.qr(flat)
    q = q * jnp.sign(jnp.diag(r))
    if rows < cols:
        q = q.T
    return (gain * q).reshape(shape).astype(jnp.float32)


def init_critic_params(key, img_size):
    c_in, h, w = img_size
    gain_relu = float(np.sqrt(2.0))            # nn.init.calculate_gain('relu')
    ks = jax.random.split(key, 5)

    def conv_out(s, k, st):
        return (s - k) // st + 1

    h1, w1 = conv_out(h, 8, 4), conv_out(w, 8, 4)
    h2, w2 = conv_out(h1, 4, 2), conv_out(w1, 4, 2)
    h3, w3 = conv_out(h2, 3, 1), conv_out(w2, 3, 1)
    feat_size = 64 * h3 * w3

    params = {
        "conv1_w": _orthogonal(ks[0], (32, c_in, 8, 8), gain_relu),
        "conv1_b": jnp.zeros((32,), jnp.float32),
        "conv2_w": _orthogonal(ks[1], (64, 32, 4, 4), gain_relu),
        "conv2_b": jnp.zeros((64,), jnp.float32),
        "conv3_w": _orthogonal(ks[2], (64, 64, 3, 3), gain_relu),
        "conv3_b": jnp.zeros((64,), jnp.float32),
        "fc1_w": _orthogonal(ks[3], (512, feat_size), gain_relu),
        "fc1_b": jnp.zeros((512,), jnp.float32),
        "fc2_w": _orthogonal(ks[4], (1, 512), 1.0),
        "fc2_b": jnp.zeros((1,), jnp.float32),
    }
    return params, feat_size


# ------------------------------ pure-JAX reference --------------------------- #

def _reference_forward(params, x):
    def conv(x, w, b, s):
        y = jax.lax.conv_general_dilated(
            x, w, window_strides=(s, s), padding="VALID",
            dimension_numbers=("NCHW", "OIHW", "NCHW"))
        return jax.nn.relu(y + b[None, :, None, None])

    y = conv(x, params["conv1_w"], params["conv1_b"], 4)
    y = conv(y, params["conv2_w"], params["conv2_b"], 2)
    y = conv(y, params["conv3_w"], params["conv3_b"], 1)
    feat = y.reshape(y.shape[0], -1)
    feat = jax.nn.relu(feat @ params["fc1_w"].T + params["fc1_b"])
    out = feat @ params["fc2_w"].T + params["fc2_b"]
    return out.squeeze(-1)


# ------------------------------------ main ----------------------------------- #

if __name__ == "__main__":
    key = jax.random.PRNGKey(0)
    img_size = (4, 36, 36)        # (C, H, W): smallest clean fit for the conv stack
    batch = 2

    pkey, xkey = jax.random.split(key)
    params, feat_size = init_critic_params(pkey, img_size)
    kernel_tensors, plan = pack_params(params, img_size)
    x = jax.random.normal(xkey, (batch, *img_size), dtype=jnp.float32)

    fwd = jax.jit(critic_forward, static_argnums=(1,))
    out = jax.block_until_ready(fwd(kernel_tensors, plan, x))
    assert out.shape == (batch,), out.shape

    ref = jax.block_until_ready(_reference_forward(params, x))
    # bf16 MXU operands -> loosen the f32-reference tolerance.
    np.testing.assert_allclose(np.asarray(out), np.asarray(ref), rtol=5e-2, atol=5e-2)

    print("KERNEL_OK")
</pallas_src>

<mosaic_0001>
module attributes {stable_mosaic.version = 11 : i64} {
  func.func @kernel(%arg0: i32, %arg1: memref<1x64x256xbf16, #tpu.memory_space<vmem>>, %arg2: memref<256x32xbf16, #tpu.memory_space<vmem>>, %arg3: memref<1x32xf32, #tpu.memory_space<vmem>>, %arg4: memref<16x9x64xbf16, #tpu.memory_space<vmem>>, %arg5: memref<16x32x64xbf16, #tpu.memory_space<vmem>>, %arg6: memref<1x64xf32, #tpu.memory_space<vmem>>, %arg7: memref<9x64x64xbf16, #tpu.memory_space<vmem>>, %arg8: memref<1x64xf32, #tpu.memory_space<vmem>>, %arg9: memref<64x512xbf16, #tpu.memory_space<vmem>>, %arg10: memref<1x512xf32, #tpu.memory_space<vmem>>, %arg11: memref<1x512xf32, #tpu.memory_space<vmem>>, %arg12: memref<1x128xf32, #tpu.memory_space<vmem>>, %arg13: memref<1x8x128xf32, #tpu.memory_space<vmem>>) attributes {dimension_semantics = [#tpu.dimension_semantics<parallel>], iteration_bounds = array<i64: 2>, scalar_prefetch = 0 : i64, scratch_operands = 0 : i64, tpu.core_type = #tpu.core_type<tc>, window_params = [{transform_indices = @transform_0, window_bounds = array<i64: 1, 64, 256>}, {pipeline_mode = #tpu.pipeline_mode<synchronous>, transform_indices = @transform_1, window_bounds = array<i64: 256, 32>}, {pipeline_mode = #tpu.pipeline_mode<synchronous>, transform_indices = @transform_2, window_bounds = array<i64: 1, 32>}, {pipeline_mode = #tpu.pipeline_mode<synchronous>, transform_indices = @transform_3, window_bounds = array<i64: 16, 9, 64>}, {pipeline_mode = #tpu.pipeline_mode<synchronous>, transform_indices = @transform_4, window_bounds = array<i64: 16, 32, 64>}, {pipeline_mode = #tpu.pipeline_mode<synchronous>, transform_indices = @transform_5, window_bounds = array<i64: 1, 64>}, {pipeline_mode = #tpu.pipeline_mode<synchronous>, transform_indices = @transform_6, window_bounds = array<i64: 9, 64, 64>}, {pipeline_mode = #tpu.pipeline_mode<synchronous>, transform_indices = @transform_7, window_bounds = array<i64: 1, 64>}, {pipeline_mode = #tpu.pipeline_mode<synchronous>, transform_indices = @transform_8, window_bounds = array<i64: 64, 512>}, {pipeline_mode = #tpu.pipeline_mode<synchronous>, transform_indices = @transform_9, window_bounds = array<i64: 1, 512>}, {pipeline_mode = #tpu.pipeline_mode<synchronous>, transform_indices = @transform_10, window_bounds = array<i64: 1, 512>}, {pipeline_mode = #tpu.pipeline_mode<synchronous>, transform_indices = @transform_11, window_bounds = array<i64: 1, 128>}, {transform_indices = @transform_12, window_bounds = array<i64: 1, 8, 128>}]} {
    %c0 = arith.constant 0 : index
    %c0_0 = arith.constant 0 : index
    %c0_1 = arith.constant 0 : index
    %0 = vector.load %arg1[%c0, %c0_0, %c0_1] : memref<1x64x256xbf16, #tpu.memory_space<vmem>>, vector<1x64x256xbf16>
    %1 = vector.shape_cast %0 : vector<1x64x256xbf16> to vector<64x256xbf16>
    %c0_2 = arith.constant 0 : index
    %c0_3 = arith.constant 0 : index
    %2 = vector.load %arg2[%c0_2, %c0_3] : memref<256x32xbf16, #tpu.memory_space<vmem>>, vector<256x32xbf16>
    %cst = arith.constant dense<0.000000e+00> : vector<64x32xf32>
    %3 = tpu.matmul %1, %2, %cst {dimension_numbers = #tpu.dot_dimension_numbers<[1], [0], [0], [1], [0, 0, 1, 1], [], []>} : vector<64x256xbf16>, vector<256x32xbf16>, vector<64x32xf32> -> vector<64x32xf32>
    %c0_4 = arith.constant 0 : index
    %c0_5 = arith.constant 0 : index
    %4 = vector.load %arg3[%c0_4, %c0_5] : memref<1x32xf32, #tpu.memory_space<vmem>>, vector<1x32xf32>
    %5 = vector.broadcast %4 : vector<1x32xf32> to vector<64x32xf32>
    %6 = arith.addf %3, %5 : vector<64x32xf32>
    %cst_6 = arith.constant 0.000000e+00 : f32
    %7 = vector.broadcast %cst_6 : f32 to vector<64x32xf32>
    %8 = arith.maximumf %6, %7 : vector<64x32xf32>
    %9 = arith.truncf %8 : vector<64x32xf32> to vector<64x32xbf16>
    %c0_7 = arith.constant 0 : index
    %c0_8 = arith.constant 0 : index
    %c0_9 = arith.constant 0 : index
    %10 = vector.load %arg4[%c0_7, %c0_8, %c0_9] : memref<16x9x64xbf16, #tpu.memory_space<vmem>>, vector<1x9x64xbf16>
    %11 = vector.shape_cast %10 : vector<1x9x64xbf16> to vector<9x64xbf16>
    %cst_10 = arith.constant dense<0.000000e+00> : vector<9x32xf32>
    %12 = tpu.matmul %11, %9, %cst_10 {dimension_numbers = #tpu.dot_dimension_numbers<[1], [0], [0], [1], [0, 0, 1, 1], [], []>} : vector<9x64xbf16>, vector<64x32xbf16>, vector<9x32xf32> -> vector<9x32xf32>
    %13 = arith.truncf %12 : vector<9x32xf32> to vector<9x32xbf16>
    %c0_11 = arith.constant 0 : index
    %c0_12 = arith.constant 0 : index
    %c0_13 = arith.constant 0 : index
    %14 = vector.load %arg5[%c0_11, %c0_12, %c0_13] : memref<16x32x64xbf16, #tpu.memory_space<vmem>>, vector<1x32x64xbf16>
    %15 = vector.shape_cast %14 : vector<1x32x64xbf16> to vector<32x64xbf16>
    %cst_14 = arith.constant dense<0.000000e+00> : vector<9x64xf32>
    %16 = tpu.matmul %13, %15, %cst_14 {dimension_numbers = #tpu.dot_dimension_numbers<[1], [0], [0], [1], [0, 0, 1, 1], [], []>} : vector<9x32xbf16>, vector<32x64xbf16>, vector<9x64xf32> -> vector<9x64xf32>
    %c1 = arith.constant 1 : index
    %c0_15 = arith.constant 0 : index
    %c0_16 = arith.constant 0 : index
    %17 = vector.load %arg4[%c1, %c0_15, %c0_16] : memref<16x9x64xbf16, #tpu.memory_space<vmem>>, vector<1x9x64xbf16>
    %18 = vector.shape_cast %17 : vector<1x9x64xbf16> to vector<9x64xbf16>
    %cst_17 = arith.constant dense<0.000000e+00> : vector<9x32xf32>
    %19 = tpu.matmul %18, %9, %cst_17 {dimension_numbers = #tpu.dot_dimension_numbers<[1], [0], [0], [1], [0, 0, 1, 1], [], []>} : vector<9x64xbf16>, vector<64x32xbf16>, vector<9x32xf32> -> vector<9x32xf32>
    %20 = arith.truncf %19 : vector<9x32xf32> to vector<9x32xbf16>
    %c1_18 = arith.constant 1 : index
    %c0_19 = arith.constant 0 : index
    %c0_20 = arith.constant 0 : index
    %21 = vector.load %arg5[%c1_18, %c0_19, %c0_20] : memref<16x32x64xbf16, #tpu.memory_space<vmem>>, vector<1x32x64xbf16>
    %22 = vector.shape_cast %21 : vector<1x32x64xbf16> to vector<32x64xbf16>
    %cst_21 = arith.constant dense<0.000000e+00> : vector<9x64xf32>
    %23 = tpu.matmul %20, %22, %cst_21 {dimension_numbers = #tpu.dot_dimension_numbers<[1], [0], [0], [1], [0, 0, 1, 1], [], []>} : vector<9x32xbf16>, vector<32x64xbf16>, vector<9x64xf32> -> vector<9x64xf32>
    %24 = arith.addf %16, %23 : vector<9x64xf32>
    %c2 = arith.constant 2 : index
    %c0_22 = arith.constant 0 : index
    %c0_23 = arith.constant 0 : index
    %25 = vector.load %arg4[%c2, %c0_22, %c0_23] : memref<16x9x64xbf16, #tpu.memory_space<vmem>>, vector<1x9x64xbf16>
    %26 = vector.shape_cast %25 : vector<1x9x64xbf16> to vector<9x64xbf16>
    %cst_24 = arith.constant dense<0.000000e+00> : vector<9x32xf32>
    %27 = tpu.matmul %26, %9, %cst_24 {dimension_numbers = #tpu.dot_dimension_numbers<[1], [0], [0], [1], [0, 0, 1, 1], [], []>} : vector<9x64xbf16>, vector<64x32xbf16>, vector<9x32xf32> -> vector<9x32xf32>
    %28 = arith.truncf %27 : vector<9x32xf32> to vector<9x32xbf16>
    %c2_25 = arith.constant 2 : index
    %c0_26 = arith.constant 0 : index
    %c0_27 = arith.constant 0 : index
    %29 = vector.load %arg5[%c2_25, %c0_26, %c0_27] : memref<16x32x64xbf16, #tpu.memory_space<vmem>>, vector<1x32x64xbf16>
    %30 = vector.shape_cast %29 : vector<1x32x64xbf16> to vector<32x64xbf16>
    %cst_28 = arith.constant dense<0.000000e+00> : vector<9x64xf32>
    %31 = tpu.matmul %28, %30, %cst_28 {dimension_numbers = #tpu.dot_dimension_numbers<[1], [0], [0], [1], [0, 0, 1, 1], [], []>} : vector<9x32xbf16>, vector<32x64xbf16>, vector<9x64xf32> -> vector<9x64xf32>
    %32 = arith.addf %24, %31 : vector<9x64xf32>
    %c3 = arith.constant 3 : index
    %c0_29 = arith.constant 0 : index
    %c0_30 = arith.constant 0 : index
    %33 = vector.load %arg4[%c3, %c0_29, %c0_30] : memref<16x9x64xbf16, #tpu.memory_space<vmem>>, vector<1x9x64xbf16>
    %34 = vector.shape_cast %33 : vector<1x9x64xbf16> to vector<9x64xbf16>
    %cst_31 = arith.constant dense<0.000000e+00> : vector<9x32xf32>
    %35 = tpu.matmul %34, %9, %cst_31 {dimension_numbers = #tpu.dot_dimension_numbers<[1], [0], [0], [1], [0, 0, 1, 1], [], []>} : vector<9x64xbf16>, vector<64x32xbf16>, vector<9x32xf32> -> vector<9x32xf32>
    %36 = arith.truncf %35 : vector<9x32xf32> to vector<9x32xbf16>
    %c3_32 = arith.constant 3 : index
    %c0_33 = arith.constant 0 : index
    %c0_34 = arith.constant 0 : index
    %37 = vector.load %arg5[%c3_32, %c0_33, %c0_34] : memref<16x32x64xbf16, #tpu.memory_space<vmem>>, vector<1x32x64xbf16>
    %38 = vector.shape_cast %37 : vector<1x32x64xbf16> to vector<32x64xbf16>
    %cst_35 = arith.constant dense<0.000000e+00> : vector<9x64xf32>
    %39 = tpu.matmul %36, %38, %cst_35 {dimension_numbers = #tpu.dot_dimension_numbers<[1], [0], [0], [1], [0, 0, 1, 1], [], []>} : vector<9x32xbf16>, vector<32x64xbf16>, vector<9x64xf32> -> vector<9x64xf32>
    %40 = arith.addf %32, %39 : vector<9x64xf32>
    %c4 = arith.constant 4 : index
    %c0_36 = arith.constant 0 : index
    %c0_37 = arith.constant 0 : index
    %41 = vector.load %arg4[%c4, %c0_36, %c0_37] : memref<16x9x64xbf16, #tpu.memory_space<vmem>>, vector<1x9x64xbf16>
    %42 = vector.shape_cast %41 : vector<1x9x64xbf16> to vector<9x64xbf16>
    %cst_38 = arith.constant dense<0.000000e+00> : vector<9x32xf32>
    %43 = tpu.matmul %42, %9, %cst_38 {dimension_numbers = #tpu.dot_dimension_numbers<[1], [0], [0], [1], [0, 0, 1, 1], [], []>} : vector<9x64xbf16>, vector<64x32xbf16>, vector<9x32xf32> -> vector<9x32xf32>
    %44 = arith.truncf %43 : vector<9x32xf32> to vector<9x32xbf16>
    %c4_39 = arith.constant 4 : index
    %c0_40 = arith.constant 0 : index
    %c0_41 = arith.constant 0 : index
    %45 = vector.load %arg5[%c4_39, %c0_40, %c0_41] : memref<16x32x64xbf16, #tpu.memory_space<vmem>>, vector<1x32x64xbf16>
    %46 = vector.shape_cast %45 : vector<1x32x64xbf16> to vector<32x64xbf16>
    %cst_42 = arith.constant dense<0.000000e+00> : vector<9x64xf32>
    %47 = tpu.matmul %44, %46, %cst_42 {dimension_numbers = #tpu.dot_dimension_numbers<[1], [0], [0], [1], [0, 0, 1, 1], [], []>} : vector<9x32xbf16>, vector<32x64xbf16>, vector<9x64xf32> -> vector<9x64xf32>
    %48 = arith.addf %40, %47 : vector<9x64xf32>
    %c5 = arith.constant 5 : index
    %c0_43 = arith.constant 0 : index
    %c0_44 = arith.constant 0 : index
    %49 = vector.load %arg4[%c5, %c0_43, %c0_44] : memref<16x9x64xbf16, #tpu.memory_space<vmem>>, vector<1x9x64xbf16>
    %50 = vector.shape_cast %49 : vector<1x9x64xbf16> to vector<9x64xbf16>
    %cst_45 = arith.constant dense<0.000000e+00> : vector<9x32xf32>
    %51 = tpu.matmul %50, %9, %cst_45 {dimension_numbers = #tpu.dot_dimension_numbers<[1], [0], [0], [1], [0, 0, 1, 1], [], []>} : vector<9x64xbf16>, vector<64x32xbf16>, vector<9x32xf32> -> vector<9x32xf32>
    %52 = arith.truncf %51 : vector<9x32xf32> to vector<9x32xbf16>
    %c5_46 = arith.constant 5 : index
    %c0_47 = arith.constant 0 : index
    %c0_48 = arith.constant 0 : index
    %53 = vector.load %arg5[%c5_46, %c0_47, %c0_48] : memref<16x32x64xbf16, #tpu.memory_space<vmem>>, vector<1x32x64xbf16>
    %54 = vector.shape_cast %53 : vector<1x32x64xbf16> to vector<32x64xbf16>
    %cst_49 = arith.constant dense<0.000000e+00> : vector<9x64xf32>
    %55 = tpu.matmul %52, %54, %cst_49 {dimension_numbers = #tpu.dot_dimension_numbers<[1], [0], [0], [1], [0, 0, 1, 1], [], []>} : vector<9x32xbf16>, vector<32x64xbf16>, vector<9x64xf32> -> vector<9x64xf32>
    %56 = arith.addf %48, %55 : vector<9x64xf32>
    %c6 = arith.constant 6 : index
    %c0_50 = arith.constant 0 : index
    %c0_51 = arith.constant 0 : index
    %57 = vector.load %arg4[%c6, %c0_50, %c0_51] : memref<16x9x64xbf16, #tpu.memory_space<vmem>>, vector<1x9x64xbf16>
    %58 = vector.shape_cast %57 : vector<1x9x64xbf16> to vector<9x64xbf16>
    %cst_52 = arith.constant dense<0.000000e+00> : vector<9x32xf32>
    %59 = tpu.matmul %58, %9, %cst_52 {dimension_numbers = #tpu.dot_dimension_numbers<[1], [0], [0], [1], [0, 0, 1, 1], [], []>} : vector<9x64xbf16>, vector<64x32xbf16>, vector<9x32xf32> -> vector<9x32xf32>
    %60 = arith.truncf %59 : vector<9x32xf32> to vector<9x32xbf16>
    %c6_53 = arith.constant 6 : index
    %c0_54 = arith.constant 0 : index
    %c0_55 = arith.constant 0 : index
    %61 = vector.load %arg5[%c6_53, %c0_54, %c0_55] : memref<16x32x64xbf16, #tpu.memory_space<vmem>>, vector<1x32x64xbf16>
    %62 = vector.shape_cast %61 : vector<1x32x64xbf16> to vector<32x64xbf16>
    %cst_56 = arith.constant dense<0.000000e+00> : vector<9x64xf32>
    %63 = tpu.matmul %60, %62, %cst_56 {dimension_numbers = #tpu.dot_dimension_numbers<[1], [0], [0], [1], [0, 0, 1, 1], [], []>} : vector<9x32xbf16>, vector<32x64xbf16>, vector<9x64xf32> -> vector<9x64xf32>
    %64 = arith.addf %56, %63 : vector<9x64xf32>
    %c7 = arith.constant 7 : index
    %c0_57 = arith.constant 0 : index
    %c0_58 = arith.constant 0 : index
    %65 = vector.load %arg4[%c7, %c0_57, %c0_58] : memref<16x9x64xbf16, #tpu.memory_space<vmem>>, vector<1x9x64xbf16>
    %66 = vector.shape_cast %65 : vector<1x9x64xbf16> to vector<9x64xbf16>
    %cst_59 = arith.constant dense<0.000000e+00> : vector<9x32xf32>
    %67 = tpu.matmul %66, %9, %cst_59 {dimension_numbers = #tpu.dot_dimension_numbers<[1], [0], [0], [1], [0, 0, 1, 1], [], []>} : vector<9x64xbf16>, vector<64x32xbf16>, vector<9x32xf32> -> vector<9x32xf32>
    %68 = arith.truncf %67 : vector<9x32xf32> to vector<9x32xbf16>
    %c7_60 = arith.constant 7 : index
    %c0_61 = arith.constant 0 : index
    %c0_62 = arith.constant 0 : index
    %69 = vector.load %arg5[%c7_60, %c0_61, %c0_62] : memref<16x32x64xbf16, #tpu.memory_space<vmem>>, vector<1x32x64xbf16>
    %70 = vector.shape_cast %69 : vector<1x32x64xbf16> to vector<32x64xbf16>
    %cst_63 = arith.constant dense<0.000000e+00> : vector<9x64xf32>
    %71 = tpu.matmul %68, %70, %cst_63 {dimension_numbers = #tpu.dot_dimension_numbers<[1], [0], [0], [1], [0, 0, 1, 1], [], []>} : vector<9x32xbf16>, vector<32x64xbf16>, vector<9x64xf32> -> vector<9x64xf32>
    %72 = arith.addf %64, %71 : vector<9x64xf32>
    %c8 = arith.constant 8 : index
    %c0_64 = arith.constant 0 : index
    %c0_65 = arith.constant 0 : index
    %73 = vector.load %arg4[%c8, %c0_64, %c0_65] : memref<16x9x64xbf16, #tpu.memory_space<vmem>>, vector<1x9x64xbf16>
    %74 = vector.shape_cast %73 : vector<1x9x64xbf16> to vector<9x64xbf16>
    %cst_66 = arith.constant dense<0.000000e+00> : vector<9x32xf32>
    %75 = tpu.matmul %74, %9, %cst_66 {dimension_numbers = #tpu.dot_dimension_numbers<[1], [0], [0], [1], [0, 0, 1, 1], [], []>} : vector<9x64xbf16>, vector<64x32xbf16>, vector<9x32xf32> -> vector<9x32xf32>
    %76 = arith.truncf %75 : vector<9x32xf32> to vector<9x32xbf16>
    %c8_67 = arith.constant 8 : index
    %c0_68 = arith.constant 0 : index
    %c0_69 = arith.constant 0 : index
    %77 = vector.load %arg5[%c8_67, %c0_68, %c0_69] : memref<16x32x64xbf16, #tpu.memory_space<vmem>>, vector<1x32x64xbf16>
    %78 = vector.shape_cast %77 : vector<1x32x64xbf16> to vector<32x64xbf16>
    %cst_70 = arith.constant dense<0.000000e+00> : vector<9x64xf32>
    %79 = tpu.matmul %76, %78, %cst_70 {dimension_numbers = #tpu.dot_dimension_numbers<[1], [0], [0], [1], [0, 0, 1, 1], [], []>} : vector<9x32xbf16>, vector<32x64xbf16>, vector<9x64xf32> -> vector<9x64xf32>
    %80 = arith.addf %72, %79 : vector<9x64xf32>
    %c9 = arith.constant 9 : index
    %c0_71 = arith.constant 0 : index
    %c0_72 = arith.constant 0 : index
    %81 = vector.load %arg4[%c9, %c0_71, %c0_72] : memref<16x9x64xbf16, #tpu.memory_space<vmem>>, vector<1x9x64xbf16>
    %82 = vector.shape_cast %81 : vector<1x9x64xbf16> to vector<9x64xbf16>
    %cst_73 = arith.constant dense<0.000000e+00> : vector<9x32xf32>
    %83 = tpu.matmul %82, %9, %cst_73 {dimension_numbers = #tpu.dot_dimension_numbers<[1], [0], [0], [1], [0, 0, 1, 1], [], []>} : vector<9x64xbf16>, vector<64x32xbf16>, vector<9x32xf32> -> vector<9x32xf32>
    %84 = arith.truncf %83 : vector<9x32xf32> to vector<9x32xbf16>
    %c9_74 = arith.constant 9 : index
    %c0_75 = arith.constant 0 : index
    %c0_76 = arith.constant 0 : index
    %85 = vector.load %arg5[%c9_74, %c0_75, %c0_76] : memref<16x32x64xbf16, #tpu.memory_space<vmem>>, vector<1x32x64xbf16>
    %86 = vector.shape_cast %85 : vector<1x32x64xbf16> to vector<32x64xbf16>
    %cst_77 = arith.constant dense<0.000000e+00> : vector<9x64xf32>
    %87 = tpu.matmul %84, %86, %cst_77 {dimension_numbers = #tpu.dot_dimension_numbers<[1], [0], [0], [1], [0, 0, 1, 1], [], []>} : vector<9x32xbf16>, vector<32x64xbf16>, vector<9x64xf32> -> vector<9x64xf32>
    %88 = arith.addf %80, %87 : vector<9x64xf32>
    %c10 = arith.constant 10 : index
    %c0_78 = arith.constant 0 : index
    %c0_79 = arith.constant 0 : index
    %89 = vector.load %arg4[%c10, %c0_78, %c0_79] : memref<16x9x64xbf16, #tpu.memory_space<vmem>>, vector<1x9x64xbf16>
    %90 = vector.shape_cast %89 : vector<1x9x64xbf16> to vector<9x64xbf16>
    %cst_80 = arith.constant dense<0.000000e+00> : vector<9x32xf32>
    %91 = tpu.matmul %90, %9, %cst_80 {dimension_numbers = #tpu.dot_dimension_numbers<[1], [0], [0], [1], [0, 0, 1, 1], [], []>} : vector<9x64xbf16>, vector<64x32xbf16>, vector<9x32xf32> -> vector<9x32xf32>
    %92 = arith.truncf %91 : vector<9x32xf32> to vector<9x32xbf16>
    %c10_81 = arith.constant 10 : index
    %c0_82 = arith.constant 0 : index
    %c0_83 = arith.constant 0 : index
    %93 = vector.load %arg5[%c10_81, %c0_82, %c0_83] : memref<16x32x64xbf16, #tpu.memory_space<vmem>>, vector<1x32x64xbf16>
    %94 = vector.shape_cast %93 : vector<1x32x64xbf16> to vector<32x64xbf16>
    %cst_84 = arith.constant dense<0.000000e+00> : vector<9x64xf32>
    %95 = tpu.matmul %92, %94, %cst_84 {dimension_numbers = #tpu.dot_dimension_numbers<[1], [0], [0], [1], [0, 0, 1, 1], [], []>} : vector<9x32xbf16>, vector<32x64xbf16>, vector<9x64xf32> -> vector<9x64xf32>
    %96 = arith.addf %88, %95 : vector<9x64xf32>
    %c11 = arith.constant 11 : index
    %c0_85 = arith.constant 0 : index
    %c0_86 = arith.constant 0 : index
    %97 = vector.load %arg4[%c11, %c0_85, %c0_86] : memref<16x9x64xbf16, #tpu.memory_space<vmem>>, vector<1x9x64xbf16>
    %98 = vector.shape_cast %97 : vector<1x9x64xbf16> to vector<9x64xbf16>
    %cst_87 = arith.constant dense<0.000000e+00> : vector<9x32xf32>
    %99 = tpu.matmul %98, %9, %cst_87 {dimension_numbers = #tpu.dot_dimension_numbers<[1], [0], [0], [1], [0, 0, 1, 1], [], []>} : vector<9x64xbf16>, vector<64x32xbf16>, vector<9x32xf32> -> vector<9x32xf32>
    %100 = arith.truncf %99 : vector<9x32xf32> to vector<9x32xbf16>
    %c11_88 = arith.constant 11 : index
    %c0_89 = arith.constant 0 : index
    %c0_90 = arith.constant 0 : index
    %101 = vector.load %arg5[%c11_88, %c0_89, %c0_90] : memref<16x32x64xbf16, #tpu.memory_space<vmem>>, vector<1x32x64xbf16>
    %102 = vector.shape_cast %101 : vector<1x32x64xbf16> to vector<32x64xbf16>
    %cst_91 = arith.constant dense<0.000000e+00> : vector<9x64xf32>
    %103 = tpu.matmul %100, %102, %cst_91 {dimension_numbers = #tpu.dot_dimension_numbers<[1], [0], [0], [1], [0, 0, 1, 1], [], []>} : vector<9x32xbf16>, vector<32x64xbf16>, vector<9x64xf32> -> vector<9x64xf32>
    %104 = arith.addf %96, %103 : vector<9x64xf32>
    %c12 = arith.constant 12 : index
    %c0_92 = arith.constant 0 : index
    %c0_93 = arith.constant 0 : index
    %105 = vector.load %arg4[%c12, %c0_92, %c0_93] : memref<16x9x64xbf16, #tpu.memory_space<vmem>>, vector<1x9x64xbf16>
    %106 = vector.shape_cast %105 : vector<1x9x64xbf16> to vector<9x64xbf16>
    %cst_94 = arith.constant dense<0.000000e+00> : vector<9x32xf32>
    %107 = tpu.matmul %106, %9, %cst_94 {dimension_numbers = #tpu.dot_dimension_numbers<[1], [0], [0], [1], [0, 0, 1, 1], [], []>} : vector<9x64xbf16>, vector<64x32xbf16>, vector<9x32xf32> -> vector<9x32xf32>
    %108 = arith.truncf %107 : vector<9x32xf32> to vector<9x32xbf16>
    %c12_95 = arith.constant 12 : index
    %c0_96 = arith.constant 0 : index
    %c0_97 = arith.constant 0 : index
    %109 = vector.load %arg5[%c12_95, %c0_96, %c0_97] : memref<16x32x64xbf16, #tpu.memory_space<vmem>>, vector<1x32x64xbf16>
    %110 = vector.shape_cast %109 : vector<1x32x64xbf16> to vector<32x64xbf16>
    %cst_98 = arith.constant dense<0.000000e+00> : vector<9x64xf32>
    %111 = tpu.matmul %108, %110, %cst_98 {dimension_numbers = #tpu.dot_dimension_numbers<[1], [0], [0], [1], [0, 0, 1, 1], [], []>} : vector<9x32xbf16>, vector<32x64xbf16>, vector<9x64xf32> -> vector<9x64xf32>
    %112 = arith.addf %104, %111 : vector<9x64xf32>
    %c13 = arith.constant 13 : index
    %c0_99 = arith.constant 0 : index
    %c0_100 = arith.constant 0 : index
    %113 = vector.load %arg4[%c13, %c0_99, %c0_100] : memref<16x9x64xbf16, #tpu.memory_space<vmem>>, vector<1x9x64xbf16>
    %114 = vector.shape_cast %113 : vector<1x9x64xbf16> to vector<9x64xbf16>
    %cst_101 = arith.constant dense<0.000000e+00> : vector<9x32xf32>
    %115 = tpu.matmul %114, %9, %cst_101 {dimension_numbers = #tpu.dot_dimension_numbers<[1], [0], [0], [1], [0, 0, 1, 1], [], []>} : vector<9x64xbf16>, vector<64x32xbf16>, vector<9x32xf32> -> vector<9x32xf32>
    %116 = arith.truncf %115 : vector<9x32xf32> to vector<9x32xbf16>
    %c13_102 = arith.constant 13 : index
    %c0_103 = arith.constant 0 : index
    %c0_104 = arith.constant 0 : index
    %117 = vector.load %arg5[%c13_102, %c0_103, %c0_104] : memref<16x32x64xbf16, #tpu.memory_space<vmem>>, vector<1x32x64xbf16>
    %118 = vector.shape_cast %117 : vector<1x32x64xbf16> to vector<32x64xbf16>
    %cst_105 = arith.constant dense<0.000000e+00> : vector<9x64xf32>
    %119 = tpu.matmul %116, %118, %cst_105 {dimension_numbers = #tpu.dot_dimension_numbers<[1], [0], [0], [1], [0, 0, 1, 1], [], []>} : vector<9x32xbf16>, vector<32x64xbf16>, vector<9x64xf32> -> vector<9x64xf32>
    %120 = arith.addf %112, %119 : vector<9x64xf32>
    %c14 = arith.constant 14 : index
    %c0_106 = arith.constant 0 : index
    %c0_107 = arith.constant 0 : index
    %121 = vector.load %arg4[%c14, %c0_106, %c0_107] : memref<16x9x64xbf16, #tpu.memory_space<vmem>>, vector<1x9x64xbf16>
    %122 = vector.shape_cast %121 : vector<1x9x64xbf16> to vector<9x64xbf16>
    %cst_108 = arith.constant dense<0.000000e+00> : vector<9x32xf32>
    %123 = tpu.matmul %122, %9, %cst_108 {dimension_numbers = #tpu.dot_dimension_numbers<[1], [0], [0], [1], [0, 0, 1, 1], [], []>} : vector<9x64xbf16>, vector<64x32xbf16>, vector<9x32xf32> -> vector<9x32xf32>
    %124 = arith.truncf %123 : vector<9x32xf32> to vector<9x32xbf16>
    %c14_109 = arith.constant 14 : index
    %c0_110 = arith.constant 0 : index
    %c0_111 = arith.constant 0 : index
    %125 = vector.load %arg5[%c14_109, %c0_110, %c0_111] : memref<16x32x64xbf16, #tpu.memory_space<vmem>>, vector<1x32x64xbf16>
    %126 = vector.shape_cast %125 : vector<1x32x64xbf16> to vector<32x64xbf16>
    %cst_112 = arith.constant dense<0.000000e+00> : vector<9x64xf32>
    %127 = tpu.matmul %124, %126, %cst_112 {dimension_numbers = #tpu.dot_dimension_numbers<[1], [0], [0], [1], [0, 0, 1, 1], [], []>} : vector<9x32xbf16>, vector<32x64xbf16>, vector<9x64xf32> -> vector<9x64xf32>
    %128 = arith.addf %120, %127 : vector<9x64xf32>
    %c15 = arith.constant 15 : index
    %c0_113 = arith.constant 0 : index
    %c0_114 = arith.constant 0 : index
    %129 = vector.load %arg4[%c15, %c0_113, %c0_114] : memref<16x9x64xbf16, #tpu.memory_space<vmem>>, vector<1x9x64xbf16>
    %130 = vector.shape_cast %129 : vector<1x9x64xbf16> to vector<9x64xbf16>
    %cst_115 = arith.constant dense<0.000000e+00> : vector<9x32xf32>
    %131 = tpu.matmul %130, %9, %cst_115 {dimension_numbers = #tpu.dot_dimension_numbers<[1], [0], [0], [1], [0, 0, 1, 1], [], []>} : vector<9x64xbf16>, vector<64x32xbf16>, vector<9x32xf32> -> vector<9x32xf32>
    %132 = arith.truncf %131 : vector<9x32xf32> to vector<9x32xbf16>
    %c15_116 = arith.constant 15 : index
    %c0_117 = arith.constant 0 : index
    %c0_118 = arith.constant 0 : index
    %133 = vector.load %arg5[%c15_116, %c0_117, %c0_118] : memref<16x32x64xbf16, #tpu.memory_space<vmem>>, vector<1x32x64xbf16>
    %134 = vector.shape_cast %133 : vector<1x32x64xbf16> to vector<32x64xbf16>
    %cst_119 = arith.constant dense<0.000000e+00> : vector<9x64xf32>
    %135 = tpu.matmul %132, %134, %cst_119 {dimension_numbers = #tpu.dot_dimension_numbers<[1], [0], [0], [1], [0, 0, 1, 1], [], []>} : vector<9x32xbf16>, vector<32x64xbf16>, vector<9x64xf32> -> vector<9x64xf32>
    %136 = arith.addf %128, %135 : vector<9x64xf32>
    %c0_120 = arith.constant 0 : index
    %c0_121 = arith.constant 0 : index
    %137 = vector.load %arg6[%c0_120, %c0_121] : memref<1x64xf32, #tpu.memory_space<vmem>>, vector<1x64xf32>
    %138 = vector.broadcast %137 : vector<1x64xf32> to vector<9x64xf32>
    %139 = arith.addf %136, %138 : vector<9x64xf32>
    %cst_122 = arith.constant 0.000000e+00 : f32
    %140 = vector.broadcast %cst_122 : f32 to vector<9x64xf32>
    %141 = arith.maximumf %139, %140 : vector<9x64xf32>
    %142 = vector.extract_strided_slice %141 {offsets = [0, 0], sizes = [1, 64], strides = [1, 1]} : vector<9x64xf32> to vector<1x64xf32>
    %143 = arith.truncf %142 : vector<1x64xf32> to vector<1x64xbf16>
    %c0_123 = arith.constant 0 : index
    %c0_124 = arith.constant 0 : index
    %c0_125 = arith.constant 0 : index
    %144 = vector.load %arg7[%c0_123, %c0_124, %c0_125] : memref<9x64x64xbf16, #tpu.memory_space<vmem>>, vector<1x64x64xbf16>
    %145 = vector.shape_cast %144 : vector<1x64x64xbf16> to vector<64x64xbf16>
    %cst_126 = arith.constant dense<0.000000e+00> : vector<1x64xf32>
    %146 = tpu.matmul %143, %145, %cst_126 {dimension_numbers = #tpu.dot_dimension_numbers<[1], [0], [0], [1], [0, 0, 1, 1], [], []>} : vector<1x64xbf16>, vector<64x64xbf16>, vector<1x64xf32> -> vector<1x64xf32>
    %147 = vector.extract_strided_slice %141 {offsets = [1, 0], sizes = [1, 64], strides = [1, 1]} : vector<9x64xf32> to vector<1x64xf32>
    %148 = arith.truncf %147 : vector<1x64xf32> to vector<1x64xbf16>
    %c1_127 = arith.constant 1 : index
    %c0_128 = arith.constant 0 : index
    %c0_129 = arith.constant 0 : index
    %149 = vector.load %arg7[%c1_127, %c0_128, %c0_129] : memref<9x64x64xbf16, #tpu.memory_space<vmem>>, vector<1x64x64xbf16>
    %150 = vector.shape_cast %149 : vector<1x64x64xbf16> to vector<64x64xbf16>
    %cst_130 = arith.constant dense<0.000000e+00> : vector<1x64xf32>
    %151 = tpu.matmul %148, %150, %cst_130 {dimension_numbers = #tpu.dot_dimension_numbers<[1], [0], [0], [1], [0, 0, 1, 1], [], []>} : vector<1x64xbf16>, vector<64x64xbf16>, vector<1x64xf32> -> vector<1x64xf32>
    %152 = arith.addf %146, %151 : vector<1x64xf32>
    %153 = vector.extract_strided_slice %141 {offsets = [2, 0], sizes = [1, 64], strides = [1, 1]} : vector<9x64xf32> to vector<1x64xf32>
    %154 = arith.truncf %153 : vector<1x64xf32> to vector<1x64xbf16>
    %c2_131 = arith.constant 2 : index
    %c0_132 = arith.constant 0 : index
    %c0_133 = arith.constant 0 : index
    %155 = vector.load %arg7[%c2_131, %c0_132, %c0_133] : memref<9x64x64xbf16, #tpu.memory_space<vmem>>, vector<1x64x64xbf16>
    %156 = vector.shape_cast %155 : vector<1x64x64xbf16> to vector<64x64xbf16>
    %cst_134 = arith.constant dense<0.000000e+00> : vector<1x64xf32>
    %157 = tpu.matmul %154, %156, %cst_134 {dimension_numbers = #tpu.dot_dimension_numbers<[1], [0], [0], [1], [0, 0, 1, 1], [], []>} : vector<1x64xbf16>, vector<64x64xbf16>, vector<1x64xf32> -> vector<1x64xf32>
    %158 = arith.addf %152, %157 : vector<1x64xf32>
    %159 = vector.extract_strided_slice %141 {offsets = [3, 0], sizes = [1, 64], strides = [1, 1]} : vector<9x64xf32> to vector<1x64xf32>
    %160 = arith.truncf %159 : vector<1x64xf32> to vector<1x64xbf16>
    %c3_135 = arith.constant 3 : index
    %c0_136 = arith.constant 0 : index
    %c0_137 = arith.constant 0 : index
    %161 = vector.load %arg7[%c3_135, %c0_136, %c0_137] : memref<9x64x64xbf16, #tpu.memory_space<vmem>>, vector<1x64x64xbf16>
    %162 = vector.shape_cast %161 : vector<1x64x64xbf16> to vector<64x64xbf16>
    %cst_138 = arith.constant dense<0.000000e+00> : vector<1x64xf32>
    %163 = tpu.matmul %160, %162, %cst_138 {dimension_numbers = #tpu.dot_dimension_numbers<[1], [0], [0], [1], [0, 0, 1, 1], [], []>} : vector<1x64xbf16>, vector<64x64xbf16>, vector<1x64xf32> -> vector<1x64xf32>
    %164 = arith.addf %158, %163 : vector<1x64xf32>
    %165 = vector.extract_strided_slice %141 {offsets = [4, 0], sizes = [1, 64], strides = [1, 1]} : vector<9x64xf32> to vector<1x64xf32>
    %166 = arith.truncf %165 : vector<1x64xf32> to vector<1x64xbf16>
    %c4_139 = arith.constant 4 : index
    %c0_140 = arith.constant 0 : index
    %c0_141 = arith.constant 0 : index
    %167 = vector.load %arg7[%c4_139, %c0_140, %c0_141] : memref<9x64x64xbf16, #tpu.memory_space<vmem>>, vector<1x64x64xbf16>
    %168 = vector.shape_cast %167 : vector<1x64x64xbf16> to vector<64x64xbf16>
    %cst_142 = arith.constant dense<0.000000e+00> : vector<1x64xf32>
    %169 = tpu.matmul %166, %168, %cst_142 {dimension_numbers = #tpu.dot_dimension_numbers<[1], [0], [0], [1], [0, 0, 1, 1], [], []>} : vector<1x64xbf16>, vector<64x64xbf16>, vector<1x64xf32> -> vector<1x64xf32>
    %170 = arith.addf %164, %169 : vector<1x64xf32>
    %171 = vector.extract_strided_slice %141 {offsets = [5, 0], sizes = [1, 64], strides = [1, 1]} : vector<9x64xf32> to vector<1x64xf32>
    %172 = arith.truncf %171 : vector<1x64xf32> to vector<1x64xbf16>
    %c5_143 = arith.constant 5 : index
    %c0_144 = arith.constant 0 : index
    %c0_145 = arith.constant 0 : index
    %173 = vector.load %arg7[%c5_143, %c0_144, %c0_145] : memref<9x64x64xbf16, #tpu.memory_space<vmem>>, vector<1x64x64xbf16>
    %174 = vector.shape_cast %173 : vector<1x64x64xbf16> to vector<64x64xbf16>
    %cst_146 = arith.constant dense<0.000000e+00> : vector<1x64xf32>
    %175 = tpu.matmul %172, %174, %cst_146 {dimension_numbers = #tpu.dot_dimension_numbers<[1], [0], [0], [1], [0, 0, 1, 1], [], []>} : vector<1x64xbf16>, vector<64x64xbf16>, vector<1x64xf32> -> vector<1x64xf32>
    %176 = arith.addf %170, %175 : vector<1x64xf32>
    %177 = vector.extract_strided_slice %141 {offsets = [6, 0], sizes = [1, 64], strides = [1, 1]} : vector<9x64xf32> to vector<1x64xf32>
    %178 = arith.truncf %177 : vector<1x64xf32> to vector<1x64xbf16>
    %c6_147 = arith.constant 6 : index
    %c0_148 = arith.constant 0 : index
    %c0_149 = arith.constant 0 : index
    %179 = vector.load %arg7[%c6_147, %c0_148, %c0_149] : memref<9x64x64xbf16, #tpu.memory_space<vmem>>, vector<1x64x64xbf16>
    %180 = vector.shape_cast %179 : vector<1x64x64xbf16> to vector<64x64xbf16>
    %cst_150 = arith.constant dense<0.000000e+00> : vector<1x64xf32>
    %181 = tpu.matmul %178, %180, %cst_150 {dimension_numbers = #tpu.dot_dimension_numbers<[1], [0], [0], [1], [0, 0, 1, 1], [], []>} : vector<1x64xbf16>, vector<64x64xbf16>, vector<1x64xf32> -> vector<1x64xf32>
    %182 = arith.addf %176, %181 : vector<1x64xf32>
    %183 = vector.extract_strided_slice %141 {offsets = [7, 0], sizes = [1, 64], strides = [1, 1]} : vector<9x64xf32> to vector<1x64xf32>
    %184 = arith.truncf %183 : vector<1x64xf32> to vector<1x64xbf16>
    %c7_151 = arith.constant 7 : index
    %c0_152 = arith.constant 0 : index
    %c0_153 = arith.constant 0 : index
    %185 = vector.load %arg7[%c7_151, %c0_152, %c0_153] : memref<9x64x64xbf16, #tpu.memory_space<vmem>>, vector<1x64x64xbf16>
    %186 = vector.shape_cast %185 : vector<1x64x64xbf16> to vector<64x64xbf16>
    %cst_154 = arith.constant dense<0.000000e+00> : vector<1x64xf32>
    %187 = tpu.matmul %184, %186, %cst_154 {dimension_numbers = #tpu.dot_dimension_numbers<[1], [0], [0], [1], [0, 0, 1, 1], [], []>} : vector<1x64xbf16>, vector<64x64xbf16>, vector<1x64xf32> -> vector<1x64xf32>
    %188 = arith.addf %182, %187 : vector<1x64xf32>
    %189 = vector.extract_strided_slice %141 {offsets = [8, 0], sizes = [1, 64], strides = [1, 1]} : vector<9x64xf32> to vector<1x64xf32>
    %190 = arith.truncf %189 : vector<1x64xf32> to vector<1x64xbf16>
    %c8_155 = arith.constant 8 : index
    %c0_156 = arith.constant 0 : index
    %c0_157 = arith.constant 0 : index
    %191 = vector.load %arg7[%c8_155, %c0_156, %c0_157] : memref<9x64x64xbf16, #tpu.memory_space<vmem>>, vector<1x64x64xbf16>
    %192 = vector.shape_cast %191 : vector<1x64x64xbf16> to vector<64x64xbf16>
    %cst_158 = arith.constant dense<0.000000e+00> : vector<1x64xf32>
    %193 = tpu.matmul %190, %192, %cst_158 {dimension_numbers = #tpu.dot_dimension_numbers<[1], [0], [0], [1], [0, 0, 1, 1], [], []>} : vector<1x64xbf16>, vector<64x64xbf16>, vector<1x64xf32> -> vector<1x64xf32>
    %194 = arith.addf %188, %193 : vector<1x64xf32>
    %c0_159 = arith.constant 0 : index
    %c0_160 = arith.constant 0 : index
    %195 = vector.load %arg8[%c0_159, %c0_160] : memref<1x64xf32, #tpu.memory_space<vmem>>, vector<1x64xf32>
    %196 = arith.addf %194, %195 : vector<1x64xf32>
    %cst_161 = arith.constant 0.000000e+00 : f32
    %197 = vector.broadcast %cst_161 : f32 to vector<1x64xf32>
    %198 = arith.maximumf %196, %197 : vector<1x64xf32>
    %199 = arith.truncf %198 : vector<1x64xf32> to vector<1x64xbf16>
    %c0_162 = arith.constant 0 : index
    %c0_163 = arith.constant 0 : index
    %200 = vector.load %arg9[%c0_162, %c0_163] : memref<64x512xbf16, #tpu.memory_space<vmem>>, vector<64x512xbf16>
    %cst_164 = arith.constant dense<0.000000e+00> : vector<1x512xf32>
    %201 = tpu.matmul %199, %200, %cst_164 {dimension_numbers = #tpu.dot_dimension_numbers<[1], [0], [0], [1], [0, 0, 1, 1], [], []>} : vector<1x64xbf16>, vector<64x512xbf16>, vector<1x512xf32> -> vector<1x512xf32>
    %c0_165 = arith.constant 0 : index
    %c0_166 = arith.constant 0 : index
    %202 = vector.load %arg10[%c0_165, %c0_166] : memref<1x512xf32, #tpu.memory_space<vmem>>, vector<1x512xf32>
    %203 = arith.addf %201, %202 : vector<1x512xf32>
    %cst_167 = arith.constant 0.000000e+00 : f32
    %204 = vector.broadcast %cst_167 : f32 to vector<1x512xf32>
    %205 = arith.maximumf %203, %204 : vector<1x512xf32>
    %c0_168 = arith.constant 0 : index
    %c0_169 = arith.constant 0 : index
    %206 = vector.load %arg11[%c0_168, %c0_169] : memref<1x512xf32, #tpu.memory_space<vmem>>, vector<1x512xf32>
    %207 = arith.mulf %205, %206 : vector<1x512xf32>
    %cst_170 = arith.constant dense<0.000000e+00> : vector<1xf32>
    %208 = vector.multi_reduction <add>, %207, %cst_170 [1] : vector<1x512xf32> to vector<1xf32>
    %209 = vector.shape_cast %208 : vector<1xf32> to vector<1x1xf32>
    %210 = vector.shape_cast %209 : vector<1x1xf32> to vector<1x1xf32>
    %211 = vector.broadcast %210 : vector<1x1xf32> to vector<8x128xf32>
    %c0_171 = arith.constant 0 : index
    %c0_172 = arith.constant 0 : index
    %212 = vector.load %arg12[%c0_171, %c0_172] : memref<1x128xf32, #tpu.memory_space<vmem>>, vector<1x128xf32>
    %213 = vector.broadcast %212 : vector<1x128xf32> to vector<8x128xf32>
    %214 = arith.addf %211, %213 : vector<8x128xf32>
    %c0_173 = arith.constant 0 : index
    %c0_174 = arith.constant 0 : index
    %c0_175 = arith.constant 0 : index
    %215 = vector.load %arg13[%c0_173, %c0_174, %c0_175] : memref<1x8x128xf32, #tpu.memory_space<vmem>>, vector<1x8x128xf32>
    %216 = vector.shape_cast %215 : vector<1x8x128xf32> to vector<8x128xf32>
    %217 = vector.shape_cast %214 : vector<8x128xf32> to vector<1x8x128xf32>
    tpu.vector_store %arg13[%c0_173, %c0_174, %c0_175], %217 {strides = array<i32>} : memref<1x8x128xf32, #tpu.memory_space<vmem>>, vector<1x8x128xf32>,
    return
  }
  func.func @transform_0(%arg0: i32) -> (i32, i32, i32) {
    %c0_i32 = arith.constant 0 : i32
    %c0_i32_0 = arith.constant 0 : i32
    %c0_i32_1 = arith.constant 0 : i32
    return %arg0, %c0_i32, %c0_i32_0 : i32, i32, i32
  }
  func.func @transform_1(%arg0: i32) -> (i32, i32) {
    %c0_i32 = arith.constant 0 : i32
    %c0_i32_0 = arith.constant 0 : i32
    %c0_i32_1 = arith.constant 0 : i32
    return %c0_i32, %c0_i32_0 : i32, i32
  }
  func.func @transform_2(%arg0: i32) -> (i32, i32) {
    %c0_i32 = arith.constant 0 : i32
    %c0_i32_0 = arith.constant 0 : i32
    %c0_i32_1 = arith.constant 0 : i32
    return %c0_i32, %c0_i32_0 : i32, i32
  }
  func.func @transform_3(%arg0: i32) -> (i32, i32, i32) {
    %c0_i32 = arith.constant 0 : i32
    %c0_i32_0 = arith.constant 0 : i32
    %c0_i32_1 = arith.constant 0 : i32
    %c0_i32_2 = arith.constant 0 : i32
    return %c0_i32, %c0_i32_0, %c0_i32_1 : i32, i32, i32
  }
  func.func @transform_4(%arg0: i32) -> (i32, i32, i32) {
    %c0_i32 = arith.constant 0 : i32
    %c0_i32_0 = arith.constant 0 : i32
    %c0_i32_1 = arith.constant 0 : i32
    %c0_i32_2 = arith.constant 0 : i32
    return %c0_i32, %c0_i32_0, %c0_i32_1 : i32, i32, i32
  }
  func.func @transform_5(%arg0: i32) -> (i32, i32) {
    %c0_i32 = arith.constant 0 : i32
    %c0_i32_0 = arith.constant 0 : i32
    %c0_i32_1 = arith.constant 0 : i32
    return %c0_i32, %c0_i32_0 : i32, i32
  }
  func.func @transform_6(%arg0: i32) -> (i32, i32, i32) {
    %c0_i32 = arith.constant 0 : i32
    %c0_i32_0 = arith.constant 0 : i32
    %c0_i32_1 = arith.constant 0 : i32
    %c0_i32_2 = arith.constant 0 : i32
    return %c0_i32, %c0_i32_0, %c0_i32_1 : i32, i32, i32
  }
  func.func @transform_7(%arg0: i32) -> (i32, i32) {
    %c0_i32 = arith.constant 0 : i32
    %c0_i32_0 = arith.constant 0 : i32
    %c0_i32_1 = arith.constant 0 : i32
    return %c0_i32, %c0_i32_0 : i32, i32
  }
  func.func @transform_8(%arg0: i32) -> (i32, i32) {
    %c0_i32 = arith.constant 0 : i32
    %c0_i32_0 = arith.constant 0 : i32
    %c0_i32_1 = arith.constant 0 : i32
    return %c0_i32, %c0_i32_0 : i32, i32
  }
  func.func @transform_9(%arg0: i32) -> (i32, i32) {
    %c0_i32 = arith.constant 0 : i32
    %c0_i32_0 = arith.constant 0 : i32
    %c0_i32_1 = arith.constant 0 : i32
    return %c0_i32, %c0_i32_0 : i32, i32
  }
  func.func @transform_10(%arg0: i32) -> (i32, i32) {
    %c0_i32 = arith.constant 0 : i32
    %c0_i32_0 = arith.constant 0 : i32
    %c0_i32_1 = arith.constant 0 : i32
    return %c0_i32, %c0_i32_0 : i32, i32
  }
  func.func @transform_11(%arg0: i32) -> (i32, i32) {
    %c0_i32 = arith.constant 0 : i32
    %c0_i32_0 = arith.constant 0 : i32
    %c0_i32_1 = arith.constant 0 : i32
    return %c0_i32, %c0_i32_0 : i32, i32
  }
  func.func @transform_12(%arg0: i32) -> (i32, i32, i32) {
    %c0_i32 = arith.constant 0 : i32
    %c0_i32_0 = arith.constant 0 : i32
    %c0_i32_1 = arith.constant 0 : i32
    return %arg0, %c0_i32, %c0_i32_0 : i32, i32, i32
  }
}

</mosaic_0001>

<llo_original>
// kernel: critic_forward.1
$region0: #{critic_forward.1}
  #allocation0 [shape = 'u32[]', space=smem, size = 0x4, offset = 0x4, fixed_abs, tag = 'smem constant byte address 0x4 - core index']
  #allocation1 [shape = 'u32[144,128]{1,0:T(1,128)}', space=vmem, size = 0x12000, scoped, tag = 'internal scratch']
  %s0 = inlined_call_operand.vmem [shape: bf16[2,64,256], index: 0, kind: input, shape index: {}]
  %s1 = inlined_call_operand.vmem [shape: bf16[256,32], index: 1, kind: input, shape index: {}]
  %s2 = inlined_call_operand.vmem [shape: f32[1,32], index: 2, kind: input, shape index: {}]
  %s3 = inlined_call_operand.vmem [shape: bf16[16,9,64], index: 3, kind: input, shape index: {}]
  %s4 = inlined_call_operand.vmem [shape: bf16[16,32,64], index: 4, kind: input, shape index: {}]
  %s5 = inlined_call_operand.vmem [shape: f32[1,64], index: 5, kind: input, shape index: {}]
  %s6 = inlined_call_operand.vmem [shape: bf16[9,64,64], index: 6, kind: input, shape index: {}]
  %s7 = inlined_call_operand.vmem [shape: f32[1,64], index: 7, kind: input, shape index: {}]
  %s8 = inlined_call_operand.vmem [shape: bf16[64,512], index: 8, kind: input, shape index: {}]
  %s9 = inlined_call_operand.vmem [shape: f32[1,512], index: 9, kind: input, shape index: {}]
  %s10 = inlined_call_operand.vmem [shape: f32[1,512], index: 10, kind: input, shape index: {}]
  %s11 = inlined_call_operand.vmem [shape: f32[1,128], index: 11, kind: input, shape index: {}]
  %s12 = inlined_call_operand.vmem [shape: f32[2,8,128], index: 12, kind: output, shape index: {}]
  %s13 = sld [smem:[#allocation0]]
  $region81: #{critic_forward.1} parent=0
    _
  %s15 = ssub.s32 1, %s13
  %s16 = scalar_select 0, %s15, %s13
  loop: start=0, step=1, limit=4
  $region2: #{critic_forward.1} parent=0 // loop_pre_header
    _
  $region3: #{critic_forward.1} parent=0 // loop_header
    %s18 = sphi 0, %s22
    %p19 = scmp.ge.s32.totalorder %s18, 4
    %s28 = sphi 0, %s30
    %s31 = sphi 0, %s28
    %s32 = sphi 0, %s31
    %s48 = sphi 0, %s32
    %s52 = sphi 0, %s52
    %s54 = sphi 0, %s52
    %s55 = sphi 0, %s54
    %s69 = sphi 0, %s55
    %s73 = sphi 0, %s73
    %s75 = sphi 0, %s73
    %s76 = sphi 0, %s75
    %s90 = sphi 0, %s76
    %s94 = sphi 0, %s94
    %s96 = sphi 0, %s94
    %s97 = sphi 0, %s96
    %s111 = sphi 0, %s97
    %s115 = sphi 0, %s115
    %s117 = sphi 0, %s115
    %s118 = sphi 0, %s117
    %s132 = sphi 0, %s118
    %s136 = sphi 0, %s136
    %s138 = sphi 0, %s136
    %s139 = sphi 0, %s138
    %s153 = sphi 0, %s139
    %s157 = sphi 0, %s157
    %s159 = sphi 0, %s157
    %s160 = sphi 0, %s159
    %s174 = sphi 0, %s160
    %s178 = sphi 0, %s178
    %s180 = sphi 0, %s178
    %s181 = sphi 0, %s180
    %s195 = sphi 0, %s181
    %s199 = sphi 0, %s199
    %s201 = sphi 0, %s199
    %s202 = sphi 0, %s201
    %s216 = sphi 0, %s202
    %s220 = sphi 0, %s220
    %s222 = sphi 0, %s220
    %s223 = sphi 0, %s222
    %s237 = sphi 0, %s223
    %s241 = sphi 0, %s241
    %s243 = sphi 0, %s241
    %s244 = sphi 0, %s243
    %s258 = sphi 0, %s244
    %s262 = sphi 0, %s262
    %s264 = sphi 0, %s262
    %s265 = sphi 0, %s264
    %s279 = sphi 0, %s265
    %s285 = sphi 0, %s287
    %s288 = sphi 0, %s285
    %s289 = sphi 0, %s288
    %s305 = sphi 0, %s289
  $region4: #{critic_forward.1} parent=0 // loop_header_branch
    %21 = sbr.rel (%p19) target = $region8
  $region5: #{critic_forward.1} parent=0 // loop_body
    %s23 = ssub.s32 %s18, 1
    %s24 = ssub.s32 %s18, 2
    %s25 = sadd.s32 %s18, 1
    %s26 = ssub.s32 %s18, %s25
    %p27 = scmp.eq.s32.totalorder %s26, 0
    %s29 = sadd.s32 %s28, 1
    %s30 = scalar_select %p27, %s28, %s29
    %p33 = pneg %p27
    %p34 = scmp.eq.s32.totalorder %s18, 1
    %p35 = por %p33, %p34
    %p36 = scmp.ne.s32.totalorder %s28, %s31
    %p37 = scmp.eq.s32.totalorder %s18, 0
    %p38 = por %p36, %p37
    %p39 = scmp.ne.s32.totalorder %s28, %s31
    %p40 = scmp.eq.s32.totalorder %s23, 1
    %p41 = por %p39, %p40
    %p42 = scmp.ne.s32.totalorder %s31, %s32
    %p43 = scmp.eq.s32.totalorder %s23, 0
    %p44 = por %p42, %p43
    %p45 = scmp.ne.s32.totalorder %s31, %s32
    %p46 = scmp.eq.s32.totalorder %s24, 1
    %p47 = por %p45, %p46
    %p49 = scmp.ne.s32.totalorder %s32, %s48
    %p50 = scmp.eq.s32.totalorder %s24, 0
    %p51 = por %p49, %p50
    %s53 = sadd.s32 %s52, 1
    %p56 = scmp.eq.s32.totalorder %s18, 1
    %p57 = scmp.ne.s32.totalorder %s52, %s54
    %p58 = scmp.eq.s32.totalorder %s18, 0
    %p59 = por %p57, %p58
    %p60 = scmp.ne.s32.totalorder %s52, %s54
    %p61 = scmp.eq.s32.totalorder %s23, 1
    %p62 = por %p60, %p61
    %p63 = scmp.ne.s32.totalorder %s54, %s55
    %p64 = scmp.eq.s32.totalorder %s23, 0
    %p65 = por %p63, %p64
    %p66 = scmp.ne.s32.totalorder %s54, %s55
    %p67 = scmp.eq.s32.totalorder %s24, 1
    %p68 = por %p66, %p67
    %p70 = scmp.ne.s32.totalorder %s55, %s69
    %p71 = scmp.eq.s32.totalorder %s24, 0
    %p72 = por %p70, %p71
    %s74 = sadd.s32 %s73, 1
    %p77 = scmp.eq.s32.totalorder %s18, 1
    %p78 = scmp.ne.s32.totalorder %s73, %s75
    %p79 = scmp.eq.s32.totalorder %s18, 0
    %p80 = por %p78, %p79
    %p81 = scmp.ne.s32.totalorder %s73, %s75
    %p82 = scmp.eq.s32.totalorder %s23, 1
    %p83 = por %p81, %p82
    %p84 = scmp.ne.s32.totalorder %s75, %s76
    %p85 = scmp.eq.s32.totalorder %s23, 0
    %p86 = por %p84, %p85
    %p87 = scmp.ne.s32.totalorder %s75, %s76
    %p88 = scmp.eq.s32.totalorder %s24, 1
    %p89 = por %p87, %p88
    %p91 = scmp.ne.s32.totalorder %s76, %s90
    %p92 = scmp.eq.s32.totalorder %s24, 0
    %p93 = por %p91, %p92
    %s95 = sadd.s32 %s94, 1
    %p98 = scmp.eq.s32.totalorder %s18, 1
    %p99 = scmp.ne.s32.totalorder %s94, %s96
    %p100 = scmp.eq.s32.totalorder %s18, 0
    %p101 = por %p99, %p100
    %p102 = scmp.ne.s32.totalorder %s94, %s96
    %p103 = scmp.eq.s32.totalorder %s23, 1
    %p104 = por %p102, %p103
    %p105 = scmp.ne.s32.totalorder %s96, %s97
    %p106 = scmp.eq.s32.totalorder %s23, 0
    %p107 = por %p105, %p106
    %p108 = scmp.ne.s32.totalorder %s96, %s97
    %p109 = scmp.eq.s32.totalorder %s24, 1
    %p110 = por %p108, %p109
    %p112 = scmp.ne.s32.totalorder %s97, %s111
    %p113 = scmp.eq.s32.totalorder %s24, 0
    %p114 = por %p112, %p113
    %s116 = sadd.s32 %s115, 1
    %p119 = scmp.eq.s32.totalorder %s18, 1
    %p120 = scmp.ne.s32.totalorder %s115, %s117
    %p121 = scmp.eq.s32.totalorder %s18, 0
    %p122 = por %p120, %p121
    %p123 = scmp.ne.s32.totalorder %s115, %s117
    %p124 = scmp.eq.s32.totalorder %s23, 1
    %p125 = por %p123, %p124
    %p126 = scmp.ne.s32.totalorder %s117, %s118
    %p127 = scmp.eq.s32.totalorder %s23, 0
    %p128 = por %p126, %p127
    %p129 = scmp.ne.s32.totalorder %s117, %s118
    %p130 = scmp.eq.s32.totalorder %s24, 1
    %p131 = por %p129, %p130
    %p133 = scmp.ne.s32.totalorder %s118, %s132
    %p134 = scmp.eq.s32.totalorder %s24, 0
    %p135 = por %p133, %p134
    %s137 = sadd.s32 %s136, 1
    %p140 = scmp.eq.s32.totalorder %s18, 1
    %p141 = scmp.ne.s32.totalorder %s136, %s138
    %p142 = scmp.eq.s32.totalorder %s18, 0
    %p143 = por %p141, %p142
    %p144 = scmp.ne.s32.totalorder %s136, %s138
    %p145 = scmp.eq.s32.totalorder %s23, 1
    %p146 = por %p144, %p145
    %p147 = scmp.ne.s32.totalorder %s138, %s139
    %p148 = scmp.eq.s32.totalorder %s23, 0
    %p149 = por %p147, %p148
    %p150 = scmp.ne.s32.totalorder %s138, %s139
    %p151 = scmp.eq.s32.totalorder %s24, 1
    %p152 = por %p150, %p151
    %p154 = scmp.ne.s32.totalorder %s139, %s153
    %p155 = scmp.eq.s32.totalorder %s24, 0
    %p156 = por %p154, %p155
    %s158 = sadd.s32 %s157, 1
    %p161 = scmp.eq.s32.totalorder %s18, 1
    %p162 = scmp.ne.s32.totalorder %s157, %s159
    %p163 = scmp.eq.s32.totalorder %s18, 0
    %p164 = por %p162, %p163
    %p165 = scmp.ne.s32.totalorder %s157, %s159
    %p166 = scmp.eq.s32.totalorder %s23, 1
    %p167 = por %p165, %p166
    %p168 = scmp.ne.s32.totalorder %s159, %s160
    %p169 = scmp.eq.s32.totalorder %s23, 0
    %p170 = por %p168, %p169
    %p171 = scmp.ne.s32.totalorder %s159, %s160
    %p172 = scmp.eq.s32.totalorder %s24, 1
    %p173 = por %p171, %p172
    %p175 = scmp.ne.s32.totalorder %s160, %s174
    %p176 = scmp.eq.s32.totalorder %s24, 0
    %p177 = por %p175, %p176
    %s179 = sadd.s32 %s178, 1
    %p182 = scmp.eq.s32.totalorder %s18, 1
    %p183 = scmp.ne.s32.totalorder %s178, %s180
    %p184 = scmp.eq.s32.totalorder %s18, 0
    %p185 = por %p183, %p184
    %p186 = scmp.ne.s32.totalorder %s178, %s180
    %p187 = scmp.eq.s32.totalorder %s23, 1
    %p188 = por %p186, %p187
    %p189 = scmp.ne.s32.totalorder %s180, %s181
    %p190 = scmp.eq.s32.totalorder %s23, 0
    %p191 = por %p189, %p190
    %p192 = scmp.ne.s32.totalorder %s180, %s181
    %p193 = scmp.eq.s32.totalorder %s24, 1
    %p194 = por %p192, %p193
    %p196 = scmp.ne.s32.totalorder %s181, %s195
    %p197 = scmp.eq.s32.totalorder %s24, 0
    %p198 = por %p196, %p197
    %s200 = sadd.s32 %s199, 1
    %p203 = scmp.eq.s32.totalorder %s18, 1
    %p204 = scmp.ne.s32.totalorder %s199, %s201
    %p205 = scmp.eq.s32.totalorder %s18, 0
    %p206 = por %p204, %p205
    %p207 = scmp.ne.s32.totalorder %s199, %s201
    %p208 = scmp.eq.s32.totalorder %s23, 1
    %p209 = por %p207, %p208
    %p210 = scmp.ne.s32.totalorder %s201, %s202
    %p211 = scmp.eq.s32.totalorder %s23, 0
    %p212 = por %p210, %p211
    %p213 = scmp.ne.s32.totalorder %s201, %s202
    %p214 = scmp.eq.s32.totalorder %s24, 1
    %p215 = por %p213, %p214
    %p217 = scmp.ne.s32.totalorder %s202, %s216
    %p218 = scmp.eq.s32.totalorder %s24, 0
    %p219 = por %p217, %p218
    %s221 = sadd.s32 %s220, 1
    %p224 = scmp.eq.s32.totalorder %s18, 1
    %p225 = scmp.ne.s32.totalorder %s220, %s222
    %p226 = scmp.eq.s32.totalorder %s18, 0
    %p227 = por %p225, %p226
    %p228 = scmp.ne.s32.totalorder %s220, %s222
    %p229 = scmp.eq.s32.totalorder %s23, 1
    %p230 = por %p228, %p229
    %p231 = scmp.ne.s32.totalorder %s222, %s223
    %p232 = scmp.eq.s32.totalorder %s23, 0
    %p233 = por %p231, %p232
    %p234 = scmp.ne.s32.totalorder %s222, %s223
    %p235 = scmp.eq.s32.totalorder %s24, 1
    %p236 = por %p234, %p235
    %p238 = scmp.ne.s32.totalorder %s223, %s237
    %p239 = scmp.eq.s32.totalorder %s24, 0
    %p240 = por %p238, %p239
    %s242 = sadd.s32 %s241, 1
    %p245 = scmp.eq.s32.totalorder %s18, 1
    %p246 = scmp.ne.s32.totalorder %s241, %s243
    %p247 = scmp.eq.s32.totalorder %s18, 0
    %p248 = por %p246, %p247
    %p249 = scmp.ne.s32.totalorder %s241, %s243
    %p250 = scmp.eq.s32.totalorder %s23, 1
    %p251 = por %p249, %p250
    %p252 = scmp.ne.s32.totalorder %s243, %s244
    %p253 = scmp.eq.s32.totalorder %s23, 0
    %p254 = por %p252, %p253
    %p255 = scmp.ne.s32.totalorder %s243, %s244
    %p256 = scmp.eq.s32.totalorder %s24, 1
    %p257 = por %p255, %p256
    %p259 = scmp.ne.s32.totalorder %s244, %s258
    %p260 = scmp.eq.s32.totalorder %s24, 0
    %p261 = por %p259, %p260
    %s263 = sadd.s32 %s262, 1
    %p266 = scmp.eq.s32.totalorder %s18, 1
    %p267 = scmp.ne.s32.totalorder %s262, %s264
    %p268 = scmp.eq.s32.totalorder %s18, 0
    %p269 = por %p267, %p268
    %p270 = scmp.ne.s32.totalorder %s262, %s264
    %p271 = scmp.eq.s32.totalorder %s23, 1
    %p272 = por %p270, %p271
    %p273 = scmp.ne.s32.totalorder %s264, %s265
    %p274 = scmp.eq.s32.totalorder %s23, 0
    %p275 = por %p273, %p274
    %p276 = scmp.ne.s32.totalorder %s264, %s265
    %p277 = scmp.eq.s32.totalorder %s24, 1
    %p278 = por %p276, %p277
    %p280 = scmp.ne.s32.totalorder %s265, %s279
    %p281 = scmp.eq.s32.totalorder %s24, 0
    %p282 = por %p280, %p281
    %s283 = ssub.s32 %s18, %s25
    %p284 = scmp.eq.s32.totalorder %s283, 0
    %s286 = sadd.s32 %s285, 1
    %s287 = scalar_select %p284, %s285, %s286
    %p290 = pneg %p284
    %p291 = scmp.eq.s32.totalorder %s18, 1
    %p292 = por %p290, %p291
    %p293 = scmp.ne.s32.totalorder %s285, %s288
    %p294 = scmp.eq.s32.totalorder %s18, 0
    %p295 = por %p293, %p294
    %p296 = scmp.ne.s32.totalorder %s285, %s288
    %p297 = scmp.eq.s32.totalorder %s23, 1
    %p298 = por %p296, %p297
    %p299 = scmp.ne.s32.totalorder %s288, %s289
    %p300 = scmp.eq.s32.totalorder %s23, 0
    %p301 = por %p299, %p300
    %p302 = scmp.ne.s32.totalorder %s288, %s289
    %p303 = scmp.eq.s32.totalorder %s24, 1
    %p304 = por %p302, %p303
    %p306 = scmp.ne.s32.totalorder %s289, %s305
    %p307 = scmp.eq.s32.totalorder %s24, 0
    %p308 = por %p306, %p307
    %p309 = scmp.le.s32.totalorder 1, %s18
    %p310 = scmp.lt.s32.totalorder %s18, 3
    %p311 = pnand %p309, %p310
    %p312 = pneg %p311
    // Predicated region
    $region9: #{critic_forward.1} parent=5 // pred_check
      _
    $region10: #{critic_forward.1} parent=5 // pred_check_branch
      %314 = sbr.rel (%p311) target = $region12
    $region11: #{critic_forward.1} parent=5 // pred_region
      %s315 = ssub.s32 %s18, 1
      // Predicated region
      $region13: #{critic_forward.1} parent=11 // pred_check
        %p316 = pneg %p65
      $region14: #{critic_forward.1} parent=11 // pred_check_branch
        %318 = sbr.rel (%p316) target = $region16
      $region15: #{critic_forward.1} parent=11 // pred_region
        _
      $region16: #{critic_forward.1} parent=11 // pred_fallthru
        _
      // Predicated region
      $region17: #{critic_forward.1} parent=11 // pred_check
        %p319 = pneg %p86
      $region18: #{critic_forward.1} parent=11 // pred_check_branch
        %321 = sbr.rel (%p319) target = $region20
      $region19: #{critic_forward.1} parent=11 // pred_region
        _
      $region20: #{critic_forward.1} parent=11 // pred_fallthru
        _
      // Predicated region
      $region21: #{critic_forward.1} parent=11 // pred_check
        %p322 = pneg %p107
      $region22: #{critic_forward.1} parent=11 // pred_check_branch
        %324 = sbr.rel (%p322) target = $region24
      $region23: #{critic_forward.1} parent=11 // pred_region
        _
      $region24: #{critic_forward.1} parent=11 // pred_fallthru
        _
      // Predicated region
      $region25: #{critic_forward.1} parent=11 // pred_check
        %p325 = pneg %p128
      $region26: #{critic_forward.1} parent=11 // pred_check_branch
        %327 = sbr.rel (%p325) target = $region28
      $region27: #{critic_forward.1} parent=11 // pred_region
        _
      $region28: #{critic_forward.1} parent=11 // pred_fallthru
        _
      // Predicated region
      $region29: #{critic_forward.1} parent=11 // pred_check
        %p328 = pneg %p149
      $region30: #{critic_forward.1} parent=11 // pred_check_branch
        %330 = sbr.rel (%p328) target = $region32
      $region31: #{critic_forward.1} parent=11 // pred_region
        _
      $region32: #{critic_forward.1} parent=11 // pred_fallthru
        _
      // Predicated region
      $region33: #{critic_forward.1} parent=11 // pred_check
        %p331 = pneg %p170
      $region34: #{critic_forward.1} parent=11 // pred_check_branch
        %333 = sbr.rel (%p331) target = $region36
      $region35: #{critic_forward.1} parent=11 // pred_region
        _
      $region36: #{critic_forward.1} parent=11 // pred_fallthru
        _
      // Predicated region
      $region37: #{critic_forward.1} parent=11 // pred_check
        %p334 = pneg %p191
      $region38: #{critic_forward.1} parent=11 // pred_check_branch
        %336 = sbr.rel (%p334) target = $region40
      $region39: #{critic_forward.1} parent=11 // pred_region
        _
      $region40: #{critic_forward.1} parent=11 // pred_fallthru
        _
      // Predicated region
      $region41: #{critic_forward.1} parent=11 // pred_check
        %p337 = pneg %p212
      $region42: #{critic_forward.1} parent=11 // pred_check_branch
        %339 = sbr.rel (%p337) target = $region44
      $region43: #{critic_forward.1} parent=11 // pred_region
        _
      $region44: #{critic_forward.1} parent=11 // pred_fallthru
        _
      // Predicated region
      $region45: #{critic_forward.1} parent=11 // pred_check
        %p340 = pneg %p233
      $region46: #{critic_forward.1} parent=11 // pred_check_branch
        %342 = sbr.rel (%p340) target = $region48
      $region47: #{critic_forward.1} parent=11 // pred_region
        _
      $region48: #{critic_forward.1} parent=11 // pred_fallthru
        _
      // Predicated region
      $region49: #{critic_forward.1} parent=11 // pred_check
        %p343 = pneg %p254
      $region50: #{critic_forward.1} parent=11 // pred_check_branch
        %345 = sbr.rel (%p343) target = $region52
      $region51: #{critic_forward.1} parent=11 // pred_region
        _
      $region52: #{critic_forward.1} parent=11 // pred_fallthru
        _
      // Predicated region
      $region53: #{critic_forward.1} parent=11 // pred_check
        %p346 = pneg %p275
      $region54: #{critic_forward.1} parent=11 // pred_check_branch
        %348 = sbr.rel (%p346) target = $region56
      $region55: #{critic_forward.1} parent=11 // pred_region
        _
      $region56: #{critic_forward.1} parent=11 // pred_fallthru
        _
    $region12: #{critic_forward.1} parent=5 // pred_fallthru
      _
    %p349 = scmp.lt.s32.totalorder %s18, 2
    // Predicated region
    $region57: #{critic_forward.1} parent=5 // pred_check
      %p350 = pneg %p349
    $region58: #{critic_forward.1} parent=5 // pred_check_branch
      %352 = sbr.rel (%p350) target = $region60
    $region59: #{critic_forward.1} parent=5 // pred_region
      // Predicated region
      $region61: #{critic_forward.1} parent=59 // pred_check
        %p353 = pneg %p38
      $region62: #{critic_forward.1} parent=59 // pred_check_branch
        %355 = sbr.rel (%p353) target = $region64
      $region63: #{critic_forward.1} parent=59 // pred_region
        %p356 = scmp.lt.s32.totalorder %s18, 1
        %s357 = scalar_select %p356, %s18, 1
        %s358 = smul.addr %s357, 16
        %s359 = smul.addr %s358, 4
        %s360 = scalar_lea.vmem %s0, %s359
      $region64: #{critic_forward.1} parent=59 // pred_fallthru
        _
    $region60: #{critic_forward.1} parent=5 // pred_fallthru
      _
    %p361 = scmp.le.s32.totalorder 1, %s18
    %p362 = scmp.lt.s32.totalorder %s18, 3
    %p363 = pnand %p361, %p362
    %p364 = pneg %p363
    // Predicated region
    $region65: #{critic_forward.1} parent=5 // pred_check
      _
    $region66: #{critic_forward.1} parent=5 // pred_check_branch
      %366 = sbr.rel (%p363) target = $region68
    $region67: #{critic_forward.1} parent=5 // pred_region
      %s367 = ssub.s32 %s18, 1
      %p368 = scmp.lt.s32.totalorder %s23, 1
      %s369 = scalar_select %p368, %s23, 1
      %s370 = smul.addr %s369, 16
      %s371 = smul.addr %s370, 4
      %s372 = scalar_lea.vmem %s0, %s371
      %p373 = pneg %p44
      %p374 = pneg %p41
      %p375 = pneg %p65
      %p376 = pneg %p62
      %p377 = pneg %p86
      %p378 = pneg %p83
      %p379 = pneg %p107
      %p380 = pneg %p104
      %p381 = pneg %p128
      %p382 = pneg %p125
      %p383 = pneg %p149
      %p384 = pneg %p146
      %p385 = pneg %p170
      %p386 = pneg %p167
      %p387 = pneg %p191
      %p388 = pneg %p188
      %p389 = pneg %p212
      %p390 = pneg %p209
      %p391 = pneg %p233
      %p392 = pneg %p230
      %p393 = pneg %p254
      %p394 = pneg %p251
      %p395 = pneg %p275
      %p396 = pneg %p272
      %p397 = pneg %p301
      %p398 = pneg %p298
      %p399 = scmp.lt.s32.totalorder %s23, 1
      %s400 = scalar_select %p399, %s23, 1
      %s401 = smul.addr %s400, 8
      %s402 = scalar_lea.vmem %s12, %s401
      %p403 = scmp.lt.s32.totalorder %s23, 1
      %s404 = scalar_select %p403, %s23, 1
      %s405 = smul.addr %s404, 16
      %s406 = smul.addr %s405, 4
      %s407 = scalar_lea.vmem %s0, %s406
      %p408 = scmp.lt.s32.totalorder %s23, 1
      %s409 = scalar_select %p408, %s23, 1
      %s410 = smul.addr %s409, 8
      %s411 = scalar_lea.vmem %s12, %s410
      %v413 = vld [vmem:[%s407] sm:$0xff]
      %v414 = vld [vmem:[%s407 + $0x8] sm:$0xff]
      %v415 = vld [vmem:[%s407 + $0x10] sm:$0xff]
      %v416 = vld [vmem:[%s407 + $0x18] sm:$0xff]
      %v417 = vld [vmem:[%s407 + $0x20] sm:$0xff]
      %v418 = vld [vmem:[%s407 + $0x28] sm:$0xff]
      %v419 = vld [vmem:[%s407 + $0x30] sm:$0xff]
      %v420 = vld [vmem:[%s407 + $0x38] sm:$0xff]
      %v421 = vld [vmem:[%s1] sm:$0xf]
      %v422 = vld [vmem:[%s1 + $0x4] sm:$0xf]
      %v423 = vld [vmem:[%s1 + $0x8] sm:$0xf]
      %v424 = vld [vmem:[%s1 + $0xc] sm:$0xf]
      %v425 = vld [vmem:[%s1 + $0x10] sm:$0xf]
      %v426 = vld [vmem:[%s1 + $0x14] sm:$0xf]
      %v427 = vld [vmem:[%s1 + $0x18] sm:$0xf]
      %v428 = vld [vmem:[%s1 + $0x1c] sm:$0xf]
      %v429 = vld [vmem:[%s1 + $0x20] sm:$0xf]
      %v430 = vld [vmem:[%s1 + $0x24] sm:$0xf]
      %v431 = vld [vmem:[%s1 + $0x28] sm:$0xf]
      %v432 = vld [vmem:[%s1 + $0x2c] sm:$0xf]
      %v433 = vld [vmem:[%s1 + $0x30] sm:$0xf]
      %v434 = vld [vmem:[%s1 + $0x34] sm:$0xf]
      %v435 = vld [vmem:[%s1 + $0x38] sm:$0xf]
      %v436 = vld [vmem:[%s1 + $0x3c] sm:$0xf]
      %v437 = vld [vmem:[%s1 + $0x40] sm:$0xf]
      %v438 = vld [vmem:[%s1 + $0x44] sm:$0xf]
      %v439 = vld [vmem:[%s1 + $0x48] sm:$0xf]
      %v440 = vld [vmem:[%s1 + $0x4c] sm:$0xf]
      %v441 = vld [vmem:[%s1 + $0x50] sm:$0xf]
      %v442 = vld [vmem:[%s1 + $0x54] sm:$0xf]
      %v443 = vld [vmem:[%s1 + $0x58] sm:$0xf]
      %v444 = vld [vmem:[%s1 + $0x5c] sm:$0xf]
      %v445 = vld [vmem:[%s1 + $0x60] sm:$0xf]
      %v446 = vld [vmem:[%s1 + $0x64] sm:$0xf]
      %v447 = vld [vmem:[%s1 + $0x68] sm:$0xf]
      %v448 = vld [vmem:[%s1 + $0x6c] sm:$0xf]
      %v449 = vld [vmem:[%s1 + $0x70] sm:$0xf]
      %v450 = vld [vmem:[%s1 + $0x74] sm:$0xf]
      %v451 = vld [vmem:[%s1 + $0x78] sm:$0xf]
      %v452 = vld [vmem:[%s1 + $0x7c] sm:$0xf]
      %v453 = vld [vmem:[%s2] sm:$0x1]
      %v455 = vlaneseq
      %v456 = vshrl.u32 %v455, 7
      %v457 = vsub.s32 0, %v456
      %v458 = vrot.slane %v453, %v457
      %v468 = vunpack.c.l.b16 %v413
      %v469 = vunpack.c.h.b16 %v413
      %v470 = vunpack.c.l.b16 %v414
      %v471 = vunpack.c.h.b16 %v414
      %v472 = vunpack.c.l.b16 %v415
      %v473 = vunpack.c.h.b16 %v415
      %v474 = vunpack.c.l.b16 %v416
      %v475 = vunpack.c.h.b16 %v416
      %v476 = vunpack.c.l.b16 %v417
      %v477 = vunpack.c.h.b16 %v417
      %v478 = vunpack.c.l.b16 %v418
      %v479 = vunpack.c.h.b16 %v418
      %v480 = vunpack.c.l.b16 %v419
      %v481 = vunpack.c.h.b16 %v419
      %v482 = vunpack.c.l.b16 %v420
      %v483 = vunpack.c.h.b16 %v420
      %v484 = vpack.c.b16 %v470, %v468
      %v485 = vpack.c.b16 %v471, %v469
      %v486 = vpack.c.b16 %v474, %v472
      %v487 = vpack.c.b16 %v475, %v473
      %v488 = vpack.c.b16 %v478, %v476
      %v489 = vpack.c.b16 %v479, %v477
      %v490 = vpack.c.b16 %v482, %v480
      %v491 = vpack.c.b16 %v483, %v481
      %v532 = vunpack.c.l.b16 %v421
      %v533 = vunpack.c.l.b16 %v422
      %v534 = vunpack.c.l.b16 %v423
      %v535 = vunpack.c.l.b16 %v424
      %v536 = vunpack.c.l.b16 %v425
      %v537 = vunpack.c.l.b16 %v426
      %v538 = vunpack.c.l.b16 %v427
      %v539 = vunpack.c.l.b16 %v428
      %v540 = vunpack.c.l.b16 %v429
      %v541 = vunpack.c.l.b16 %v430
      %v542 = vunpack.c.l.b16 %v431
      %v543 = vunpack.c.l.b16 %v432
      %v544 = vunpack.c.l.b16 %v433
      %v545 = vunpack.c.l.b16 %v434
      %v546 = vunpack.c.l.b16 %v435
      %v547 = vunpack.c.l.b16 %v436
      %v548 = vunpack.c.l.b16 %v437
      %v549 = vunpack.c.l.b16 %v438
      %v550 = vunpack.c.l.b16 %v439
      %v551 = vunpack.c.l.b16 %v440
      %v552 = vunpack.c.l.b16 %v441
      %v553 = vunpack.c.l.b16 %v442
      %v554 = vunpack.c.l.b16 %v443
      %v555 = vunpack.c.l.b16 %v444
      %v556 = vunpack.c.l.b16 %v445
      %v557 = vunpack.c.l.b16 %v446
      %v558 = vunpack.c.l.b16 %v447
      %v559 = vunpack.c.l.b16 %v448
      %v560 = vunpack.c.l.b16 %v449
      %v561 = vunpack.c.l.b16 %v450
      %v562 = vunpack.c.l.b16 %v451
      %v563 = vunpack.c.l.b16 %v452
      %v564 = vpack.c.b16 %v533, %v532
      %v565 = vpack.c.b16 %v535, %v534
      %v566 = vpack.c.b16 %v537, %v536
      %v567 = vpack.c.b16 %v539, %v538
      %v568 = vpack.c.b16 %v541, %v540
      %v569 = vpack.c.b16 %v543, %v542
      %v570 = vpack.c.b16 %v545, %v544
      %v571 = vpack.c.b16 %v547, %v546
      %v572 = vpack.c.b16 %v549, %v548
      %v573 = vpack.c.b16 %v551, %v550
      %v574 = vpack.c.b16 %v553, %v552
      %v575 = vpack.c.b16 %v555, %v554
      %v576 = vpack.c.b16 %v557, %v556
      %v577 = vpack.c.b16 %v559, %v558
      %v578 = vpack.c.b16 %v561, %v560
      %v579 = vpack.c.b16 %v563, %v562
      %596 = vmatprep.subr.bf16.mxu0 0
      %597 = vmatpush1.bf16.msra.mxu0 %v564
      %598 = vmatprep.subr.bf16.mxu0 0
      %599 = vmatpush1.bf16.msra.mxu0 %v565
      %600 = vmatprep.subr.bf16.mxu0 0
      %601 = vmatpush1.bf16.msra.mxu0 %v566
      %602 = vmatprep.subr.bf16.mxu0 0
      %603 = vmatpush1.bf16.msra.mxu0 %v567
      %604 = vmatprep.subr.bf16.mxu0 0
      %605 = vmatpush1.bf16.msra.mxu0 %v568
      %606 = vmatprep.subr.bf16.mxu0 0
      %607 = vmatpush1.bf16.msra.mxu0 %v569
      %608 = vmatprep.subr.bf16.mxu0 0
      %609 = vmatpush1.bf16.msra.mxu0 %v570
      %610 = vmatprep.subr.bf16.mxu0 0
      %611 = vmatpush1.bf16.msra.mxu0 %v571
      %612 = vmatprep.subr.bf16.mxu0 0
      %613 = vmatpush1.bf16.msra.mxu0 %v572
      %614 = vmatprep.subr.bf16.mxu0 0
      %615 = vmatpush1.bf16.msra.mxu0 %v573
      %616 = vmatprep.subr.bf16.mxu0 0
      %617 = vmatpush1.bf16.msra.mxu0 %v574
      %618 = vmatprep.subr.bf16.mxu0 0
      %619 = vmatpush1.bf16.msra.mxu0 %v575
      %620 = vmatprep.subr.bf16.mxu0 0
      %621 = vmatpush1.bf16.msra.mxu0 %v576
      %622 = vmatprep.subr.bf16.mxu0 0
      %623 = vmatpush1.bf16.msra.mxu0 %v577
      %624 = vmatprep.subr.bf16.mxu0 0
      %625 = vmatpush1.bf16.msra.mxu0 %v578
      %626 = vmatprep.subr.bf16.mxu0 0
      %627 = vmatpush1.bf16.msra.mxu0 %v579
      %628 = vmatprep.mubr.bf16.mxu0 %v485
      %629 = vmatmul.mubr.bf16.gmra.mrb[0].mxu0 %v484
      %v630 = vpop.f32.mrb[0].mxu0
      %v631 = vadd.f32 %v458, %v630
      %v632 = vpop.f32.mrb[0].mxu0
      %v633 = vpop.f32.mrb[0].mxu0
      %v634 = vadd.f32 %v458, %v633
      %v635 = vpop.f32.mrb[0].mxu0
      %636 = vmatprep.mubr.bf16.mxu0 %v487
      %637 = vmatmul.mubr.bf16.gmra.mrb[0].mxu0 %v486
      %v638 = vpop.f32.mrb[0].mxu0
      %v639 = vadd.f32 %v458, %v638
      %v640 = vpop.f32.mrb[0].mxu0
      %v641 = vpop.f32.mrb[0].mxu0
      %v642 = vadd.f32 %v458, %v641
      %v643 = vpop.f32.mrb[0].mxu0
      %644 = vmatprep.mubr.bf16.mxu0 %v489
      %645 = vmatmul.mubr.bf16.gmra.mrb[0].mxu0 %v488
      %v646 = vpop.f32.mrb[0].mxu0
      %v647 = vadd.f32 %v458, %v646
      %v648 = vpop.f32.mrb[0].mxu0
      %v649 = vpop.f32.mrb[0].mxu0
      %v650 = vadd.f32 %v458, %v649
      %v651 = vpop.f32.mrb[0].mxu0
      %652 = vmatprep.mubr.bf16.mxu0 %v491
      %653 = vmatmul.mubr.bf16.gmra.mrb[0].mxu0 %v490
      %v654 = vpop.f32.mrb[0].mxu0
      %v655 = vadd.f32 %v458, %v654
      %v656 = vpop.f32.mrb[0].mxu0
      %v657 = vpop.f32.mrb[0].mxu0
      %v658 = vadd.f32 %v458, %v657
      %v659 = vpop.f32.mrb[0].mxu0
      %660 = vdwg.mxu0
      %v661 = vmax.f32 %v631, 0.0
      %v662 = vmax.f32 %v634, 0.0
      %v663 = vmax.f32 %v639, 0.0
      %v664 = vmax.f32 %v642, 0.0
      %v665 = vmax.f32 %v647, 0.0
      %v666 = vmax.f32 %v650, 0.0
      %v667 = vmax.f32 %v655, 0.0
      %v668 = vmax.f32 %v658, 0.0
      %v669 = vpack.c.bf16 %v662, %v661
      %v670 = vpack.c.bf16 %v664, %v663
      %v671 = vpack.c.bf16 %v666, %v665
      %v672 = vpack.c.bf16 %v668, %v667
      %v673 = vld [vmem:[%s3] sm:$0xf]
      %v674 = vld [vmem:[%s3 + $0x4] sm:$0x1]
      %v677 = vunpack.c.l.b16 %v673
      %v678 = vunpack.c.l.b16 %v674
      %v679 = vpack.c.b16 %v678, %v677
      %vm680 = vcmask 523264
      %v682 = vsel %vm680, %v679, 0
      %684 = vmatprep.subr.bf16.mxu0 0
      %685 = vmatpush1.bf16.msra.mxu0 %v669
      %686 = vmatprep.subr.bf16.mxu0 0
      %687 = vmatpush1.bf16.msra.mxu0 %v670
      %688 = vmatprep.subr.bf16.mxu0 0
      %689 = vmatpush1.bf16.msra.mxu0 %v671
      %690 = vmatprep.subr.bf16.mxu0 0
      %691 = vmatpush1.bf16.msra.mxu0 %v672
      %692 = vmatprep.subr.bf16.mxu0 0
      %693 = vmatpush1.bf16.msra.mxu0 0
      %694 = vmatprep.subr.bf16.mxu0 0
      %695 = vmatpush1.bf16.msra.mxu0 0
      %696 = vmatprep.subr.bf16.mxu0 0
      %697 = vmatpush1.bf16.msra.mxu0 0
      %698 = vmatprep.subr.bf16.mxu0 0
      %699 = vmatpush1.bf16.msra.mxu0 0
      %700 = vmatprep.subr.bf16.mxu0 0
      %701 = vmatpush1.bf16.msra.mxu0 0
      %702 = vmatprep.subr.bf16.mxu0 0
      %703 = vmatpush1.bf16.msra.mxu0 0
      %704 = vmatprep.subr.bf16.mxu0 0
      %705 = vmatpush1.bf16.msra.mxu0 0
      %706 = vmatprep.subr.bf16.mxu0 0
      %707 = vmatpush1.bf16.msra.mxu0 0
      %708 = vmatprep.subr.bf16.mxu0 0
      %709 = vmatpush1.bf16.msra.mxu0 0
      %710 = vmatprep.subr.bf16.mxu0 0
      %711 = vmatpush1.bf16.msra.mxu0 0
      %712 = vmatprep.subr.bf16.mxu0 0
      %713 = vmatpush1.bf16.msra.mxu0 0
      %714 = vmatprep.subr.bf16.mxu0 0
      %715 = vmatpush1.bf16.msra.mxu0 0
      %716 = vmatprep.mubr.bf16.mxu0 0
      %717 = vmatmul.mubr.bf16.gmra.mrb[0].mxu0 %v682
      %v718 = vpop.f32.mrb[0].mxu0
      %v719 = vadd.f32 0.0, %v718
      %v720 = vpop.f32.mrb[0].mxu0
      %v721 = vpop.f32.mrb[0].mxu0
      %v722 = vadd.f32 0.0, %v721
      %v723 = vpop.f32.mrb[0].mxu0
      %724 = vdwg.mxu0
      %v725 = vpack.c.bf16 %v722, %v719
      %v726 = vld [vmem:[%s4] sm:$0xf]
      %v727 = vld [vmem:[%s4 + $0x4] sm:$0xf]
      %v728 = vld [vmem:[%s4 + $0x8] sm:$0xf]
      %v729 = vld [vmem:[%s4 + $0xc] sm:$0xf]
      %s730 = scalar_lea.vmem %s3, 8
      %v731 = vld [vmem:[%s730] sm:$0xf]
      %v732 = vld [vmem:[%s730 + $0x4] sm:$0x1]
      %v735 = vunpack.c.l.b16 %v731
      %v736 = vunpack.c.l.b16 %v732
      %v737 = vpack.c.b16 %v736, %v735
      %v739 = vsel %vm680, %v737, 0
      %741 = vmatprep.subr.bf16.mxu0 0
      %742 = vmatpush1.bf16.msra.mxu0 %v669
      %743 = vmatprep.subr.bf16.mxu0 0
      %744 = vmatpush1.bf16.msra.mxu0 %v670
      %745 = vmatprep.subr.bf16.mxu0 0
      %746 = vmatpush1.bf16.msra.mxu0 %v671
      %747 = vmatprep.subr.bf16.mxu0 0
      %748 = vmatpush1.bf16.msra.mxu0 %v672
      %749 = vmatprep.subr.bf16.mxu0 0
      %750 = vmatpush1.bf16.msra.mxu0 0
      %751 = vmatprep.subr.bf16.mxu0 0
      %752 = vmatpush1.bf16.msra.mxu0 0
      %753 = vmatprep.subr.bf16.mxu0 0
      %754 = vmatpush1.bf16.msra.mxu0 0
      %755 = vmatprep.subr.bf16.mxu0 0
      %756 = vmatpush1.bf16.msra.mxu0 0
      %757 = vmatprep.subr.bf16.mxu0 0
      %758 = vmatpush1.bf16.msra.mxu0 0
      %759 = vmatprep.subr.bf16.mxu0 0
      %760 = vmatpush1.bf16.msra.mxu0 0
      %761 = vmatprep.subr.bf16.mxu0 0
      %762 = vmatpush1.bf16.msra.mxu0 0
      %763 = vmatprep.subr.bf16.mxu0 0
      %764 = vmatpush1.bf16.msra.mxu0 0
      %765 = vmatprep.subr.bf16.mxu0 0
      %766 = vmatpush1.bf16.msra.mxu0 0
      %767 = vmatprep.subr.bf16.mxu0 0
      %768 = vmatpush1.bf16.msra.mxu0 0
      %769 = vmatprep.subr.bf16.mxu0 0
      %770 = vmatpush1.bf16.msra.mxu0 0
      %771 = vmatprep.subr.bf16.mxu0 0
      %772 = vmatpush1.bf16.msra.mxu0 0
      %773 = vmatprep.mubr.bf16.mxu0 0
      %774 = vmatmul.mubr.bf16.gmra.mrb[0].mxu0 %v739
      %v775 = vpop.f32.mrb[0].mxu0
      %v776 = vadd.f32 0.0, %v775
      %v777 = vpop.f32.mrb[0].mxu0
      %v778 = vpop.f32.mrb[0].mxu0
      %v779 = vadd.f32 0.0, %v778
      %v780 = vpop.f32.mrb[0].mxu0
      %781 = vdwg.mxu0
      %v782 = vpack.c.bf16 %v779, %v776
      %s783 = scalar_lea.vmem %s4, 16
      %v784 = vld [vmem:[%s783] sm:$0xf]
      %v785 = vld [vmem:[%s783 + $0x4] sm:$0xf]
      %v786 = vld [vmem:[%s783 + $0x8] sm:$0xf]
      %v787 = vld [vmem:[%s783 + $0xc] sm:$0xf]
      %v792 = vunpack.c.l.b16 %v784
      %v793 = vunpack.c.l.b16 %v785
      %v794 = vunpack.c.l.b16 %v786
      %v795 = vunpack.c.l.b16 %v787
      %v796 = vpack.c.b16 %v793, %v792
      %v797 = vpack.c.b16 %v795, %v794
      %vm800 = vcmask 261120
      %v802 = vsel %vm800, %v782, 0
      %804 = vmatprep.subr.bf16.mxu0 0
      %805 = vmatpush1.bf16.msra.mxu0 %v796
      %806 = vmatprep.subr.bf16.mxu0 0
      %807 = vmatpush1.bf16.msra.mxu0 %v797
      %808 = vmatprep.subr.bf16.mxu0 0
      %809 = vmatpush1.bf16.msra.mxu0 0
      %810 = vmatprep.subr.bf16.mxu0 0
      %811 = vmatpush1.bf16.msra.mxu0 0
      %812 = vmatprep.subr.bf16.mxu0 0
      %813 = vmatpush1.bf16.msra.mxu0 0
      %814 = vmatprep.subr.bf16.mxu0 0
      %815 = vmatpush1.bf16.msra.mxu0 0
      %816 = vmatprep.subr.bf16.mxu0 0
      %817 = vmatpush1.bf16.msra.mxu0 0
      %818 = vmatprep.subr.bf16.mxu0 0
      %819 = vmatpush1.bf16.msra.mxu0 0
      %820 = vmatprep.subr.bf16.mxu0 0
      %821 = vmatpush1.bf16.msra.mxu0 0
      %822 = vmatprep.subr.bf16.mxu0 0
      %823 = vmatpush1.bf16.msra.mxu0 0
      %824 = vmatprep.subr.bf16.mxu0 0
      %825 = vmatpush1.bf16.msra.mxu0 0
      %826 = vmatprep.subr.bf16.mxu0 0
      %827 = vmatpush1.bf16.msra.mxu0 0
      %828 = vmatprep.subr.bf16.mxu0 0
      %829 = vmatpush1.bf16.msra.mxu0 0
      %830 = vmatprep.subr.bf16.mxu0 0
      %831 = vmatpush1.bf16.msra.mxu0 0
      %832 = vmatprep.subr.bf16.mxu0 0
      %833 = vmatpush1.bf16.msra.mxu0 0
      %834 = vmatprep.subr.bf16.mxu0 0
      %835 = vmatpush1.bf16.msra.mxu0 0
      %836 = vmatprep.mubr.bf16.mxu0 0
      %837 = vmatmul.mubr.bf16.gmra.mrb[0].mxu0 %v802
      %v838 = vpop.f32.mrb[0].mxu0
      %v839 = vadd.f32 0.0, %v838
      %v840 = vpop.f32.mrb[0].mxu0
      %v841 = vpop.f32.mrb[0].mxu0
      %v842 = vadd.f32 0.0, %v841
      %v843 = vpop.f32.mrb[0].mxu0
      %844 = vdwg.mxu0
      %v849 = vunpack.c.l.b16 %v726
      %v850 = vunpack.c.l.b16 %v727
      %v851 = vunpack.c.l.b16 %v728
      %v852 = vunpack.c.l.b16 %v729
      %v853 = vpack.c.b16 %v850, %v849
      %v854 = vpack.c.b16 %v852, %v851
      %v858 = vsel %vm800, %v725, 0
      %860 = vmatprep.subr.bf16.mxu0 0
      %861 = vmatpush1.bf16.msra.mxu0 %v853
      %862 = vmatprep.subr.bf16.mxu0 0
      %863 = vmatpush1.bf16.msra.mxu0 %v854
      %864 = vmatprep.subr.bf16.mxu0 0
      %865 = vmatpush1.bf16.msra.mxu0 0
      %866 = vmatprep.subr.bf16.mxu0 0
      %867 = vmatpush1.bf16.msra.mxu0 0
      %868 = vmatprep.subr.bf16.mxu0 0
      %869 = vmatpush1.bf16.msra.mxu0 0
      %870 = vmatprep.subr.bf16.mxu0 0
      %871 = vmatpush1.bf16.msra.mxu0 0
      %872 = vmatprep.subr.bf16.mxu0 0
      %873 = vmatpush1.bf16.msra.mxu0 0
      %874 = vmatprep.subr.bf16.mxu0 0
      %875 = vmatpush1.bf16.msra.mxu0 0
      %876 = vmatprep.subr.bf16.mxu0 0
      %877 = vmatpush1.bf16.msra.mxu0 0
      %878 = vmatprep.subr.bf16.mxu0 0
      %879 = vmatpush1.bf16.msra.mxu0 0
      %880 = vmatprep.subr.bf16.mxu0 0
      %881 = vmatpush1.bf16.msra.mxu0 0
      %882 = vmatprep.subr.bf16.mxu0 0
      %883 = vmatpush1.bf16.msra.mxu0 0
      %884 = vmatprep.subr.bf16.mxu0 0
      %885 = vmatpush1.bf16.msra.mxu0 0
      %886 = vmatprep.subr.bf16.mxu0 0
      %887 = vmatpush1.bf16.msra.mxu0 0
      %888 = vmatprep.subr.bf16.mxu0 0
      %889 = vmatpush1.bf16.msra.mxu0 0
      %890 = vmatprep.subr.bf16.mxu0 0
      %891 = vmatpush1.bf16.msra.mxu0 0
      %892 = vmatprep.mubr.bf16.mxu0 0
      %893 = vmatmul.mubr.bf16.gmra.mrb[0].mxu0 %v858
      %v894 = vpop.f32.mrb[0].mxu0
      %v895 = vadd.f32 %v839, %v894
      %v896 = vpop.f32.mrb[0].mxu0
      %v897 = vpop.f32.mrb[0].mxu0
      %v898 = vadd.f32 %v842, %v897
      %v899 = vpop.f32.mrb[0].mxu0
      %900 = vdwg.mxu0
      %s901 = scalar_lea.vmem %s3, 16
      %v902 = vld [vmem:[%s901] sm:$0xf]
      %v903 = vld [vmem:[%s901 + $0x4] sm:$0x1]
      %v906 = vunpack.c.l.b16 %v902
      %v907 = vunpack.c.l.b16 %v903
      %v908 = vpack.c.b16 %v907, %v906
      %v910 = vsel %vm680, %v908, 0
      %912 = vmatprep.subr.bf16.mxu0 0
      %913 = vmatpush1.bf16.msra.mxu0 %v669
      %914 = vmatprep.subr.bf16.mxu0 0
      %915 = vmatpush1.bf16.msra.mxu0 %v670
      %916 = vmatprep.subr.bf16.mxu0 0
      %917 = vmatpush1.bf16.msra.mxu0 %v671
      %918 = vmatprep.subr.bf16.mxu0 0
      %919 = vmatpush1.bf16.msra.mxu0 %v672
      %920 = vmatprep.subr.bf16.mxu0 0
      %921 = vmatpush1.bf16.msra.mxu0 0
      %922 = vmatprep.subr.bf16.mxu0 0
      %923 = vmatpush1.bf16.msra.mxu0 0
      %924 = vmatprep.subr.bf16.mxu0 0
      %925 = vmatpush1.bf16.msra.mxu0 0
      %926 = vmatprep.subr.bf16.mxu0 0
      %927 = vmatpush1.bf16.msra.mxu0 0
      %928 = vmatprep.subr.bf16.mxu0 0
      %929 = vmatpush1.bf16.msra.mxu0 0
      %930 = vmatprep.subr.bf16.mxu0 0
      %931 = vmatpush1.bf16.msra.mxu0 0
      %932 = vmatprep.subr.bf16.mxu0 0
      %933 = vmatpush1.bf16.msra.mxu0 0
      %934 = vmatprep.subr.bf16.mxu0 0
      %935 = vmatpush1.bf16.msra.mxu0 0
      %936 = vmatprep.subr.bf16.mxu0 0
      %937 = vmatpush1.bf16.msra.mxu0 0
      %938 = vmatprep.subr.bf16.mxu0 0
      %939 = vmatpush1.bf16.msra.mxu0 0
      %940 = vmatprep.subr.bf16.mxu0 0
      %941 = vmatpush1.bf16.msra.mxu0 0
      %942 = vmatprep.subr.bf16.mxu0 0
      %943 = vmatpush1.bf16.msra.mxu0 0
      %944 = vmatprep.mubr.bf16.mxu0 0
      %945 = vmatmul.mubr.bf16.gmra.mrb[0].mxu0 %v910
      %v946 = vpop.f32.mrb[0].mxu0
      %v947 = vadd.f32 0.0, %v946
      %v948 = vpop.f32.mrb[0].mxu0
      %v949 = vpop.f32.mrb[0].mxu0
      %v950 = vadd.f32 0.0, %v949
      %v951 = vpop.f32.mrb[0].mxu0
      %952 = vdwg.mxu0
      %v953 = vpack.c.bf16 %v950, %v947
      %s954 = scalar_lea.vmem %s4, 32
      %v955 = vld [vmem:[%s954] sm:$0xf]
      %v956 = vld [vmem:[%s954 + $0x4] sm:$0xf]
      %v957 = vld [vmem:[%s954 + $0x8] sm:$0xf]
      %v958 = vld [vmem:[%s954 + $0xc] sm:$0xf]
      %v963 = vunpack.c.l.b16 %v955
      %v964 = vunpack.c.l.b16 %v956
      %v965 = vunpack.c.l.b16 %v957
      %v966 = vunpack.c.l.b16 %v958
      %v967 = vpack.c.b16 %v964, %v963
      %v968 = vpack.c.b16 %v966, %v965
      %v972 = vsel %vm800, %v953, 0
      %974 = vmatprep.subr.bf16.mxu0 0
      %975 = vmatpush1.bf16.msra.mxu0 %v967
      %976 = vmatprep.subr.bf16.mxu0 0
      %977 = vmatpush1.bf16.msra.mxu0 %v968
      %978 = vmatprep.subr.bf16.mxu0 0
      %979 = vmatpush1.bf16.msra.mxu0 0
      %980 = vmatprep.subr.bf16.mxu0 0
      %981 = vmatpush1.bf16.msra.mxu0 0
      %982 = vmatprep.subr.bf16.mxu0 0
      %983 = vmatpush1.bf16.msra.mxu0 0
      %984 = vmatprep.subr.bf16.mxu0 0
      %985 = vmatpush1.bf16.msra.mxu0 0
      %986 = vmatprep.subr.bf16.mxu0 0
      %987 = vmatpush1.bf16.msra.mxu0 0
      %988 = vmatprep.subr.bf16.mxu0 0
      %989 = vmatpush1.bf16.msra.mxu0 0
      %990 = vmatprep.subr.bf16.mxu0 0
      %991 = vmatpush1.bf16.msra.mxu0 0
      %992 = vmatprep.subr.bf16.mxu0 0
      %993 = vmatpush1.bf16.msra.mxu0 0
      %994 = vmatprep.subr.bf16.mxu0 0
      %995 = vmatpush1.bf16.msra.mxu0 0
      %996 = vmatprep.subr.bf16.mxu0 0
      %997 = vmatpush1.bf16.msra.mxu0 0
      %998 = vmatprep.subr.bf16.mxu0 0
      %999 = vmatpush1.bf16.msra.mxu0 0
      %1000 = vmatprep.subr.bf16.mxu0 0
      %1001 = vmatpush1.bf16.msra.mxu0 0
      %1002 = vmatprep.subr.bf16.mxu0 0
      %1003 = vmatpush1.bf16.msra.mxu0 0
      %1004 = vmatprep.subr.bf16.mxu0 0
      %1005 = vmatpush1.bf16.msra.mxu0 0
      %1006 = vmatprep.mubr.bf16.mxu0 0
      %1007 = vmatmul.mubr.bf16.gmra.mrb[0].mxu0 %v972
      %v1008 = vpop.f32.mrb[0].mxu0
      %v1009 = vadd.f32 0.0, %v1008
      %v1010 = vpop.f32.mrb[0].mxu0
      %v1011 = vpop.f32.mrb[0].mxu0
      %v1012 = vadd.f32 0.0, %v1011
      %v1013 = vpop.f32.mrb[0].mxu0
      %1014 = vdwg.mxu0
      %v1015 = vadd.f32 %v895, %v1009
      %v1016 = vadd.f32 %v898, %v1012
      %s1017 = scalar_lea.vmem %s3, 24
      %v1018 = vld [vmem:[%s1017] sm:$0xf]
      %v1019 = vld [vmem:[%s1017 + $0x4] sm:$0x1]
      %v1022 = vunpack.c.l.b16 %v1018
      %v1023 = vunpack.c.l.b16 %v1019
      %v1024 = vpack.c.b16 %v1023, %v1022
      %v1026 = vsel %vm680, %v1024, 0
      %1028 = vmatprep.subr.bf16.mxu0 0
      %1029 = vmatpush1.bf16.msra.mxu0 %v669
      %1030 = vmatprep.subr.bf16.mxu0 0
      %1031 = vmatpush1.bf16.msra.mxu0 %v670
      %1032 = vmatprep.subr.bf16.mxu0 0
      %1033 = vmatpush1.bf16.msra.mxu0 %v671
      %1034 = vmatprep.subr.bf16.mxu0 0
      %1035 = vmatpush1.bf16.msra.mxu0 %v672
      %1036 = vmatprep.subr.bf16.mxu0 0
      %1037 = vmatpush1.bf16.msra.mxu0 0
      %1038 = vmatprep.subr.bf16.mxu0 0
      %1039 = vmatpush1.bf16.msra.mxu0 0
      %1040 = vmatprep.subr.bf16.mxu0 0
      %1041 = vmatpush1.bf16.msra.mxu0 0
      %1042 = vmatprep.subr.bf16.mxu0 0
      %1043 = vmatpush1.bf16.msra.mxu0 0
      %1044 = vmatprep.subr.bf16.mxu0 0
      %1045 = vmatpush1.bf16.msra.mxu0 0
      %1046 = vmatprep.subr.bf16.mxu0 0
      %1047 = vmatpush1.bf16.msra.mxu0 0
      %1048 = vmatprep.subr.bf16.mxu0 0
      %1049 = vmatpush1.bf16.msra.mxu0 0
      %1050 = vmatprep.subr.bf16.mxu0 0
      %1051 = vmatpush1.bf16.msra.mxu0 0
      %1052 = vmatprep.subr.bf16.mxu0 0
      %1053 = vmatpush1.bf16.msra.mxu0 0
      %1054 = vmatprep.subr.bf16.mxu0 0
      %1055 = vmatpush1.bf16.msra.mxu0 0
      %1056 = vmatprep.subr.bf16.mxu0 0
      %1057 = vmatpush1.bf16.msra.mxu0 0
      %1058 = vmatprep.subr.bf16.mxu0 0
      %1059 = vmatpush1.bf16.msra.mxu0 0
      %1060 = vmatprep.mubr.bf16.mxu0 0
      %1061 = vmatmul.mubr.bf16.gmra.mrb[0].mxu0 %v1026
      %v1062 = vpop.f32.mrb[0].mxu0
      %v1063 = vadd.f32 0.0, %v1062
      %v1064 = vpop.f32.mrb[0].mxu0
      %v1065 = vpop.f32.mrb[0].mxu0
      %v1066 = vadd.f32 0.0, %v1065
      %v1067 = vpop.f32.mrb[0].mxu0
      %1068 = vdwg.mxu0
      %v1069 = vpack.c.bf16 %v1066, %v1063
      %s1070 = scalar_lea.vmem %s4, 48
      %v1071 = vld [vmem:[%s1070] sm:$0xf]
      %v1072 = vld [vmem:[%s1070 + $0x4] sm:$0xf]
      %v1073 = vld [vmem:[%s1070 + $0x8] sm:$0xf]
      %v1074 = vld [vmem:[%s1070 + $0xc] sm:$0xf]
      %v1079 = vunpack.c.l.b16 %v1071
      %v1080 = vunpack.c.l.b16 %v1072
      %v1081 = vunpack.c.l.b16 %v1073
      %v1082 = vunpack.c.l.b16 %v1074
      %v1083 = vpack.c.b16 %v1080, %v1079
      %v1084 = vpack.c.b16 %v1082, %v1081
      %v1088 = vsel %vm800, %v1069, 0
      %1090 = vmatprep.subr.bf16.mxu0 0
      %1091 = vmatpush1.bf16.msra.mxu0 %v1083
      %1092 = vmatprep.subr.bf16.mxu0 0
      %1093 = vmatpush1.bf16.msra.mxu0 %v1084
      %1094 = vmatprep.subr.bf16.mxu0 0
      %1095 = vmatpush1.bf16.msra.mxu0 0
      %1096 = vmatprep.subr.bf16.mxu0 0
      %1097 = vmatpush1.bf16.msra.mxu0 0
      %1098 = vmatprep.subr.bf16.mxu0 0
      %1099 = vmatpush1.bf16.msra.mxu0 0
      %1100 = vmatprep.subr.bf16.mxu0 0
      %1101 = vmatpush1.bf16.msra.mxu0 0
      %1102 = vmatprep.subr.bf16.mxu0 0
      %1103 = vmatpush1.bf16.msra.mxu0 0
      %1104 = vmatprep.subr.bf16.mxu0 0
      %1105 = vmatpush1.bf16.msra.mxu0 0
      %1106 = vmatprep.subr.bf16.mxu0 0
      %1107 = vmatpush1.bf16.msra.mxu0 0
      %1108 = vmatprep.subr.bf16.mxu0 0
      %1109 = vmatpush1.bf16.msra.mxu0 0
      %1110 = vmatprep.subr.bf16.mxu0 0
      %1111 = vmatpush1.bf16.msra.mxu0 0
      %1112 = vmatprep.subr.bf16.mxu0 0
      %1113 = vmatpush1.bf16.msra.mxu0 0
      %1114 = vmatprep.subr.bf16.mxu0 0
      %1115 = vmatpush1.bf16.msra.mxu0 0
      %1116 = vmatprep.subr.bf16.mxu0 0
      %1117 = vmatpush1.bf16.msra.mxu0 0
      %1118 = vmatprep.subr.bf16.mxu0 0
      %1119 = vmatpush1.bf16.msra.mxu0 0
      %1120 = vmatprep.subr.bf16.mxu0 0
      %1121 = vmatpush1.bf16.msra.mxu0 0
      %1122 = vmatprep.mubr.bf16.mxu0 0
      %1123 = vmatmul.mubr.bf16.gmra.mrb[0].mxu0 %v1088
      %v1124 = vpop.f32.mrb[0].mxu0
      %v1125 = vadd.f32 0.0, %v1124
      %v1126 = vpop.f32.mrb[0].mxu0
      %v1127 = vpop.f32.mrb[0].mxu0
      %v1128 = vadd.f32 0.0, %v1127
      %v1129 = vpop.f32.mrb[0].mxu0
      %1130 = vdwg.mxu0
      %v1131 = vadd.f32 %v1015, %v1125
      %v1132 = vadd.f32 %v1016, %v1128
      %s1133 = scalar_lea.vmem %s3, 32
      %v1134 = vld [vmem:[%s1133] sm:$0xf]
      %v1135 = vld [vmem:[%s1133 + $0x4] sm:$0x1]
      %v1138 = vunpack.c.l.b16 %v1134
      %v1139 = vunpack.c.l.b16 %v1135
      %v1140 = vpack.c.b16 %v1139, %v1138
      %v1142 = vsel %vm680, %v1140, 0
      %1144 = vmatprep.subr.bf16.mxu0 0
      %1145 = vmatpush1.bf16.msra.mxu0 %v669
      %1146 = vmatprep.subr.bf16.mxu0 0
      %1147 = vmatpush1.bf16.msra.mxu0 %v670
      %1148 = vmatprep.subr.bf16.mxu0 0
      %1149 = vmatpush1.bf16.msra.mxu0 %v671
      %1150 = vmatprep.subr.bf16.mxu0 0
      %1151 = vmatpush1.bf16.msra.mxu0 %v672
      %1152 = vmatprep.subr.bf16.mxu0 0
      %1153 = vmatpush1.bf16.msra.mxu0 0
      %1154 = vmatprep.subr.bf16.mxu0 0
      %1155 = vmatpush1.bf16.msra.mxu0 0
      %1156 = vmatprep.subr.bf16.mxu0 0
      %1157 = vmatpush1.bf16.msra.mxu0 0
      %1158 = vmatprep.subr.bf16.mxu0 0
      %1159 = vmatpush1.bf16.msra.mxu0 0
      %1160 = vmatprep.subr.bf16.mxu0 0
      %1161 = vmatpush1.bf16.msra.mxu0 0
      %1162 = vmatprep.subr.bf16.mxu0 0
      %1163 = vmatpush1.bf16.msra.mxu0 0
      %1164 = vmatprep.subr.bf16.mxu0 0
      %1165 = vmatpush1.bf16.msra.mxu0 0
      %1166 = vmatprep.subr.bf16.mxu0 0
      %1167 = vmatpush1.bf16.msra.mxu0 0
      %1168 = vmatprep.subr.bf16.mxu0 0
      %1169 = vmatpush1.bf16.msra.mxu0 0
      %1170 = vmatprep.subr.bf16.mxu0 0
      %1171 = vmatpush1.bf16.msra.mxu0 0
      %1172 = vmatprep.subr.bf16.mxu0 0
      %1173 = vmatpush1.bf16.msra.mxu0 0
      %1174 = vmatprep.subr.bf16.mxu0 0
      %1175 = vmatpush1.bf16.msra.mxu0 0
      %1176 = vmatprep.mubr.bf16.mxu0 0
      %1177 = vmatmul.mubr.bf16.gmra.mrb[0].mxu0 %v1142
      %v1178 = vpop.f32.mrb[0].mxu0
      %v1179 = vadd.f32 0.0, %v1178
      %v1180 = vpop.f32.mrb[0].mxu0
      %v1181 = vpop.f32.mrb[0].mxu0
      %v1182 = vadd.f32 0.0, %v1181
      %v1183 = vpop.f32.mrb[0].mxu0
      %1184 = vdwg.mxu0
      %v1185 = vpack.c.bf16 %v1182, %v1179
      %s1186 = scalar_lea.vmem %s4, 64
      %v1187 = vld [vmem:[%s1186] sm:$0xf]
      %v1188 = vld [vmem:[%s1186 + $0x4] sm:$0xf]
      %v1189 = vld [vmem:[%s1186 + $0x8] sm:$0xf]
      %v1190 = vld [vmem:[%s1186 + $0xc] sm:$0xf]
      %v1195 = vunpack.c.l.b16 %v1187
      %v1196 = vunpack.c.l.b16 %v1188
      %v1197 = vunpack.c.l.b16 %v1189
      %v1198 = vunpack.c.l.b16 %v1190
      %v1199 = vpack.c.b16 %v1196, %v1195
      %v1200 = vpack.c.b16 %v1198, %v1197
      %v1204 = vsel %vm800, %v1185, 0
      %1206 = vmatprep.subr.bf16.mxu0 0
      %1207 = vmatpush1.bf16.msra.mxu0 %v1199
      %1208 = vmatprep.subr.bf16.mxu0 0
      %1209 = vmatpush1.bf16.msra.mxu0 %v1200
      %1210 = vmatprep.subr.bf16.mxu0 0
      %1211 = vmatpush1.bf16.msra.mxu0 0
      %1212 = vmatprep.subr.bf16.mxu0 0
      %1213 = vmatpush1.bf16.msra.mxu0 0
      %1214 = vmatprep.subr.bf16.mxu0 0
      %1215 = vmatpush1.bf16.msra.mxu0 0
      %1216 = vmatprep.subr.bf16.mxu0 0
      %1217 = vmatpush1.bf16.msra.mxu0 0
      %1218 = vmatprep.subr.bf16.mxu0 0
      %1219 = vmatpush1.bf16.msra.mxu0 0
      %1220 = vmatprep.subr.bf16.mxu0 0
      %1221 = vmatpush1.bf16.msra.mxu0 0
      %1222 = vmatprep.subr.bf16.mxu0 0
      %1223 = vmatpush1.bf16.msra.mxu0 0
      %1224 = vmatprep.subr.bf16.mxu0 0
      %1225 = vmatpush1.bf16.msra.mxu0 0
      %1226 = vmatprep.subr.bf16.mxu0 0
      %1227 = vmatpush1.bf16.msra.mxu0 0
      %1228 = vmatprep.subr.bf16.mxu0 0
      %1229 = vmatpush1.bf16.msra.mxu0 0
      %1230 = vmatprep.subr.bf16.mxu0 0
      %1231 = vmatpush1.bf16.msra.mxu0 0
      %1232 = vmatprep.subr.bf16.mxu0 0
      %1233 = vmatpush1.bf16.msra.mxu0 0
      %1234 = vmatprep.subr.bf16.mxu0 0
      %1235 = vmatpush1.bf16.msra.mxu0 0
      %1236 = vmatprep.subr.bf16.mxu0 0
      %1237 = vmatpush1.bf16.msra.mxu0 0
      %1238 = vmatprep.mubr.bf16.mxu0 0
      %1239 = vmatmul.mubr.bf16.gmra.mrb[0].mxu0 %v1204
      %v1240 = vpop.f32.mrb[0].mxu0
      %v1241 = vadd.f32 0.0, %v1240
      %v1242 = vpop.f32.mrb[0].mxu0
      %v1243 = vpop.f32.mrb[0].mxu0
      %v1244 = vadd.f32 0.0, %v1243
      %v1245 = vpop.f32.mrb[0].mxu0
      %1246 = vdwg.mxu0
      %v1247 = vadd.f32 %v1131, %v1241
      %v1248 = vadd.f32 %v1132, %v1244
      %s1249 = scalar_lea.vmem %s3, 40
      %v1250 = vld [vmem:[%s1249] sm:$0xf]
      %v1251 = vld [vmem:[%s1249 + $0x4] sm:$0x1]
      %v1254 = vunpack.c.l.b16 %v1250
      %v1255 = vunpack.c.l.b16 %v1251
      %v1256 = vpack.c.b16 %v1255, %v1254
      %v1258 = vsel %vm680, %v1256, 0
      %1260 = vmatprep.subr.bf16.mxu0 0
      %1261 = vmatpush1.bf16.msra.mxu0 %v669
      %1262 = vmatprep.subr.bf16.mxu0 0
      %1263 = vmatpush1.bf16.msra.mxu0 %v670
      %1264 = vmatprep.subr.bf16.mxu0 0
      %1265 = vmatpush1.bf16.msra.mxu0 %v671
      %1266 = vmatprep.subr.bf16.mxu0 0
      %1267 = vmatpush1.bf16.msra.mxu0 %v672
      %1268 = vmatprep.subr.bf16.mxu0 0
      %1269 = vmatpush1.bf16.msra.mxu0 0
      %1270 = vmatprep.subr.bf16.mxu0 0
      %1271 = vmatpush1.bf16.msra.mxu0 0
      %1272 = vmatprep.subr.bf16.mxu0 0
      %1273 = vmatpush1.bf16.msra.mxu0 0
      %1274 = vmatprep.subr.bf16.mxu0 0
      %1275 = vmatpush1.bf16.msra.mxu0 0
      %1276 = vmatprep.subr.bf16.mxu0 0
      %1277 = vmatpush1.bf16.msra.mxu0 0
      %1278 = vmatprep.subr.bf16.mxu0 0
      %1279 = vmatpush1.bf16.msra.mxu0 0
      %1280 = vmatprep.subr.bf16.mxu0 0
      %1281 = vmatpush1.bf16.msra.mxu0 0
      %1282 = vmatprep.subr.bf16.mxu0 0
      %1283 = vmatpush1.bf16.msra.mxu0 0
      %1284 = vmatprep.subr.bf16.mxu0 0
      %1285 = vmatpush1.bf16.msra.mxu0 0
      %1286 = vmatprep.subr.bf16.mxu0 0
      %1287 = vmatpush1.bf16.msra.mxu0 0
      %1288 = vmatprep.subr.bf16.mxu0 0
      %1289 = vmatpush1.bf16.msra.mxu0 0
      %1290 = vmatprep.subr.bf16.mxu0 0
      %1291 = vmatpush1.bf16.msra.mxu0 0
      %1292 = vmatprep.mubr.bf16.mxu0 0
      %1293 = vmatmul.mubr.bf16.gmra.mrb[0].mxu0 %v1258
      %v1294 = vpop.f32.mrb[0].mxu0
      %v1295 = vadd.f32 0.0, %v1294
      %v1296 = vpop.f32.mrb[0].mxu0
      %v1297 = vpop.f32.mrb[0].mxu0
      %v1298 = vadd.f32 0.0, %v1297
      %v1299 = vpop.f32.mrb[0].mxu0
      %1300 = vdwg.mxu0
      %v1301 = vpack.c.bf16 %v1298, %v1295
      %s1302 = scalar_lea.vmem %s4, 80
      %v1303 = vld [vmem:[%s1302] sm:$0xf]
      %v1304 = vld [vmem:[%s1302 + $0x4] sm:$0xf]
      %v1305 = vld [vmem:[%s1302 + $0x8] sm:$0xf]
      %v1306 = vld [vmem:[%s1302 + $0xc] sm:$0xf]
      %v1311 = vunpack.c.l.b16 %v1303
      %v1312 = vunpack.c.l.b16 %v1304
      %v1313 = vunpack.c.l.b16 %v1305
      %v1314 = vunpack.c.l.b16 %v1306
      %v1315 = vpack.c.b16 %v1312, %v1311
      %v1316 = vpack.c.b16 %v1314, %v1313
      %v1320 = vsel %vm800, %v1301, 0
      %1322 = vmatprep.subr.bf16.mxu0 0
      %1323 = vmatpush1.bf16.msra.mxu0 %v1315
      %1324 = vmatprep.subr.bf16.mxu0 0
      %1325 = vmatpush1.bf16.msra.mxu0 %v1316
      %1326 = vmatprep.subr.bf16.mxu0 0
      %1327 = vmatpush1.bf16.msra.mxu0 0
      %1328 = vmatprep.subr.bf16.mxu0 0
      %1329 = vmatpush1.bf16.msra.mxu0 0
      %1330 = vmatprep.subr.bf16.mxu0 0
      %1331 = vmatpush1.bf16.msra.mxu0 0
      %1332 = vmatprep.subr.bf16.mxu0 0
      %1333 = vmatpush1.bf16.msra.mxu0 0
      %1334 = vmatprep.subr.bf16.mxu0 0
      %1335 = vmatpush1.bf16.msra.mxu0 0
      %1336 = vmatprep.subr.bf16.mxu0 0
      %1337 = vmatpush1.bf16.msra.mxu0 0
      %1338 = vmatprep.subr.bf16.mxu0 0
      %1339 = vmatpush1.bf16.msra.mxu0 0
      %1340 = vmatprep.subr.bf16.mxu0 0
      %1341 = vmatpush1.bf16.msra.mxu0 0
      %1342 = vmatprep.subr.bf16.mxu0 0
      %1343 = vmatpush1.bf16.msra.mxu0 0
      %1344 = vmatprep.subr.bf16.mxu0 0
      %1345 = vmatpush1.bf16.msra.mxu0 0
      %1346 = vmatprep.subr.bf16.mxu0 0
      %1347 = vmatpush1.bf16.msra.mxu0 0
      %1348 = vmatprep.subr.bf16.mxu0 0
      %1349 = vmatpush1.bf16.msra.mxu0 0
      %1350 = vmatprep.subr.bf16.mxu0 0
      %1351 = vmatpush1.bf16.msra.mxu0 0
      %1352 = vmatprep.subr.bf16.mxu0 0
      %1353 = vmatpush1.bf16.msra.mxu0 0
      %1354 = vmatprep.mubr.bf16.mxu0 0
      %1355 = vmatmul.mubr.bf16.gmra.mrb[0].mxu0 %v1320
      %v1356 = vpop.f32.mrb[0].mxu0
      %v1357 = vadd.f32 0.0, %v1356
      %v1358 = vpop.f32.mrb[0].mxu0
      %v1359 = vpop.f32.mrb[0].mxu0
      %v1360 = vadd.f32 0.0, %v1359
      %v1361 = vpop.f32.mrb[0].mxu0
      %1362 = vdwg.mxu0
      %v1363 = vadd.f32 %v1247, %v1357
      %v1364 = vadd.f32 %v1248, %v1360
      %s1365 = scalar_lea.vmem %s3, 48
      %v1366 = vld [vmem:[%s1365] sm:$0xf]
      %v1367 = vld [vmem:[%s1365 + $0x4] sm:$0x1]
      %v1370 = vunpack.c.l.b16 %v1366
      %v1371 = vunpack.c.l.b16 %v1367
      %v1372 = vpack.c.b16 %v1371, %v1370
      %v1374 = vsel %vm680, %v1372, 0
      %1376 = vmatprep.subr.bf16.mxu0 0
      %1377 = vmatpush1.bf16.msra.mxu0 %v669
      %1378 = vmatprep.subr.bf16.mxu0 0
      %1379 = vmatpush1.bf16.msra.mxu0 %v670
      %1380 = vmatprep.subr.bf16.mxu0 0
      %1381 = vmatpush1.bf16.msra.mxu0 %v671
      %1382 = vmatprep.subr.bf16.mxu0 0
      %1383 = vmatpush1.bf16.msra.mxu0 %v672
      %1384 = vmatprep.subr.bf16.mxu0 0
      %1385 = vmatpush1.bf16.msra.mxu0 0
      %1386 = vmatprep.subr.bf16.mxu0 0
      %1387 = vmatpush1.bf16.msra.mxu0 0
      %1388 = vmatprep.subr.bf16.mxu0 0
      %1389 = vmatpush1.bf16.msra.mxu0 0
      %1390 = vmatprep.subr.bf16.mxu0 0
      %1391 = vmatpush1.bf16.msra.mxu0 0
      %1392 = vmatprep.subr.bf16.mxu0 0
      %1393 = vmatpush1.bf16.msra.mxu0 0
      %1394 = vmatprep.subr.bf16.mxu0 0
      %1395 = vmatpush1.bf16.msra.mxu0 0
      %1396 = vmatprep.subr.bf16.mxu0 0
      %1397 = vmatpush1.bf16.msra.mxu0 0
      %1398 = vmatprep.subr.bf16.mxu0 0
      %1399 = vmatpush1.bf16.msra.mxu0 0
      %1400 = vmatprep.subr.bf16.mxu0 0
      %1401 = vmatpush1.bf16.msra.mxu0 0
      %1402 = vmatprep.subr.bf16.mxu0 0
      %1403 = vmatpush1.bf16.msra.mxu0 0
      %1404 = vmatprep.subr.bf16.mxu0 0
      %1405 = vmatpush1.bf16.msra.mxu0 0
      %1406 = vmatprep.subr.bf16.mxu0 0
      %1407 = vmatpush1.bf16.msra.mxu0 0
      %1408 = vmatprep.mubr.bf16.mxu0 0
      %1409 = vmatmul.mubr.bf16.gmra.mrb[0].mxu0 %v1374
      %v1410 = vpop.f32.mrb[0].mxu0
      %v1411 = vadd.f32 0.0, %v1410
      %v1412 = vpop.f32.mrb[0].mxu0
      %v1413 = vpop.f32.mrb[0].mxu0
      %v1414 = vadd.f32 0.0, %v1413
      %v1415 = vpop.f32.mrb[0].mxu0
      %1416 = vdwg.mxu0
      %v1417 = vpack.c.bf16 %v1414, %v1411
      %s1418 = scalar_lea.vmem %s4, 96
      %v1419 = vld [vmem:[%s1418] sm:$0xf]
      %v1420 = vld [vmem:[%s1418 + $0x4] sm:$0xf]
      %v1421 = vld [vmem:[%s1418 + $0x8] sm:$0xf]
      %v1422 = vld [vmem:[%s1418 + $0xc] sm:$0xf]
      %v1427 = vunpack.c.l.b16 %v1419
      %v1428 = vunpack.c.l.b16 %v1420
      %v1429 = vunpack.c.l.b16 %v1421
      %v1430 = vunpack.c.l.b16 %v1422
      %v1431 = vpack.c.b16 %v1428, %v1427
      %v1432 = vpack.c.b16 %v1430, %v1429
      %v1436 = vsel %vm800, %v1417, 0
      %1438 = vmatprep.subr.bf16.mxu0 0
      %1439 = vmatpush1.bf16.msra.mxu0 %v1431
      %1440 = vmatprep.subr.bf16.mxu0 0
      %1441 = vmatpush1.bf16.msra.mxu0 %v1432
      %1442 = vmatprep.subr.bf16.mxu0 0
      %1443 = vmatpush1.bf16.msra.mxu0 0
      %1444 = vmatprep.subr.bf16.mxu0 0
      %1445 = vmatpush1.bf16.msra.mxu0 0
      %1446 = vmatprep.subr.bf16.mxu0 0
      %1447 = vmatpush1.bf16.msra.mxu0 0
      %1448 = vmatprep.subr.bf16.mxu0 0
      %1449 = vmatpush1.bf16.msra.mxu0 0
      %1450 = vmatprep.subr.bf16.mxu0 0
      %1451 = vmatpush1.bf16.msra.mxu0 0
      %1452 = vmatprep.subr.bf16.mxu0 0
      %1453 = vmatpush1.bf16.msra.mxu0 0
      %1454 = vmatprep.subr.bf16.mxu0 0
      %1455 = vmatpush1.bf16.msra.mxu0 0
      %1456 = vmatprep.subr.bf16.mxu0 0
      %1457 = vmatpush1.bf16.msra.mxu0 0
      %1458 = vmatprep.subr.bf16.mxu0 0
      %1459 = vmatpush1.bf16.msra.mxu0 0
      %1460 = vmatprep.subr.bf16.mxu0 0
      %1461 = vmatpush1.bf16.msra.mxu0 0
      %1462 = vmatprep.subr.bf16.mxu0 0
      %1463 = vmatpush1.bf16.msra.mxu0 0
      %1464 = vmatprep.subr.bf16.mxu0 0
      %1465 = vmatpush1.bf16.msra.mxu0 0
      %1466 = vmatprep.subr.bf16.mxu0 0
      %1467 = vmatpush1.bf16.msra.mxu0 0
      %1468 = vmatprep.subr.bf16.mxu0 0
      %1469 = vmatpush1.bf16.msra.mxu0 0
      %1470 = vmatprep.mubr.bf16.mxu0 0
      %1471 = vmatmul.mubr.bf16.gmra.mrb[0].mxu0 %v1436
      %v1472 = vpop.f32.mrb[0].mxu0
      %v1473 = vadd.f32 0.0, %v1472
      %v1474 = vpop.f32.mrb[0].mxu0
      %v1475 = vpop.f32.mrb[0].mxu0
      %v1476 = vadd.f32 0.0, %v1475
      %v1477 = vpop.f32.mrb[0].mxu0
      %1478 = vdwg.mxu0
      %v1479 = vadd.f32 %v1363, %v1473
      %v1480 = vadd.f32 %v1364, %v1476
      %s1481 = scalar_lea.vmem %s3, 56
      %v1482 = vld [vmem:[%s1481] sm:$0xf]
      %v1483 = vld [vmem:[%s1481 + $0x4] sm:$0x1]
      %v1486 = vunpack.c.l.b16 %v1482
      %v1487 = vunpack.c.l.b16 %v1483
      %v1488 = vpack.c.b16 %v1487, %v1486
      %v1490 = vsel %vm680, %v1488, 0
      %1492 = vmatprep.subr.bf16.mxu0 0
      %1493 = vmatpush1.bf16.msra.mxu0 %v669
      %1494 = vmatprep.subr.bf16.mxu0 0
      %1495 = vmatpush1.bf16.msra.mxu0 %v670
      %1496 = vmatprep.subr.bf16.mxu0 0
      %1497 = vmatpush1.bf16.msra.mxu0 %v671
      %1498 = vmatprep.subr.bf16.mxu0 0
      %1499 = vmatpush1.bf16.msra.mxu0 %v672
      %1500 = vmatprep.subr.bf16.mxu0 0
      %1501 = vmatpush1.bf16.msra.mxu0 0
      %1502 = vmatprep.subr.bf16.mxu0 0
      %1503 = vmatpush1.bf16.msra.mxu0 0
      %1504 = vmatprep.subr.bf16.mxu0 0
      %1505 = vmatpush1.bf16.msra.mxu0 0
      %1506 = vmatprep.subr.bf16.mxu0 0
      %1507 = vmatpush1.bf16.msra.mxu0 0
      %1508 = vmatprep.subr.bf16.mxu0 0
      %1509 = vmatpush1.bf16.msra.mxu0 0
      %1510 = vmatprep.subr.bf16.mxu0 0
      %1511 = vmatpush1.bf16.msra.mxu0 0
      %1512 = vmatprep.subr.bf16.mxu0 0
      %1513 = vmatpush1.bf16.msra.mxu0 0
      %1514 = vmatprep.subr.bf16.mxu0 0
      %1515 = vmatpush1.bf16.msra.mxu0 0
      %1516 = vmatprep.subr.bf16.mxu0 0
      %1517 = vmatpush1.bf16.msra.mxu0 0
      %1518 = vmatprep.subr.bf16.mxu0 0
      %1519 = vmatpush1.bf16.msra.mxu0 0
      %1520 = vmatprep.subr.bf16.mxu0 0
      %1521 = vmatpush1.bf16.msra.mxu0 0
      %1522 = vmatprep.subr.bf16.mxu0 0
      %1523 = vmatpush1.bf16.msra.mxu0 0
      %1524 = vmatprep.mubr.bf16.mxu0 0
      %1525 = vmatmul.mubr.bf16.gmra.mrb[0].mxu0 %v1490
      %v1526 = vpop.f32.mrb[0].mxu0
      %v1527 = vadd.f32 0.0, %v1526
      %v1528 = vpop.f32.mrb[0].mxu0
      %v1529 = vpop.f32.mrb[0].mxu0
      %v1530 = vadd.f32 0.0, %v1529
      %v1531 = vpop.f32.mrb[0].mxu0
      %1532 = vdwg.mxu0
      %v1533 = vpack.c.bf16 %v1530, %v1527
      %s1534 = scalar_lea.vmem %s4, 112
      %v1535 = vld [vmem:[%s1534] sm:$0xf]
      %v1536 = vld [vmem:[%s1534 + $0x4] sm:$0xf]
      %v1537 = vld [vmem:[%s1534 + $0x8] sm:$0xf]
      %v1538 = vld [vmem:[%s1534 + $0xc] sm:$0xf]
      %v1543 = vunpack.c.l.b16 %v1535
      %v1544 = vunpack.c.l.b16 %v1536
      %v1545 = vunpack.c.l.b16 %v1537
      %v1546 = vunpack.c.l.b16 %v1538
      %v1547 = vpack.c.b16 %v1544, %v1543
      %v1548 = vpack.c.b16 %v1546, %v1545
      %v1552 = vsel %vm800, %v1533, 0
      %1554 = vmatprep.subr.bf16.mxu0 0
      %1555 = vmatpush1.bf16.msra.mxu0 %v1547
      %1556 = vmatprep.subr.bf16.mxu0 0
      %1557 = vmatpush1.bf16.msra.mxu0 %v1548
      %1558 = vmatprep.subr.bf16.mxu0 0
      %1559 = vmatpush1.bf16.msra.mxu0 0
      %1560 = vmatprep.subr.bf16.mxu0 0
      %1561 = vmatpush1.bf16.msra.mxu0 0
      %1562 = vmatprep.subr.bf16.mxu0 0
      %1563 = vmatpush1.bf16.msra.mxu0 0
      %1564 = vmatprep.subr.bf16.mxu0 0
      %1565 = vmatpush1.bf16.msra.mxu0 0
      %1566 = vmatprep.subr.bf16.mxu0 0
      %1567 = vmatpush1.bf16.msra.mxu0 0
      %1568 = vmatprep.subr.bf16.mxu0 0
      %1569 = vmatpush1.bf16.msra.mxu0 0
      %1570 = vmatprep.subr.bf16.mxu0 0
      %1571 = vmatpush1.bf16.msra.mxu0 0
      %1572 = vmatprep.subr.bf16.mxu0 0
      %1573 = vmatpush1.bf16.msra.mxu0 0
      %1574 = vmatprep.subr.bf16.mxu0 0
      %1575 = vmatpush1.bf16.msra.mxu0 0
      %1576 = vmatprep.subr.bf16.mxu0 0
      %1577 = vmatpush1.bf16.msra.mxu0 0
      %1578 = vmatprep.subr.bf16.mxu0 0
      %1579 = vmatpush1.bf16.msra.mxu0 0
      %1580 = vmatprep.subr.bf16.mxu0 0
      %1581 = vmatpush1.bf16.msra.mxu0 0
      %1582 = vmatprep.subr.bf16.mxu0 0
      %1583 = vmatpush1.bf16.msra.mxu0 0
      %1584 = vmatprep.subr.bf16.mxu0 0
      %1585 = vmatpush1.bf16.msra.mxu0 0
      %1586 = vmatprep.mubr.bf16.mxu0 0
      %1587 = vmatmul.mubr.bf16.gmra.mrb[0].mxu0 %v1552
      %v1588 = vpop.f32.mrb[0].mxu0
      %v1589 = vadd.f32 0.0, %v1588
      %v1590 = vpop.f32.mrb[0].mxu0
      %v1591 = vpop.f32.mrb[0].mxu0
      %v1592 = vadd.f32 0.0, %v1591
      %v1593 = vpop.f32.mrb[0].mxu0
      %1594 = vdwg.mxu0
      %v1595 = vadd.f32 %v1479, %v1589
      %v1596 = vadd.f32 %v1480, %v1592
      %s1597 = scalar_lea.vmem %s3, 64
      %v1598 = vld [vmem:[%s1597] sm:$0xf]
      %v1599 = vld [vmem:[%s1597 + $0x4] sm:$0x1]
      %v1602 = vunpack.c.l.b16 %v1598
      %v1603 = vunpack.c.l.b16 %v1599
      %v1604 = vpack.c.b16 %v1603, %v1602
      %v1606 = vsel %vm680, %v1604, 0
      %1608 = vmatprep.subr.bf16.mxu0 0
      %1609 = vmatpush1.bf16.msra.mxu0 %v669
      %1610 = vmatprep.subr.bf16.mxu0 0
      %1611 = vmatpush1.bf16.msra.mxu0 %v670
      %1612 = vmatprep.subr.bf16.mxu0 0
      %1613 = vmatpush1.bf16.msra.mxu0 %v671
      %1614 = vmatprep.subr.bf16.mxu0 0
      %1615 = vmatpush1.bf16.msra.mxu0 %v672
      %1616 = vmatprep.subr.bf16.mxu0 0
      %1617 = vmatpush1.bf16.msra.mxu0 0
      %1618 = vmatprep.subr.bf16.mxu0 0
      %1619 = vmatpush1.bf16.msra.mxu0 0
      %1620 = vmatprep.subr.bf16.mxu0 0
      %1621 = vmatpush1.bf16.msra.mxu0 0
      %1622 = vmatprep.subr.bf16.mxu0 0
      %1623 = vmatpush1.bf16.msra.mxu0 0
      %1624 = vmatprep.subr.bf16.mxu0 0
      %1625 = vmatpush1.bf16.msra.mxu0 0
      %1626 = vmatprep.subr.bf16.mxu0 0
      %1627 = vmatpush1.bf16.msra.mxu0 0
      %1628 = vmatprep.subr.bf16.mxu0 0
      %1629 = vmatpush1.bf16.msra.mxu0 0
      %1630 = vmatprep.subr.bf16.mxu0 0
      %1631 = vmatpush1.bf16.msra.mxu0 0
      %1632 = vmatprep.subr.bf16.mxu0 0
      %1633 = vmatpush1.bf16.msra.mxu0 0
      %1634 = vmatprep.subr.bf16.mxu0 0
      %1635 = vmatpush1.bf16.msra.mxu0 0
      %1636 = vmatprep.subr.bf16.mxu0 0
      %1637 = vmatpush1.bf16.msra.mxu0 0
      %1638 = vmatprep.subr.bf16.mxu0 0
      %1639 = vmatpush1.bf16.msra.mxu0 0
      %1640 = vmatprep.mubr.bf16.mxu0 0
      %1641 = vmatmul.mubr.bf16.gmra.mrb[0].mxu0 %v1606
      %v1642 = vpop.f32.mrb[0].mxu0
      %v1643 = vadd.f32 0.0, %v1642
      %v1644 = vpop.f32.mrb[0].mxu0
      %v1645 = vpop.f32.mrb[0].mxu0
      %v1646 = vadd.f32 0.0, %v1645
      %v1647 = vpop.f32.mrb[0].mxu0
      %1648 = vdwg.mxu0
      %v1649 = vpack.c.bf16 %v1646, %v1643
      %s1650 = scalar_lea.vmem %s4, 128
      %v1651 = vld [vmem:[%s1650] sm:$0xf]
      %v1652 = vld [vmem:[%s1650 + $0x4] sm:$0xf]
      %v1653 = vld [vmem:[%s1650 + $0x8] sm:$0xf]
      %v1654 = vld [vmem:[%s1650 + $0xc] sm:$0xf]
      %v1659 = vunpack.c.l.b16 %v1651
      %v1660 = vunpack.c.l.b16 %v1652
      %v1661 = vunpack.c.l.b16 %v1653
      %v1662 = vunpack.c.l.b16 %v1654
      %v1663 = vpack.c.b16 %v1660, %v1659
      %v1664 = vpack.c.b16 %v1662, %v1661
      %v1668 = vsel %vm800, %v1649, 0
      %1670 = vmatprep.subr.bf16.mxu0 0
      %1671 = vmatpush1.bf16.msra.mxu0 %v1663
      %1672 = vmatprep.subr.bf16.mxu0 0
      %1673 = vmatpush1.bf16.msra.mxu0 %v1664
      %1674 = vmatprep.subr.bf16.mxu0 0
      %1675 = vmatpush1.bf16.msra.mxu0 0
      %1676 = vmatprep.subr.bf16.mxu0 0
      %1677 = vmatpush1.bf16.msra.mxu0 0
      %1678 = vmatprep.subr.bf16.mxu0 0
      %1679 = vmatpush1.bf16.msra.mxu0 0
      %1680 = vmatprep.subr.bf16.mxu0 0
      %1681 = vmatpush1.bf16.msra.mxu0 0
      %1682 = vmatprep.subr.bf16.mxu0 0
      %1683 = vmatpush1.bf16.msra.mxu0 0
      %1684 = vmatprep.subr.bf16.mxu0 0
      %1685 = vmatpush1.bf16.msra.mxu0 0
      %1686 = vmatprep.subr.bf16.mxu0 0
      %1687 = vmatpush1.bf16.msra.mxu0 0
      %1688 = vmatprep.subr.bf16.mxu0 0
      %1689 = vmatpush1.bf16.msra.mxu0 0
      %1690 = vmatprep.subr.bf16.mxu0 0
      %1691 = vmatpush1.bf16.msra.mxu0 0
      %1692 = vmatprep.subr.bf16.mxu0 0
      %1693 = vmatpush1.bf16.msra.mxu0 0
      %1694 = vmatprep.subr.bf16.mxu0 0
      %1695 = vmatpush1.bf16.msra.mxu0 0
      %1696 = vmatprep.subr.bf16.mxu0 0
      %1697 = vmatpush1.bf16.msra.mxu0 0
      %1698 = vmatprep.subr.bf16.mxu0 0
      %1699 = vmatpush1.bf16.msra.mxu0 0
      %1700 = vmatprep.subr.bf16.mxu0 0
      %1701 = vmatpush1.bf16.msra.mxu0 0
      %1702 = vmatprep.mubr.bf16.mxu0 0
      %1703 = vmatmul.mubr.bf16.gmra.mrb[0].mxu0 %v1668
      %v1704 = vpop.f32.mrb[0].mxu0
      %v1705 = vadd.f32 0.0, %v1704
      %v1706 = vpop.f32.mrb[0].mxu0
      %v1707 = vpop.f32.mrb[0].mxu0
      %v1708 = vadd.f32 0.0, %v1707
      %v1709 = vpop.f32.mrb[0].mxu0
      %1710 = vdwg.mxu0
      %v1711 = vadd.f32 %v1595, %v1705
      %v1712 = vadd.f32 %v1596, %v1708
      %s1713 = scalar_lea.vmem %s3, 72
      %v1714 = vld [vmem:[%s1713] sm:$0xf]
      %v1715 = vld [vmem:[%s1713 + $0x4] sm:$0x1]
      %v1718 = vunpack.c.l.b16 %v1714
      %v1719 = vunpack.c.l.b16 %v1715
      %v1720 = vpack.c.b16 %v1719, %v1718
      %v1722 = vsel %vm680, %v1720, 0
      %1724 = vmatprep.subr.bf16.mxu0 0
      %1725 = vmatpush1.bf16.msra.mxu0 %v669
      %1726 = vmatprep.subr.bf16.mxu0 0
      %1727 = vmatpush1.bf16.msra.mxu0 %v670
      %1728 = vmatprep.subr.bf16.mxu0 0
      %1729 = vmatpush1.bf16.msra.mxu0 %v671
      %1730 = vmatprep.subr.bf16.mxu0 0
      %1731 = vmatpush1.bf16.msra.mxu0 %v672
      %1732 = vmatprep.subr.bf16.mxu0 0
      %1733 = vmatpush1.bf16.msra.mxu0 0
      %1734 = vmatprep.subr.bf16.mxu0 0
      %1735 = vmatpush1.bf16.msra.mxu0 0
      %1736 = vmatprep.subr.bf16.mxu0 0
      %1737 = vmatpush1.bf16.msra.mxu0 0
      %1738 = vmatprep.subr.bf16.mxu0 0
      %1739 = vmatpush1.bf16.msra.mxu0 0
      %1740 = vmatprep.subr.bf16.mxu0 0
      %1741 = vmatpush1.bf16.msra.mxu0 0
      %1742 = vmatprep.subr.bf16.mxu0 0
      %1743 = vmatpush1.bf16.msra.mxu0 0
      %1744 = vmatprep.subr.bf16.mxu0 0
      %1745 = vmatpush1.bf16.msra.mxu0 0
      %1746 = vmatprep.subr.bf16.mxu0 0
      %1747 = vmatpush1.bf16.msra.mxu0 0
      %1748 = vmatprep.subr.bf16.mxu0 0
      %1749 = vmatpush1.bf16.msra.mxu0 0
      %1750 = vmatprep.subr.bf16.mxu0 0
      %1751 = vmatpush1.bf16.msra.mxu0 0
      %1752 = vmatprep.subr.bf16.mxu0 0
      %1753 = vmatpush1.bf16.msra.mxu0 0
      %1754 = vmatprep.subr.bf16.mxu0 0
      %1755 = vmatpush1.bf16.msra.mxu0 0
      %1756 = vmatprep.mubr.bf16.mxu0 0
      %1757 = vmatmul.mubr.bf16.gmra.mrb[0].mxu0 %v1722
      %v1758 = vpop.f32.mrb[0].mxu0
      %v1759 = vadd.f32 0.0, %v1758
      %v1760 = vpop.f32.mrb[0].mxu0
      %v1761 = vpop.f32.mrb[0].mxu0
      %v1762 = vadd.f32 0.0, %v1761
      %v1763 = vpop.f32.mrb[0].mxu0
      %1764 = vdwg.mxu0
      %v1765 = vpack.c.bf16 %v1762, %v1759
      %s1766 = scalar_lea.vmem %s4, 144
      %v1767 = vld [vmem:[%s1766] sm:$0xf]
      %v1768 = vld [vmem:[%s1766 + $0x4] sm:$0xf]
      %v1769 = vld [vmem:[%s1766 + $0x8] sm:$0xf]
      %v1770 = vld [vmem:[%s1766 + $0xc] sm:$0xf]
      %v1775 = vunpack.c.l.b16 %v1767
      %v1776 = vunpack.c.l.b16 %v1768
      %v1777 = vunpack.c.l.b16 %v1769
      %v1778 = vunpack.c.l.b16 %v1770
      %v1779 = vpack.c.b16 %v1776, %v1775
      %v1780 = vpack.c.b16 %v1778, %v1777
      %v1784 = vsel %vm800, %v1765, 0
      %1786 = vmatprep.subr.bf16.mxu0 0
      %1787 = vmatpush1.bf16.msra.mxu0 %v1779
      %1788 = vmatprep.subr.bf16.mxu0 0
      %1789 = vmatpush1.bf16.msra.mxu0 %v1780
      %1790 = vmatprep.subr.bf16.mxu0 0
      %1791 = vmatpush1.bf16.msra.mxu0 0
      %1792 = vmatprep.subr.bf16.mxu0 0
      %1793 = vmatpush1.bf16.msra.mxu0 0
      %1794 = vmatprep.subr.bf16.mxu0 0
      %1795 = vmatpush1.bf16.msra.mxu0 0
      %1796 = vmatprep.subr.bf16.mxu0 0
      %1797 = vmatpush1.bf16.msra.mxu0 0
      %1798 = vmatprep.subr.bf16.mxu0 0
      %1799 = vmatpush1.bf16.msra.mxu0 0
      %1800 = vmatprep.subr.bf16.mxu0 0
      %1801 = vmatpush1.bf16.msra.mxu0 0
      %1802 = vmatprep.subr.bf16.mxu0 0
      %1803 = vmatpush1.bf16.msra.mxu0 0
      %1804 = vmatprep.subr.bf16.mxu0 0
      %1805 = vmatpush1.bf16.msra.mxu0 0
      %1806 = vmatprep.subr.bf16.mxu0 0
      %1807 = vmatpush1.bf16.msra.mxu0 0
      %1808 = vmatprep.subr.bf16.mxu0 0
      %1809 = vmatpush1.bf16.msra.mxu0 0
      %1810 = vmatprep.subr.bf16.mxu0 0
      %1811 = vmatpush1.bf16.msra.mxu0 0
      %1812 = vmatprep.subr.bf16.mxu0 0
      %1813 = vmatpush1.bf16.msra.mxu0 0
      %1814 = vmatprep.subr.bf16.mxu0 0
      %1815 = vmatpush1.bf16.msra.mxu0 0
      %1816 = vmatprep.subr.bf16.mxu0 0
      %1817 = vmatpush1.bf16.msra.mxu0 0
      %1818 = vmatprep.mubr.bf16.mxu0 0
      %1819 = vmatmul.mubr.bf16.gmra.mrb[0].mxu0 %v1784
      %v1820 = vpop.f32.mrb[0].mxu0
      %v1821 = vadd.f32 0.0, %v1820
      %v1822 = vpop.f32.mrb[0].mxu0
      %v1823 = vpop.f32.mrb[0].mxu0
      %v1824 = vadd.f32 0.0, %v1823
      %v1825 = vpop.f32.mrb[0].mxu0
      %1826 = vdwg.mxu0
      %v1827 = vadd.f32 %v1711, %v1821
      %v1828 = vadd.f32 %v1712, %v1824
      %s1829 = scalar_lea.vmem %s3, 80
      %v1830 = vld [vmem:[%s1829] sm:$0xf]
      %v1831 = vld [vmem:[%s1829 + $0x4] sm:$0x1]
      %v1834 = vunpack.c.l.b16 %v1830
      %v1835 = vunpack.c.l.b16 %v1831
      %v1836 = vpack.c.b16 %v1835, %v1834
      %v1838 = vsel %vm680, %v1836, 0
      %1840 = vmatprep.subr.bf16.mxu0 0
      %1841 = vmatpush1.bf16.msra.mxu0 %v669
      %1842 = vmatprep.subr.bf16.mxu0 0
      %1843 = vmatpush1.bf16.msra.mxu0 %v670
      %1844 = vmatprep.subr.bf16.mxu0 0
      %1845 = vmatpush1.bf16.msra.mxu0 %v671
      %1846 = vmatprep.subr.bf16.mxu0 0
      %1847 = vmatpush1.bf16.msra.mxu0 %v672
      %1848 = vmatprep.subr.bf16.mxu0 0
      %1849 = vmatpush1.bf16.msra.mxu0 0
      %1850 = vmatprep.subr.bf16.mxu0 0
      %1851 = vmatpush1.bf16.msra.mxu0 0
      %1852 = vmatprep.subr.bf16.mxu0 0
      %1853 = vmatpush1.bf16.msra.mxu0 0
      %1854 = vmatprep.subr.bf16.mxu0 0
      %1855 = vmatpush1.bf16.msra.mxu0 0
      %1856 = vmatprep.subr.bf16.mxu0 0
      %1857 = vmatpush1.bf16.msra.mxu0 0
      %1858 = vmatprep.subr.bf16.mxu0 0
      %1859 = vmatpush1.bf16.msra.mxu0 0
      %1860 = vmatprep.subr.bf16.mxu0 0
      %1861 = vmatpush1.bf16.msra.mxu0 0
      %1862 = vmatprep.subr.bf16.mxu0 0
      %1863 = vmatpush1.bf16.msra.mxu0 0
      %1864 = vmatprep.subr.bf16.mxu0 0
      %1865 = vmatpush1.bf16.msra.mxu0 0
      %1866 = vmatprep.subr.bf16.mxu0 0
      %1867 = vmatpush1.bf16.msra.mxu0 0
      %1868 = vmatprep.subr.bf16.mxu0 0
      %1869 = vmatpush1.bf16.msra.mxu0 0
      %1870 = vmatprep.subr.bf16.mxu0 0
      %1871 = vmatpush1.bf16.msra.mxu0 0
      %1872 = vmatprep.mubr.bf16.mxu0 0
      %1873 = vmatmul.mubr.bf16.gmra.mrb[0].mxu0 %v1838
      %v1874 = vpop.f32.mrb[0].mxu0
      %v1875 = vadd.f32 0.0, %v1874
      %v1876 = vpop.f32.mrb[0].mxu0
      %v1877 = vpop.f32.mrb[0].mxu0
      %v1878 = vadd.f32 0.0, %v1877
      %v1879 = vpop.f32.mrb[0].mxu0
      %1880 = vdwg.mxu0
      %v1881 = vpack.c.bf16 %v1878, %v1875
      %s1882 = scalar_lea.vmem %s4, 160
      %v1883 = vld [vmem:[%s1882] sm:$0xf]
      %v1884 = vld [vmem:[%s1882 + $0x4] sm:$0xf]
      %v1885 = vld [vmem:[%s1882 + $0x8] sm:$0xf]
      %v1886 = vld [vmem:[%s1882 + $0xc] sm:$0xf]
      %v1891 = vunpack.c.l.b16 %v1883
      %v1892 = vunpack.c.l.b16 %v1884
      %v1893 = vunpack.c.l.b16 %v1885
      %v1894 = vunpack.c.l.b16 %v1886
      %v1895 = vpack.c.b16 %v1892, %v1891
      %v1896 = vpack.c.b16 %v1894, %v1893
      %v1900 = vsel %vm800, %v1881, 0
      %1902 = vmatprep.subr.bf16.mxu0 0
      %1903 = vmatpush1.bf16.msra.mxu0 %v1895
      %1904 = vmatprep.subr.bf16.mxu0 0
      %1905 = vmatpush1.bf16.msra.mxu0 %v1896
      %1906 = vmatprep.subr.bf16.mxu0 0
      %1907 = vmatpush1.bf16.msra.mxu0 0
      %1908 = vmatprep.subr.bf16.mxu0 0
      %1909 = vmatpush1.bf16.msra.mxu0 0
      %1910 = vmatprep.subr.bf16.mxu0 0
      %1911 = vmatpush1.bf16.msra.mxu0 0
      %1912 = vmatprep.subr.bf16.mxu0 0
      %1913 = vmatpush1.bf16.msra.mxu0 0
      %1914 = vmatprep.subr.bf16.mxu0 0
      %1915 = vmatpush1.bf16.msra.mxu0 0
      %1916 = vmatprep.subr.bf16.mxu0 0
      %1917 = vmatpush1.bf16.msra.mxu0 0
      %1918 = vmatprep.subr.bf16.mxu0 0
      %1919 = vmatpush1.bf16.msra.mxu0 0
      %1920 = vmatprep.subr.bf16.mxu0 0
      %1921 = vmatpush1.bf16.msra.mxu0 0
      %1922 = vmatprep.subr.bf16.mxu0 0
      %1923 = vmatpush1.bf16.msra.mxu0 0
      %1924 = vmatprep.subr.bf16.mxu0 0
      %1925 = vmatpush1.bf16.msra.mxu0 0
      %1926 = vmatprep.subr.bf16.mxu0 0
      %1927 = vmatpush1.bf16.msra.mxu0 0
      %1928 = vmatprep.subr.bf16.mxu0 0
      %1929 = vmatpush1.bf16.msra.mxu0 0
      %1930 = vmatprep.subr.bf16.mxu0 0
      %1931 = vmatpush1.bf16.msra.mxu0 0
      %1932 = vmatprep.subr.bf16.mxu0 0
      %1933 = vmatpush1.bf16.msra.mxu0 0
      %1934 = vmatprep.mubr.bf16.mxu0 0
      %1935 = vmatmul.mubr.bf16.gmra.mrb[0].mxu0 %v1900
      %v1936 = vpop.f32.mrb[0].mxu0
      %v1937 = vadd.f32 0.0, %v1936
      %v1938 = vpop.f32.mrb[0].mxu0
      %v1939 = vpop.f32.mrb[0].mxu0
      %v1940 = vadd.f32 0.0, %v1939
      %v1941 = vpop.f32.mrb[0].mxu0
      %1942 = vdwg.mxu0
      %v1943 = vadd.f32 %v1827, %v1937
      %v1944 = vadd.f32 %v1828, %v1940
      %s1945 = scalar_lea.vmem %s3, 88
      %v1946 = vld [vmem:[%s1945] sm:$0xf]
      %v1947 = vld [vmem:[%s1945 + $0x4] sm:$0x1]
      %v1950 = vunpack.c.l.b16 %v1946
      %v1951 = vunpack.c.l.b16 %v1947
      %v1952 = vpack.c.b16 %v1951, %v1950
      %v1954 = vsel %vm680, %v1952, 0
      %1956 = vmatprep.subr.bf16.mxu0 0
      %1957 = vmatpush1.bf16.msra.mxu0 %v669
      %1958 = vmatprep.subr.bf16.mxu0 0
      %1959 = vmatpush1.bf16.msra.mxu0 %v670
      %1960 = vmatprep.subr.bf16.mxu0 0
      %1961 = vmatpush1.bf16.msra.mxu0 %v671
      %1962 = vmatprep.subr.bf16.mxu0 0
      %1963 = vmatpush1.bf16.msra.mxu0 %v672
      %1964 = vmatprep.subr.bf16.mxu0 0
      %1965 = vmatpush1.bf16.msra.mxu0 0
      %1966 = vmatprep.subr.bf16.mxu0 0
      %1967 = vmatpush1.bf16.msra.mxu0 0
      %1968 = vmatprep.subr.bf16.mxu0 0
      %1969 = vmatpush1.bf16.msra.mxu0 0
      %1970 = vmatprep.subr.bf16.mxu0 0
      %1971 = vmatpush1.bf16.msra.mxu0 0
      %1972 = vmatprep.subr.bf16.mxu0 0
      %1973 = vmatpush1.bf16.msra.mxu0 0
      %1974 = vmatprep.subr.bf16.mxu0 0
      %1975 = vmatpush1.bf16.msra.mxu0 0
      %1976 = vmatprep.subr.bf16.mxu0 0
      %1977 = vmatpush1.bf16.msra.mxu0 0
      %1978 = vmatprep.subr.bf16.mxu0 0
      %1979 = vmatpush1.bf16.msra.mxu0 0
      %1980 = vmatprep.subr.bf16.mxu0 0
      %1981 = vmatpush1.bf16.msra.mxu0 0
      %1982 = vmatprep.subr.bf16.mxu0 0
      %1983 = vmatpush1.bf16.msra.mxu0 0
      %1984 = vmatprep.subr.bf16.mxu0 0
      %1985 = vmatpush1.bf16.msra.mxu0 0
      %1986 = vmatprep.subr.bf16.mxu0 0
      %1987 = vmatpush1.bf16.msra.mxu0 0
      %1988 = vmatprep.mubr.bf16.mxu0 0
      %1989 = vmatmul.mubr.bf16.gmra.mrb[0].mxu0 %v1954
      %v1990 = vpop.f32.mrb[0].mxu0
      %v1991 = vadd.f32 0.0, %v1990
      %v1992 = vpop.f32.mrb[0].mxu0
      %v1993 = vpop.f32.mrb[0].mxu0
      %v1994 = vadd.f32 0.0, %v1993
      %v1995 = vpop.f32.mrb[0].mxu0
      %1996 = vdwg.mxu0
      %v1997 = vpack.c.bf16 %v1994, %v1991
      %s1998 = scalar_lea.vmem %s4, 176
      %v1999 = vld [vmem:[%s1998] sm:$0xf]
      %v2000 = vld [vmem:[%s1998 + $0x4] sm:$0xf]
      %v2001 = vld [vmem:[%s1998 + $0x8] sm:$0xf]
      %v2002 = vld [vmem:[%s1998 + $0xc] sm:$0xf]
      %v2007 = vunpack.c.l.b16 %v1999
      %v2008 = vunpack.c.l.b16 %v2000
      %v2009 = vunpack.c.l.b16 %v2001
      %v2010 = vunpack.c.l.b16 %v2002
      %v2011 = vpack.c.b16 %v2008, %v2007
      %v2012 = vpack.c.b16 %v2010, %v2009
      %v2016 = vsel %vm800, %v1997, 0
      %2018 = vmatprep.subr.bf16.mxu0 0
      %2019 = vmatpush1.bf16.msra.mxu0 %v2011
      %2020 = vmatprep.subr.bf16.mxu0 0
      %2021 = vmatpush1.bf16.msra.mxu0 %v2012
      %2022 = vmatprep.subr.bf16.mxu0 0
      %2023 = vmatpush1.bf16.msra.mxu0 0
      %2024 = vmatprep.subr.bf16.mxu0 0
      %2025 = vmatpush1.bf16.msra.mxu0 0
      %2026 = vmatprep.subr.bf16.mxu0 0
      %2027 = vmatpush1.bf16.msra.mxu0 0
      %2028 = vmatprep.subr.bf16.mxu0 0
      %2029 = vmatpush1.bf16.msra.mxu0 0
      %2030 = vmatprep.subr.bf16.mxu0 0
      %2031 = vmatpush1.bf16.msra.mxu0 0
      %2032 = vmatprep.subr.bf16.mxu0 0
      %2033 = vmatpush1.bf16.msra.mxu0 0
      %2034 = vmatprep.subr.bf16.mxu0 0
      %2035 = vmatpush1.bf16.msra.mxu0 0
      %2036 = vmatprep.subr.bf16.mxu0 0
      %2037 = vmatpush1.bf16.msra.mxu0 0
      %2038 = vmatprep.subr.bf16.mxu0 0
      %2039 = vmatpush1.bf16.msra.mxu0 0
      %2040 = vmatprep.subr.bf16.mxu0 0
      %2041 = vmatpush1.bf16.msra.mxu0 0
      %2042 = vmatprep.subr.bf16.mxu0 0
      %2043 = vmatpush1.bf16.msra.mxu0 0
      %2044 = vmatprep.subr.bf16.mxu0 0
      %2045 = vmatpush1.bf16.msra.mxu0 0
      %2046 = vmatprep.subr.bf16.mxu0 0
      %2047 = vmatpush1.bf16.msra.mxu0 0
      %2048 = vmatprep.subr.bf16.mxu0 0
      %2049 = vmatpush1.bf16.msra.mxu0 0
      %2050 = vmatprep.mubr.bf16.mxu0 0
      %2051 = vmatmul.mubr.bf16.gmra.mrb[0].mxu0 %v2016
      %v2052 = vpop.f32.mrb[0].mxu0
      %v2053 = vadd.f32 0.0, %v2052
      %v2054 = vpop.f32.mrb[0].mxu0
      %v2055 = vpop.f32.mrb[0].mxu0
      %v2056 = vadd.f32 0.0, %v2055
      %v2057 = vpop.f32.mrb[0].mxu0
      %2058 = vdwg.mxu0
      %v2059 = vadd.f32 %v1943, %v2053
      %v2060 = vadd.f32 %v1944, %v2056
      %s2061 = scalar_lea.vmem %s3, 96
      %v2062 = vld [vmem:[%s2061] sm:$0xf]
      %v2063 = vld [vmem:[%s2061 + $0x4] sm:$0x1]
      %v2066 = vunpack.c.l.b16 %v2062
      %v2067 = vunpack.c.l.b16 %v2063
      %v2068 = vpack.c.b16 %v2067, %v2066
      %v2070 = vsel %vm680, %v2068, 0
      %2072 = vmatprep.subr.bf16.mxu0 0
      %2073 = vmatpush1.bf16.msra.mxu0 %v669
      %2074 = vmatprep.subr.bf16.mxu0 0
      %2075 = vmatpush1.bf16.msra.mxu0 %v670
      %2076 = vmatprep.subr.bf16.mxu0 0
      %2077 = vmatpush1.bf16.msra.mxu0 %v671
      %2078 = vmatprep.subr.bf16.mxu0 0
      %2079 = vmatpush1.bf16.msra.mxu0 %v672
      %2080 = vmatprep.subr.bf16.mxu0 0
      %2081 = vmatpush1.bf16.msra.mxu0 0
      %2082 = vmatprep.subr.bf16.mxu0 0
      %2083 = vmatpush1.bf16.msra.mxu0 0
      %2084 = vmatprep.subr.bf16.mxu0 0
      %2085 = vmatpush1.bf16.msra.mxu0 0
      %2086 = vmatprep.subr.bf16.mxu0 0
      %2087 = vmatpush1.bf16.msra.mxu0 0
      %2088 = vmatprep.subr.bf16.mxu0 0
      %2089 = vmatpush1.bf16.msra.mxu0 0
      %2090 = vmatprep.subr.bf16.mxu0 0
      %2091 = vmatpush1.bf16.msra.mxu0 0
      %2092 = vmatprep.subr.bf16.mxu0 0
      %2093 = vmatpush1.bf16.msra.mxu0 0
      %2094 = vmatprep.subr.bf16.mxu0 0
      %2095 = vmatpush1.bf16.msra.mxu0 0
      %2096 = vmatprep.subr.bf16.mxu0 0
      %2097 = vmatpush1.bf16.msra.mxu0 0
      %2098 = vmatprep.subr.bf16.mxu0 0
      %2099 = vmatpush1.bf16.msra.mxu0 0
      %2100 = vmatprep.subr.bf16.mxu0 0
      %2101 = vmatpush1.bf16.msra.mxu0 0
      %2102 = vmatprep.subr.bf16.mxu0 0
      %2103 = vmatpush1.bf16.msra.mxu0 0
      %2104 = vmatprep.mubr.bf16.mxu0 0
      %2105 = vmatmul.mubr.bf16.gmra.mrb[0].mxu0 %v2070
      %v2106 = vpop.f32.mrb[0].mxu0
      %v2107 = vadd.f32 0.0, %v2106
      %v2108 = vpop.f32.mrb[0].mxu0
      %v2109 = vpop.f32.mrb[0].mxu0
      %v2110 = vadd.f32 0.0, %v2109
      %v2111 = vpop.f32.mrb[0].mxu0
      %2112 = vdwg.mxu0
      %v2113 = vpack.c.bf16 %v2110, %v2107
      %s2114 = scalar_lea.vmem %s4, 192
      %v2115 = vld [vmem:[%s2114] sm:$0xf]
      %v2116 = vld [vmem:[%s2114 + $0x4] sm:$0xf]
      %v2117 = vld [vmem:[%s2114 + $0x8] sm:$0xf]
      %v2118 = vld [vmem:[%s2114 + $0xc] sm:$0xf]
      %v2123 = vunpack.c.l.b16 %v2115
      %v2124 = vunpack.c.l.b16 %v2116
      %v2125 = vunpack.c.l.b16 %v2117
      %v2126 = vunpack.c.l.b16 %v2118
      %v2127 = vpack.c.b16 %v2124, %v2123
      %v2128 = vpack.c.b16 %v2126, %v2125
      %v2132 = vsel %vm800, %v2113, 0
      %2134 = vmatprep.subr.bf16.mxu0 0
      %2135 = vmatpush1.bf16.msra.mxu0 %v2127
      %2136 = vmatprep.subr.bf16.mxu0 0
      %2137 = vmatpush1.bf16.msra.mxu0 %v2128
      %2138 = vmatprep.subr.bf16.mxu0 0
      %2139 = vmatpush1.bf16.msra.mxu0 0
      %2140 = vmatprep.subr.bf16.mxu0 0
      %2141 = vmatpush1.bf16.msra.mxu0 0
      %2142 = vmatprep.subr.bf16.mxu0 0
      %2143 = vmatpush1.bf16.msra.mxu0 0
      %2144 = vmatprep.subr.bf16.mxu0 0
      %2145 = vmatpush1.bf16.msra.mxu0 0
      %2146 = vmatprep.subr.bf16.mxu0 0
      %2147 = vmatpush1.bf16.msra.mxu0 0
      %2148 = vmatprep.subr.bf16.mxu0 0
      %2149 = vmatpush1.bf16.msra.mxu0 0
      %2150 = vmatprep.subr.bf16.mxu0 0
      %2151 = vmatpush1.bf16.msra.mxu0 0
      %2152 = vmatprep.subr.bf16.mxu0 0
      %2153 = vmatpush1.bf16.msra.mxu0 0
      %2154 = vmatprep.subr.bf16.mxu0 0
      %2155 = vmatpush1.bf16.msra.mxu0 0
      %2156 = vmatprep.subr.bf16.mxu0 0
      %2157 = vmatpush1.bf16.msra.mxu0 0
      %2158 = vmatprep.subr.bf16.mxu0 0
      %2159 = vmatpush1.bf16.msra.mxu0 0
      %2160 = vmatprep.subr.bf16.mxu0 0
      %2161 = vmatpush1.bf16.msra.mxu0 0
      %2162 = vmatprep.subr.bf16.mxu0 0
      %2163 = vmatpush1.bf16.msra.mxu0 0
      %2164 = vmatprep.subr.bf16.mxu0 0
      %2165 = vmatpush1.bf16.msra.mxu0 0
      %2166 = vmatprep.mubr.bf16.mxu0 0
      %2167 = vmatmul.mubr.bf16.gmra.mrb[0].mxu0 %v2132
      %v2168 = vpop.f32.mrb[0].mxu0
      %v2169 = vadd.f32 0.0, %v2168
      %v2170 = vpop.f32.mrb[0].mxu0
      %v2171 = vpop.f32.mrb[0].mxu0
      %v2172 = vadd.f32 0.0, %v2171
      %v2173 = vpop.f32.mrb[0].mxu0
      %2174 = vdwg.mxu0
      %v2175 = vadd.f32 %v2059, %v2169
      %v2176 = vadd.f32 %v2060, %v2172
      %s2177 = scalar_lea.vmem %s3, 104
      %v2178 = vld [vmem:[%s2177] sm:$0xf]
      %v2179 = vld [vmem:[%s2177 + $0x4] sm:$0x1]
      %v2182 = vunpack.c.l.b16 %v2178
      %v2183 = vunpack.c.l.b16 %v2179
      %v2184 = vpack.c.b16 %v2183, %v2182
      %v2186 = vsel %vm680, %v2184, 0
      %2188 = vmatprep.subr.bf16.mxu0 0
      %2189 = vmatpush1.bf16.msra.mxu0 %v669
      %2190 = vmatprep.subr.bf16.mxu0 0
      %2191 = vmatpush1.bf16.msra.mxu0 %v670
      %2192 = vmatprep.subr.bf16.mxu0 0
      %2193 = vmatpush1.bf16.msra.mxu0 %v671
      %2194 = vmatprep.subr.bf16.mxu0 0
      %2195 = vmatpush1.bf16.msra.mxu0 %v672
      %2196 = vmatprep.subr.bf16.mxu0 0
      %2197 = vmatpush1.bf16.msra.mxu0 0
      %2198 = vmatprep.subr.bf16.mxu0 0
      %2199 = vmatpush1.bf16.msra.mxu0 0
      %2200 = vmatprep.subr.bf16.mxu0 0
      %2201 = vmatpush1.bf16.msra.mxu0 0
      %2202 = vmatprep.subr.bf16.mxu0 0
      %2203 = vmatpush1.bf16.msra.mxu0 0
      %2204 = vmatprep.subr.bf16.mxu0 0
      %2205 = vmatpush1.bf16.msra.mxu0 0
      %2206 = vmatprep.subr.bf16.mxu0 0
      %2207 = vmatpush1.bf16.msra.mxu0 0
      %2208 = vmatprep.subr.bf16.mxu0 0
      %2209 = vmatpush1.bf16.msra.mxu0 0
      %2210 = vmatprep.subr.bf16.mxu0 0
      %2211 = vmatpush1.bf16.msra.mxu0 0
      %2212 = vmatprep.subr.bf16.mxu0 0
      %2213 = vmatpush1.bf16.msra.mxu0 0
      %2214 = vmatprep.subr.bf16.mxu0 0
      %2215 = vmatpush1.bf16.msra.mxu0 0
      %2216 = vmatprep.subr.bf16.mxu0 0
      %2217 = vmatpush1.bf16.msra.mxu0 0
      %2218 = vmatprep.subr.bf16.mxu0 0
      %2219 = vmatpush1.bf16.msra.mxu0 0
      %2220 = vmatprep.mubr.bf16.mxu0 0
      %2221 = vmatmul.mubr.bf16.gmra.mrb[0].mxu0 %v2186
      %v2222 = vpop.f32.mrb[0].mxu0
      %v2223 = vadd.f32 0.0, %v2222
      %v2224 = vpop.f32.mrb[0].mxu0
      %v2225 = vpop.f32.mrb[0].mxu0
      %v2226 = vadd.f32 0.0, %v2225
      %v2227 = vpop.f32.mrb[0].mxu0
      %2228 = vdwg.mxu0
      %v2229 = vpack.c.bf16 %v2226, %v2223
      %s2230 = scalar_lea.vmem %s4, 208
      %v2231 = vld [vmem:[%s2230] sm:$0xf]
      %v2232 = vld [vmem:[%s2230 + $0x4] sm:$0xf]
      %v2233 = vld [vmem:[%s2230 + $0x8] sm:$0xf]
      %v2234 = vld [vmem:[%s2230 + $0xc] sm:$0xf]
      %v2239 = vunpack.c.l.b16 %v2231
      %v2240 = vunpack.c.l.b16 %v2232
      %v2241 = vunpack.c.l.b16 %v2233
      %v2242 = vunpack.c.l.b16 %v2234
      %v2243 = vpack.c.b16 %v2240, %v2239
      %v2244 = vpack.c.b16 %v2242, %v2241
      %v2248 = vsel %vm800, %v2229, 0
      %2250 = vmatprep.subr.bf16.mxu0 0
      %2251 = vmatpush1.bf16.msra.mxu0 %v2243
      %2252 = vmatprep.subr.bf16.mxu0 0
      %2253 = vmatpush1.bf16.msra.mxu0 %v2244
      %2254 = vmatprep.subr.bf16.mxu0 0
      %2255 = vmatpush1.bf16.msra.mxu0 0
      %2256 = vmatprep.subr.bf16.mxu0 0
      %2257 = vmatpush1.bf16.msra.mxu0 0
      %2258 = vmatprep.subr.bf16.mxu0 0
      %2259 = vmatpush1.bf16.msra.mxu0 0
      %2260 = vmatprep.subr.bf16.mxu0 0
      %2261 = vmatpush1.bf16.msra.mxu0 0
      %2262 = vmatprep.subr.bf16.mxu0 0
      %2263 = vmatpush1.bf16.msra.mxu0 0
      %2264 = vmatprep.subr.bf16.mxu0 0
      %2265 = vmatpush1.bf16.msra.mxu0 0
      %2266 = vmatprep.subr.bf16.mxu0 0
      %2267 = vmatpush1.bf16.msra.mxu0 0
      %2268 = vmatprep.subr.bf16.mxu0 0
      %2269 = vmatpush1.bf16.msra.mxu0 0
      %2270 = vmatprep.subr.bf16.mxu0 0
      %2271 = vmatpush1.bf16.msra.mxu0 0
      %2272 = vmatprep.subr.bf16.mxu0 0
      %2273 = vmatpush1.bf16.msra.mxu0 0
      %2274 = vmatprep.subr.bf16.mxu0 0
      %2275 = vmatpush1.bf16.msra.mxu0 0
      %2276 = vmatprep.subr.bf16.mxu0 0
      %2277 = vmatpush1.bf16.msra.mxu0 0
      %2278 = vmatprep.subr.bf16.mxu0 0
      %2279 = vmatpush1.bf16.msra.mxu0 0
      %2280 = vmatprep.subr.bf16.mxu0 0
      %2281 = vmatpush1.bf16.msra.mxu0 0
      %2282 = vmatprep.mubr.bf16.mxu0 0
      %2283 = vmatmul.mubr.bf16.gmra.mrb[0].mxu0 %v2248
      %v2284 = vpop.f32.mrb[0].mxu0
      %v2285 = vadd.f32 0.0, %v2284
      %v2286 = vpop.f32.mrb[0].mxu0
      %v2287 = vpop.f32.mrb[0].mxu0
      %v2288 = vadd.f32 0.0, %v2287
      %v2289 = vpop.f32.mrb[0].mxu0
      %2290 = vdwg.mxu0
      %v2291 = vadd.f32 %v2175, %v2285
      %v2292 = vadd.f32 %v2176, %v2288
      %s2293 = scalar_lea.vmem %s3, 112
      %v2294 = vld [vmem:[%s2293] sm:$0xf]
      %v2295 = vld [vmem:[%s2293 + $0x4] sm:$0x1]
      %v2298 = vunpack.c.l.b16 %v2294
      %v2299 = vunpack.c.l.b16 %v2295
      %v2300 = vpack.c.b16 %v2299, %v2298
      %v2302 = vsel %vm680, %v2300, 0
      %2304 = vmatprep.subr.bf16.mxu0 0
      %2305 = vmatpush1.bf16.msra.mxu0 %v669
      %2306 = vmatprep.subr.bf16.mxu0 0
      %2307 = vmatpush1.bf16.msra.mxu0 %v670
      %2308 = vmatprep.subr.bf16.mxu0 0
      %2309 = vmatpush1.bf16.msra.mxu0 %v671
      %2310 = vmatprep.subr.bf16.mxu0 0
      %2311 = vmatpush1.bf16.msra.mxu0 %v672
      %2312 = vmatprep.subr.bf16.mxu0 0
      %2313 = vmatpush1.bf16.msra.mxu0 0
      %2314 = vmatprep.subr.bf16.mxu0 0
      %2315 = vmatpush1.bf16.msra.mxu0 0
      %2316 = vmatprep.subr.bf16.mxu0 0
      %2317 = vmatpush1.bf16.msra.mxu0 0
      %2318 = vmatprep.subr.bf16.mxu0 0
      %2319 = vmatpush1.bf16.msra.mxu0 0
      %2320 = vmatprep.subr.bf16.mxu0 0
      %2321 = vmatpush1.bf16.msra.mxu0 0
      %2322 = vmatprep.subr.bf16.mxu0 0
      %2323 = vmatpush1.bf16.msra.mxu0 0
      %2324 = vmatprep.subr.bf16.mxu0 0
      %2325 = vmatpush1.bf16.msra.mxu0 0
      %2326 = vmatprep.subr.bf16.mxu0 0
      %2327 = vmatpush1.bf16.msra.mxu0 0
      %2328 = vmatprep.subr.bf16.mxu0 0
      %2329 = vmatpush1.bf16.msra.mxu0 0
      %2330 = vmatprep.subr.bf16.mxu0 0
      %2331 = vmatpush1.bf16.msra.mxu0 0
      %2332 = vmatprep.subr.bf16.mxu0 0
      %2333 = vmatpush1.bf16.msra.mxu0 0
      %2334 = vmatprep.subr.bf16.mxu0 0
      %2335 = vmatpush1.bf16.msra.mxu0 0
      %2336 = vmatprep.mubr.bf16.mxu0 0
      %2337 = vmatmul.mubr.bf16.gmra.mrb[0].mxu0 %v2302
      %v2338 = vpop.f32.mrb[0].mxu0
      %v2339 = vadd.f32 0.0, %v2338
      %v2340 = vpop.f32.mrb[0].mxu0
      %v2341 = vpop.f32.mrb[0].mxu0
      %v2342 = vadd.f32 0.0, %v2341
      %v2343 = vpop.f32.mrb[0].mxu0
      %2344 = vdwg.mxu0
      %v2345 = vpack.c.bf16 %v2342, %v2339
      %s2346 = scalar_lea.vmem %s4, 224
      %v2347 = vld [vmem:[%s2346] sm:$0xf]
      %v2348 = vld [vmem:[%s2346 + $0x4] sm:$0xf]
      %v2349 = vld [vmem:[%s2346 + $0x8] sm:$0xf]
      %v2350 = vld [vmem:[%s2346 + $0xc] sm:$0xf]
      %v2355 = vunpack.c.l.b16 %v2347
      %v2356 = vunpack.c.l.b16 %v2348
      %v2357 = vunpack.c.l.b16 %v2349
      %v2358 = vunpack.c.l.b16 %v2350
      %v2359 = vpack.c.b16 %v2356, %v2355
      %v2360 = vpack.c.b16 %v2358, %v2357
      %v2364 = vsel %vm800, %v2345, 0
      %2366 = vmatprep.subr.bf16.mxu0 0
      %2367 = vmatpush1.bf16.msra.mxu0 %v2359
      %2368 = vmatprep.subr.bf16.mxu0 0
      %2369 = vmatpush1.bf16.msra.mxu0 %v2360
      %2370 = vmatprep.subr.bf16.mxu0 0
      %2371 = vmatpush1.bf16.msra.mxu0 0
      %2372 = vmatprep.subr.bf16.mxu0 0
      %2373 = vmatpush1.bf16.msra.mxu0 0
      %2374 = vmatprep.subr.bf16.mxu0 0
      %2375 = vmatpush1.bf16.msra.mxu0 0
      %2376 = vmatprep.subr.bf16.mxu0 0
      %2377 = vmatpush1.bf16.msra.mxu0 0
      %2378 = vmatprep.subr.bf16.mxu0 0
      %2379 = vmatpush1.bf16.msra.mxu0 0
      %2380 = vmatprep.subr.bf16.mxu0 0
      %2381 = vmatpush1.bf16.msra.mxu0 0
      %2382 = vmatprep.subr.bf16.mxu0 0
      %2383 = vmatpush1.bf16.msra.mxu0 0
      %2384 = vmatprep.subr.bf16.mxu0 0
      %2385 = vmatpush1.bf16.msra.mxu0 0
      %2386 = vmatprep.subr.bf16.mxu0 0
      %2387 = vmatpush1.bf16.msra.mxu0 0
      %2388 = vmatprep.subr.bf16.mxu0 0
      %2389 = vmatpush1.bf16.msra.mxu0 0
      %2390 = vmatprep.subr.bf16.mxu0 0
      %2391 = vmatpush1.bf16.msra.mxu0 0
      %2392 = vmatprep.subr.bf16.mxu0 0
      %2393 = vmatpush1.bf16.msra.mxu0 0
      %2394 = vmatprep.subr.bf16.mxu0 0
      %2395 = vmatpush1.bf16.msra.mxu0 0
      %2396 = vmatprep.subr.bf16.mxu0 0
      %2397 = vmatpush1.bf16.msra.mxu0 0
      %2398 = vmatprep.mubr.bf16.mxu0 0
      %2399 = vmatmul.mubr.bf16.gmra.mrb[0].mxu0 %v2364
      %v2400 = vpop.f32.mrb[0].mxu0
      %v2401 = vadd.f32 0.0, %v2400
      %v2402 = vpop.f32.mrb[0].mxu0
      %v2403 = vpop.f32.mrb[0].mxu0
      %v2404 = vadd.f32 0.0, %v2403
      %v2405 = vpop.f32.mrb[0].mxu0
      %2406 = vdwg.mxu0
      %v2407 = vadd.f32 %v2291, %v2401
      %v2408 = vadd.f32 %v2292, %v2404
      %s2409 = scalar_lea.vmem %s3, 120
      %v2410 = vld [vmem:[%s2409] sm:$0xf]
      %v2411 = vld [vmem:[%s2409 + $0x4] sm:$0x1]
      %v2414 = vunpack.c.l.b16 %v2410
      %v2415 = vunpack.c.l.b16 %v2411
      %v2416 = vpack.c.b16 %v2415, %v2414
      %v2418 = vsel %vm680, %v2416, 0
      %2420 = vmatprep.subr.bf16.mxu0 0
      %2421 = vmatpush1.bf16.msra.mxu0 %v669
      %2422 = vmatprep.subr.bf16.mxu0 0
      %2423 = vmatpush1.bf16.msra.mxu0 %v670
      %2424 = vmatprep.subr.bf16.mxu0 0
      %2425 = vmatpush1.bf16.msra.mxu0 %v671
      %2426 = vmatprep.subr.bf16.mxu0 0
      %2427 = vmatpush1.bf16.msra.mxu0 %v672
      %2428 = vmatprep.subr.bf16.mxu0 0
      %2429 = vmatpush1.bf16.msra.mxu0 0
      %2430 = vmatprep.subr.bf16.mxu0 0
      %2431 = vmatpush1.bf16.msra.mxu0 0
      %2432 = vmatprep.subr.bf16.mxu0 0
      %2433 = vmatpush1.bf16.msra.mxu0 0
      %2434 = vmatprep.subr.bf16.mxu0 0
      %2435 = vmatpush1.bf16.msra.mxu0 0
      %2436 = vmatprep.subr.bf16.mxu0 0
      %2437 = vmatpush1.bf16.msra.mxu0 0
      %2438 = vmatprep.subr.bf16.mxu0 0
      %2439 = vmatpush1.bf16.msra.mxu0 0
      %2440 = vmatprep.subr.bf16.mxu0 0
      %2441 = vmatpush1.bf16.msra.mxu0 0
      %2442 = vmatprep.subr.bf16.mxu0 0
      %2443 = vmatpush1.bf16.msra.mxu0 0
      %2444 = vmatprep.subr.bf16.mxu0 0
      %2445 = vmatpush1.bf16.msra.mxu0 0
      %2446 = vmatprep.subr.bf16.mxu0 0
      %2447 = vmatpush1.bf16.msra.mxu0 0
      %2448 = vmatprep.subr.bf16.mxu0 0
      %2449 = vmatpush1.bf16.msra.mxu0 0
      %2450 = vmatprep.subr.bf16.mxu0 0
      %2451 = vmatpush1.bf16.msra.mxu0 0
      %2452 = vmatprep.mubr.bf16.mxu0 0
      %2453 = vmatmul.mubr.bf16.gmra.mrb[0].mxu0 %v2418
      %v2454 = vpop.f32.mrb[0].mxu0
      %v2455 = vadd.f32 0.0, %v2454
      %v2456 = vpop.f32.mrb[0].mxu0
      %v2457 = vpop.f32.mrb[0].mxu0
      %v2458 = vadd.f32 0.0, %v2457
      %v2459 = vpop.f32.mrb[0].mxu0
      %2460 = vdwg.mxu0
      %v2461 = vpack.c.bf16 %v2458, %v2455
      %s2462 = scalar_lea.vmem %s4, 240
      %v2463 = vld [vmem:[%s2462] sm:$0xf]
      %v2464 = vld [vmem:[%s2462 + $0x4] sm:$0xf]
      %v2465 = vld [vmem:[%s2462 + $0x8] sm:$0xf]
      %v2466 = vld [vmem:[%s2462 + $0xc] sm:$0xf]
      %v2471 = vunpack.c.l.b16 %v2463
      %v2472 = vunpack.c.l.b16 %v2464
      %v2473 = vunpack.c.l.b16 %v2465
      %v2474 = vunpack.c.l.b16 %v2466
      %v2475 = vpack.c.b16 %v2472, %v2471
      %v2476 = vpack.c.b16 %v2474, %v2473
      %v2480 = vsel %vm800, %v2461, 0
      %2482 = vmatprep.subr.bf16.mxu0 0
      %2483 = vmatpush1.bf16.msra.mxu0 %v2475
      %2484 = vmatprep.subr.bf16.mxu0 0
      %2485 = vmatpush1.bf16.msra.mxu0 %v2476
      %2486 = vmatprep.subr.bf16.mxu0 0
      %2487 = vmatpush1.bf16.msra.mxu0 0
      %2488 = vmatprep.subr.bf16.mxu0 0
      %2489 = vmatpush1.bf16.msra.mxu0 0
      %2490 = vmatprep.subr.bf16.mxu0 0
      %2491 = vmatpush1.bf16.msra.mxu0 0
      %2492 = vmatprep.subr.bf16.mxu0 0
      %2493 = vmatpush1.bf16.msra.mxu0 0
      %2494 = vmatprep.subr.bf16.mxu0 0
      %2495 = vmatpush1.bf16.msra.mxu0 0
      %2496 = vmatprep.subr.bf16.mxu0 0
      %2497 = vmatpush1.bf16.msra.mxu0 0
      %2498 = vmatprep.subr.bf16.mxu0 0
      %2499 = vmatpush1.bf16.msra.mxu0 0
      %2500 = vmatprep.subr.bf16.mxu0 0
      %2501 = vmatpush1.bf16.msra.mxu0 0
      %2502 = vmatprep.subr.bf16.mxu0 0
      %2503 = vmatpush1.bf16.msra.mxu0 0
      %2504 = vmatprep.subr.bf16.mxu0 0
      %2505 = vmatpush1.bf16.msra.mxu0 0
      %2506 = vmatprep.subr.bf16.mxu0 0
      %2507 = vmatpush1.bf16.msra.mxu0 0
      %2508 = vmatprep.subr.bf16.mxu0 0
      %2509 = vmatpush1.bf16.msra.mxu0 0
      %2510 = vmatprep.subr.bf16.mxu0 0
      %2511 = vmatpush1.bf16.msra.mxu0 0
      %2512 = vmatprep.subr.bf16.mxu0 0
      %2513 = vmatpush1.bf16.msra.mxu0 0
      %2514 = vmatprep.mubr.bf16.mxu0 0
      %2515 = vmatmul.mubr.bf16.gmra.mrb[0].mxu0 %v2480
      %v2516 = vpop.f32.mrb[0].mxu0
      %v2517 = vadd.f32 0.0, %v2516
      %v2518 = vpop.f32.mrb[0].mxu0
      %v2519 = vpop.f32.mrb[0].mxu0
      %v2520 = vadd.f32 0.0, %v2519
      %v2521 = vpop.f32.mrb[0].mxu0
      %2522 = vdwg.mxu0
      %v2523 = vadd.f32 %v2407, %v2517
      %v2524 = vadd.f32 %v2408, %v2520
      %v2525 = vld [vmem:[%s5] sm:$0x1]
      %v2527 = vlaneseq
      %v2528 = vshrl.u32 %v2527, 7
      %v2529 = vsub.s32 0, %v2528
      %v2530 = vrot.slane %v2525, %v2529
      %v2532 = vadd.f32 %v2523, %v2530
      %v2533 = vadd.f32 %v2524, %v2530
      %v2534 = vmax.f32 %v2532, 0.0
      %v2535 = vmax.f32 %v2533, 0.0
      %v2536 = vpack.c.bf16 %v2534, %v2534
      %v2537 = vld [vmem:[%s6] sm:$0xf]
      %v2538 = vld [vmem:[%s6 + $0x4] sm:$0xf]
      %v2539 = vld [vmem:[%s6 + $0x8] sm:$0xf]
      %v2540 = vld [vmem:[%s6 + $0xc] sm:$0xf]
      %v2541 = vld [vmem:[%s6 + $0x10] sm:$0xf]
      %v2542 = vld [vmem:[%s6 + $0x14] sm:$0xf]
      %v2543 = vld [vmem:[%s6 + $0x18] sm:$0xf]
      %v2544 = vld [vmem:[%s6 + $0x1c] sm:$0xf]
      %s2545 = scalar_lea.vmem %s6, 32
      %v2546 = vld [vmem:[%s2545] sm:$0xf]
      %v2547 = vld [vmem:[%s2545 + $0x4] sm:$0xf]
      %v2548 = vld [vmem:[%s2545 + $0x8] sm:$0xf]
      %v2549 = vld [vmem:[%s2545 + $0xc] sm:$0xf]
      %v2550 = vld [vmem:[%s2545 + $0x10] sm:$0xf]
      %v2551 = vld [vmem:[%s2545 + $0x14] sm:$0xf]
      %v2552 = vld [vmem:[%s2545 + $0x18] sm:$0xf]
      %v2553 = vld [vmem:[%s2545 + $0x1c] sm:$0xf]
      %v2555 = vshrl.u32 %v2536, 16
      %v2565 = vunpack.c.l.b16 %v2546
      %v2566 = vunpack.c.l.b16 %v2547
      %v2567 = vunpack.c.l.b16 %v2548
      %v2568 = vunpack.c.l.b16 %v2549
      %v2569 = vunpack.c.l.b16 %v2550
      %v2570 = vunpack.c.l.b16 %v2551
      %v2571 = vunpack.c.l.b16 %v2552
      %v2572 = vunpack.c.l.b16 %v2553
      %v2573 = vpack.c.b16 %v2566, %v2565
      %v2574 = vpack.c.b16 %v2568, %v2567
      %v2575 = vpack.c.b16 %v2570, %v2569
      %v2576 = vpack.c.b16 %v2572, %v2571
      %v2582 = vsel %vm680, %v2555, 0
      %2584 = vmatprep.subr.bf16.mxu0 0
      %2585 = vmatpush1.bf16.msra.mxu0 %v2573
      %2586 = vmatprep.subr.bf16.mxu0 0
      %2587 = vmatpush1.bf16.msra.mxu0 %v2574
      %2588 = vmatprep.subr.bf16.mxu0 0
      %2589 = vmatpush1.bf16.msra.mxu0 %v2575
      %2590 = vmatprep.subr.bf16.mxu0 0
      %2591 = vmatpush1.bf16.msra.mxu0 %v2576
      %2592 = vmatprep.subr.bf16.mxu0 0
      %2593 = vmatpush1.bf16.msra.mxu0 0
      %2594 = vmatprep.subr.bf16.mxu0 0
      %2595 = vmatpush1.bf16.msra.mxu0 0
      %2596 = vmatprep.subr.bf16.mxu0 0
      %2597 = vmatpush1.bf16.msra.mxu0 0
      %2598 = vmatprep.subr.bf16.mxu0 0
      %2599 = vmatpush1.bf16.msra.mxu0 0
      %2600 = vmatprep.subr.bf16.mxu0 0
      %2601 = vmatpush1.bf16.msra.mxu0 0
      %2602 = vmatprep.subr.bf16.mxu0 0
      %2603 = vmatpush1.bf16.msra.mxu0 0
      %2604 = vmatprep.subr.bf16.mxu0 0
      %2605 = vmatpush1.bf16.msra.mxu0 0
      %2606 = vmatprep.subr.bf16.mxu0 0
      %2607 = vmatpush1.bf16.msra.mxu0 0
      %2608 = vmatprep.subr.bf16.mxu0 0
      %2609 = vmatpush1.bf16.msra.mxu0 0
      %2610 = vmatprep.subr.bf16.mxu0 0
      %2611 = vmatpush1.bf16.msra.mxu0 0
      %2612 = vmatprep.subr.bf16.mxu0 0
      %2613 = vmatpush1.bf16.msra.mxu0 0
      %2614 = vmatprep.subr.bf16.mxu0 0
      %2615 = vmatpush1.bf16.msra.mxu0 0
      %2616 = vmatprep.mubr.bf16.mxu0 0
      %2617 = vmatmul.mubr.bf16.gmra.mrb[0].mxu0 %v2582
      %v2618 = vpop.f32.mrb[0].mxu0
      %v2619 = vadd.f32 0.0, %v2618
      %v2620 = vpop.f32.mrb[0].mxu0
      %v2621 = vpop.f32.mrb[0].mxu0
      %v2622 = vpop.f32.mrb[0].mxu0
      %2623 = vdwg.mxu0
      %v2632 = vunpack.c.l.b16 %v2537
      %v2633 = vunpack.c.l.b16 %v2538
      %v2634 = vunpack.c.l.b16 %v2539
      %v2635 = vunpack.c.l.b16 %v2540
      %v2636 = vunpack.c.l.b16 %v2541
      %v2637 = vunpack.c.l.b16 %v2542
      %v2638 = vunpack.c.l.b16 %v2543
      %v2639 = vunpack.c.l.b16 %v2544
      %v2640 = vpack.c.b16 %v2633, %v2632
      %v2641 = vpack.c.b16 %v2635, %v2634
      %v2642 = vpack.c.b16 %v2637, %v2636
      %v2643 = vpack.c.b16 %v2639, %v2638
      %v2648 = vsel %vm680, %v2536, 0
      %2650 = vmatprep.subr.bf16.mxu0 0
      %2651 = vmatpush1.bf16.msra.mxu0 %v2640
      %2652 = vmatprep.subr.bf16.mxu0 0
      %2653 = vmatpush1.bf16.msra.mxu0 %v2641
      %2654 = vmatprep.subr.bf16.mxu0 0
      %2655 = vmatpush1.bf16.msra.mxu0 %v2642
      %2656 = vmatprep.subr.bf16.mxu0 0
      %2657 = vmatpush1.bf16.msra.mxu0 %v2643
      %2658 = vmatprep.subr.bf16.mxu0 0
      %2659 = vmatpush1.bf16.msra.mxu0 0
      %2660 = vmatprep.subr.bf16.mxu0 0
      %2661 = vmatpush1.bf16.msra.mxu0 0
      %2662 = vmatprep.subr.bf16.mxu0 0
      %2663 = vmatpush1.bf16.msra.mxu0 0
      %2664 = vmatprep.subr.bf16.mxu0 0
      %2665 = vmatpush1.bf16.msra.mxu0 0
      %2666 = vmatprep.subr.bf16.mxu0 0
      %2667 = vmatpush1.bf16.msra.mxu0 0
      %2668 = vmatprep.subr.bf16.mxu0 0
      %2669 = vmatpush1.bf16.msra.mxu0 0
      %2670 = vmatprep.subr.bf16.mxu0 0
      %2671 = vmatpush1.bf16.msra.mxu0 0
      %2672 = vmatprep.subr.bf16.mxu0 0
      %2673 = vmatpush1.bf16.msra.mxu0 0
      %2674 = vmatprep.subr.bf16.mxu0 0
      %2675 = vmatpush1.bf16.msra.mxu0 0
      %2676 = vmatprep.subr.bf16.mxu0 0
      %2677 = vmatpush1.bf16.msra.mxu0 0
      %2678 = vmatprep.subr.bf16.mxu0 0
      %2679 = vmatpush1.bf16.msra.mxu0 0
      %2680 = vmatprep.subr.bf16.mxu0 0
      %2681 = vmatpush1.bf16.msra.mxu0 0
      %2682 = vmatprep.mubr.bf16.mxu0 0
      %2683 = vmatmul.mubr.bf16.gmra.mrb[0].mxu0 %v2648
      %v2684 = vpop.f32.mrb[0].mxu0
      %v2685 = vadd.f32 %v2619, %v2684
      %v2686 = vpop.f32.mrb[0].mxu0
      %v2687 = vpop.f32.mrb[0].mxu0
      %v2688 = vpop.f32.mrb[0].mxu0
      %2689 = vdwg.mxu0
      %s2690 = scalar_lea.vmem %s6, 64
      %v2691 = vld [vmem:[%s2690] sm:$0xf]
      %v2692 = vld [vmem:[%s2690 + $0x4] sm:$0xf]
      %v2693 = vld [vmem:[%s2690 + $0x8] sm:$0xf]
      %v2694 = vld [vmem:[%s2690 + $0xc] sm:$0xf]
      %v2695 = vld [vmem:[%s2690 + $0x10] sm:$0xf]
      %v2696 = vld [vmem:[%s2690 + $0x14] sm:$0xf]
      %v2697 = vld [vmem:[%s2690 + $0x18] sm:$0xf]
      %v2698 = vld [vmem:[%s2690 + $0x1c] sm:$0xf]
      %v2700 = vrot.slane %v2536, 1
      %v2709 = vunpack.c.l.b16 %v2691
      %v2710 = vunpack.c.l.b16 %v2692
      %v2711 = vunpack.c.l.b16 %v2693
      %v2712 = vunpack.c.l.b16 %v2694
      %v2713 = vunpack.c.l.b16 %v2695
      %v2714 = vunpack.c.l.b16 %v2696
      %v2715 = vunpack.c.l.b16 %v2697
      %v2716 = vunpack.c.l.b16 %v2698
      %v2717 = vpack.c.b16 %v2710, %v2709
      %v2718 = vpack.c.b16 %v2712, %v2711
      %v2719 = vpack.c.b16 %v2714, %v2713
      %v2720 = vpack.c.b16 %v2716, %v2715
      %v2726 = vsel %vm680, %v2700, 0
      %2728 = vmatprep.subr.bf16.mxu0 0
      %2729 = vmatpush1.bf16.msra.mxu0 %v2717
      %2730 = vmatprep.subr.bf16.mxu0 0
      %2731 = vmatpush1.bf16.msra.mxu0 %v2718
      %2732 = vmatprep.subr.bf16.mxu0 0
      %2733 = vmatpush1.bf16.msra.mxu0 %v2719
      %2734 = vmatprep.subr.bf16.mxu0 0
      %2735 = vmatpush1.bf16.msra.mxu0 %v2720
      %2736 = vmatprep.subr.bf16.mxu0 0
      %2737 = vmatpush1.bf16.msra.mxu0 0
      %2738 = vmatprep.subr.bf16.mxu0 0
      %2739 = vmatpush1.bf16.msra.mxu0 0
      %2740 = vmatprep.subr.bf16.mxu0 0
      %2741 = vmatpush1.bf16.msra.mxu0 0
      %2742 = vmatprep.subr.bf16.mxu0 0
      %2743 = vmatpush1.bf16.msra.mxu0 0
      %2744 = vmatprep.subr.bf16.mxu0 0
      %2745 = vmatpush1.bf16.msra.mxu0 0
      %2746 = vmatprep.subr.bf16.mxu0 0
      %2747 = vmatpush1.bf16.msra.mxu0 0
      %2748 = vmatprep.subr.bf16.mxu0 0
      %2749 = vmatpush1.bf16.msra.mxu0 0
      %2750 = vmatprep.subr.bf16.mxu0 0
      %2751 = vmatpush1.bf16.msra.mxu0 0
      %2752 = vmatprep.subr.bf16.mxu0 0
      %2753 = vmatpush1.bf16.msra.mxu0 0
      %2754 = vmatprep.subr.bf16.mxu0 0
      %2755 = vmatpush1.bf16.msra.mxu0 0
      %2756 = vmatprep.subr.bf16.mxu0 0
      %2757 = vmatpush1.bf16.msra.mxu0 0
      %2758 = vmatprep.subr.bf16.mxu0 0
      %2759 = vmatpush1.bf16.msra.mxu0 0
      %2760 = vmatprep.mubr.bf16.mxu0 0
      %2761 = vmatmul.mubr.bf16.gmra.mrb[0].mxu0 %v2726
      %v2762 = vpop.f32.mrb[0].mxu0
      %v2763 = vadd.f32 0.0, %v2762
      %v2764 = vpop.f32.mrb[0].mxu0
      %v2765 = vpop.f32.mrb[0].mxu0
      %v2766 = vpop.f32.mrb[0].mxu0
      %2767 = vdwg.mxu0
      %v2768 = vadd.f32 %v2685, %v2763
      %s2769 = scalar_lea.vmem %s6, 96
      %v2770 = vld [vmem:[%s2769] sm:$0xf]
      %v2771 = vld [vmem:[%s2769 + $0x4] sm:$0xf]
      %v2772 = vld [vmem:[%s2769 + $0x8] sm:$0xf]
      %v2773 = vld [vmem:[%s2769 + $0xc] sm:$0xf]
      %v2774 = vld [vmem:[%s2769 + $0x10] sm:$0xf]
      %v2775 = vld [vmem:[%s2769 + $0x14] sm:$0xf]
      %v2776 = vld [vmem:[%s2769 + $0x18] sm:$0xf]
      %v2777 = vld [vmem:[%s2769 + $0x1c] sm:$0xf]
      %v2778 = vrot.slane %v2555, 1
      %v2787 = vunpack.c.l.b16 %v2770
      %v2788 = vunpack.c.l.b16 %v2771
      %v2789 = vunpack.c.l.b16 %v2772
      %v2790 = vunpack.c.l.b16 %v2773
      %v2791 = vunpack.c.l.b16 %v2774
      %v2792 = vunpack.c.l.b16 %v2775
      %v2793 = vunpack.c.l.b16 %v2776
      %v2794 = vunpack.c.l.b16 %v2777
      %v2795 = vpack.c.b16 %v2788, %v2787
      %v2796 = vpack.c.b16 %v2790, %v2789
      %v2797 = vpack.c.b16 %v2792, %v2791
      %v2798 = vpack.c.b16 %v2794, %v2793
      %v2804 = vsel %vm680, %v2778, 0
      %2806 = vmatprep.subr.bf16.mxu0 0
      %2807 = vmatpush1.bf16.msra.mxu0 %v2795
      %2808 = vmatprep.subr.bf16.mxu0 0
      %2809 = vmatpush1.bf16.msra.mxu0 %v2796
      %2810 = vmatprep.subr.bf16.mxu0 0
      %2811 = vmatpush1.bf16.msra.mxu0 %v2797
      %2812 = vmatprep.subr.bf16.mxu0 0
      %2813 = vmatpush1.bf16.msra.mxu0 %v2798
      %2814 = vmatprep.subr.bf16.mxu0 0
      %2815 = vmatpush1.bf16.msra.mxu0 0
      %2816 = vmatprep.subr.bf16.mxu0 0
      %2817 = vmatpush1.bf16.msra.mxu0 0
      %2818 = vmatprep.subr.bf16.mxu0 0
      %2819 = vmatpush1.bf16.msra.mxu0 0
      %2820 = vmatprep.subr.bf16.mxu0 0
      %2821 = vmatpush1.bf16.msra.mxu0 0
      %2822 = vmatprep.subr.bf16.mxu0 0
      %2823 = vmatpush1.bf16.msra.mxu0 0
      %2824 = vmatprep.subr.bf16.mxu0 0
      %2825 = vmatpush1.bf16.msra.mxu0 0
      %2826 = vmatprep.subr.bf16.mxu0 0
      %2827 = vmatpush1.bf16.msra.mxu0 0
      %2828 = vmatprep.subr.bf16.mxu0 0
      %2829 = vmatpush1.bf16.msra.mxu0 0
      %2830 = vmatprep.subr.bf16.mxu0 0
      %2831 = vmatpush1.bf16.msra.mxu0 0
      %2832 = vmatprep.subr.bf16.mxu0 0
      %2833 = vmatpush1.bf16.msra.mxu0 0
      %2834 = vmatprep.subr.bf16.mxu0 0
      %2835 = vmatpush1.bf16.msra.mxu0 0
      %2836 = vmatprep.subr.bf16.mxu0 0
      %2837 = vmatpush1.bf16.msra.mxu0 0
      %2838 = vmatprep.mubr.bf16.mxu0 0
      %2839 = vmatmul.mubr.bf16.gmra.mrb[0].mxu0 %v2804
      %v2840 = vpop.f32.mrb[0].mxu0
      %v2841 = vadd.f32 0.0, %v2840
      %v2842 = vpop.f32.mrb[0].mxu0
      %v2843 = vpop.f32.mrb[0].mxu0
      %v2844 = vpop.f32.mrb[0].mxu0
      %2845 = vdwg.mxu0
      %v2846 = vadd.f32 %v2768, %v2841
      %s2847 = scalar_lea.vmem %s6, 128
      %v2848 = vld [vmem:[%s2847] sm:$0xf]
      %v2849 = vld [vmem:[%s2847 + $0x4] sm:$0xf]
      %v2850 = vld [vmem:[%s2847 + $0x8] sm:$0xf]
      %v2851 = vld [vmem:[%s2847 + $0xc] sm:$0xf]
      %v2852 = vld [vmem:[%s2847 + $0x10] sm:$0xf]
      %v2853 = vld [vmem:[%s2847 + $0x14] sm:$0xf]
      %v2854 = vld [vmem:[%s2847 + $0x18] sm:$0xf]
      %v2855 = vld [vmem:[%s2847 + $0x1c] sm:$0xf]
      %v2856 = vrot.slane %v2536, 2
      %v2865 = vunpack.c.l.b16 %v2848
      %v2866 = vunpack.c.l.b16 %v2849
      %v2867 = vunpack.c.l.b16 %v2850
      %v2868 = vunpack.c.l.b16 %v2851
      %v2869 = vunpack.c.l.b16 %v2852
      %v2870 = vunpack.c.l.b16 %v2853
      %v2871 = vunpack.c.l.b16 %v2854
      %v2872 = vunpack.c.l.b16 %v2855
      %v2873 = vpack.c.b16 %v2866, %v2865
      %v2874 = vpack.c.b16 %v2868, %v2867
      %v2875 = vpack.c.b16 %v2870, %v2869
      %v2876 = vpack.c.b16 %v2872, %v2871
      %v2882 = vsel %vm680, %v2856, 0
      %2884 = vmatprep.subr.bf16.mxu0 0
      %2885 = vmatpush1.bf16.msra.mxu0 %v2873
      %2886 = vmatprep.subr.bf16.mxu0 0
      %2887 = vmatpush1.bf16.msra.mxu0 %v2874
      %2888 = vmatprep.subr.bf16.mxu0 0
      %2889 = vmatpush1.bf16.msra.mxu0 %v2875
      %2890 = vmatprep.subr.bf16.mxu0 0
      %2891 = vmatpush1.bf16.msra.mxu0 %v2876
      %2892 = vmatprep.subr.bf16.mxu0 0
      %2893 = vmatpush1.bf16.msra.mxu0 0
      %2894 = vmatprep.subr.bf16.mxu0 0
      %2895 = vmatpush1.bf16.msra.mxu0 0
      %2896 = vmatprep.subr.bf16.mxu0 0
      %2897 = vmatpush1.bf16.msra.mxu0 0
      %2898 = vmatprep.subr.bf16.mxu0 0
      %2899 = vmatpush1.bf16.msra.mxu0 0
      %2900 = vmatprep.subr.bf16.mxu0 0
      %2901 = vmatpush1.bf16.msra.mxu0 0
      %2902 = vmatprep.subr.bf16.mxu0 0
      %2903 = vmatpush1.bf16.msra.mxu0 0
      %2904 = vmatprep.subr.bf16.mxu0 0
      %2905 = vmatpush1.bf16.msra.mxu0 0
      %2906 = vmatprep.subr.bf16.mxu0 0
      %2907 = vmatpush1.bf16.msra.mxu0 0
      %2908 = vmatprep.subr.bf16.mxu0 0
      %2909 = vmatpush1.bf16.msra.mxu0 0
      %2910 = vmatprep.subr.bf16.mxu0 0
      %2911 = vmatpush1.bf16.msra.mxu0 0
      %2912 = vmatprep.subr.bf16.mxu0 0
      %2913 = vmatpush1.bf16.msra.mxu0 0
      %2914 = vmatprep.subr.bf16.mxu0 0
      %2915 = vmatpush1.bf16.msra.mxu0 0
      %2916 = vmatprep.mubr.bf16.mxu0 0
      %2917 = vmatmul.mubr.bf16.gmra.mrb[0].mxu0 %v2882
      %v2918 = vpop.f32.mrb[0].mxu0
      %v2919 = vadd.f32 0.0, %v2918
      %v2920 = vpop.f32.mrb[0].mxu0
      %v2921 = vpop.f32.mrb[0].mxu0
      %v2922 = vpop.f32.mrb[0].mxu0
      %2923 = vdwg.mxu0
      %v2924 = vadd.f32 %v2846, %v2919
      %s2925 = scalar_lea.vmem %s6, 160
      %v2926 = vld [vmem:[%s2925] sm:$0xf]
      %v2927 = vld [vmem:[%s2925 + $0x4] sm:$0xf]
      %v2928 = vld [vmem:[%s2925 + $0x8] sm:$0xf]
      %v2929 = vld [vmem:[%s2925 + $0xc] sm:$0xf]
      %v2930 = vld [vmem:[%s2925 + $0x10] sm:$0xf]
      %v2931 = vld [vmem:[%s2925 + $0x14] sm:$0xf]
      %v2932 = vld [vmem:[%s2925 + $0x18] sm:$0xf]
      %v2933 = vld [vmem:[%s2925 + $0x1c] sm:$0xf]
      %v2934 = vrot.slane %v2555, 2
      %v2943 = vunpack.c.l.b16 %v2926
      %v2944 = vunpack.c.l.b16 %v2927
      %v2945 = vunpack.c.l.b16 %v2928
      %v2946 = vunpack.c.l.b16 %v2929
      %v2947 = vunpack.c.l.b16 %v2930
      %v2948 = vunpack.c.l.b16 %v2931
      %v2949 = vunpack.c.l.b16 %v2932
      %v2950 = vunpack.c.l.b16 %v2933
      %v2951 = vpack.c.b16 %v2944, %v2943
      %v2952 = vpack.c.b16 %v2946, %v2945
      %v2953 = vpack.c.b16 %v2948, %v2947
      %v2954 = vpack.c.b16 %v2950, %v2949
      %v2960 = vsel %vm680, %v2934, 0
      %2962 = vmatprep.subr.bf16.mxu0 0
      %2963 = vmatpush1.bf16.msra.mxu0 %v2951
      %2964 = vmatprep.subr.bf16.mxu0 0
      %2965 = vmatpush1.bf16.msra.mxu0 %v2952
      %2966 = vmatprep.subr.bf16.mxu0 0
      %2967 = vmatpush1.bf16.msra.mxu0 %v2953
      %2968 = vmatprep.subr.bf16.mxu0 0
      %2969 = vmatpush1.bf16.msra.mxu0 %v2954
      %2970 = vmatprep.subr.bf16.mxu0 0
      %2971 = vmatpush1.bf16.msra.mxu0 0
      %2972 = vmatprep.subr.bf16.mxu0 0
      %2973 = vmatpush1.bf16.msra.mxu0 0
      %2974 = vmatprep.subr.bf16.mxu0 0
      %2975 = vmatpush1.bf16.msra.mxu0 0
      %2976 = vmatprep.subr.bf16.mxu0 0
      %2977 = vmatpush1.bf16.msra.mxu0 0
      %2978 = vmatprep.subr.bf16.mxu0 0
      %2979 = vmatpush1.bf16.msra.mxu0 0
      %2980 = vmatprep.subr.bf16.mxu0 0
      %2981 = vmatpush1.bf16.msra.mxu0 0
      %2982 = vmatprep.subr.bf16.mxu0 0
      %2983 = vmatpush1.bf16.msra.mxu0 0
      %2984 = vmatprep.subr.bf16.mxu0 0
      %2985 = vmatpush1.bf16.msra.mxu0 0
      %2986 = vmatprep.subr.bf16.mxu0 0
      %2987 = vmatpush1.bf16.msra.mxu0 0
      %2988 = vmatprep.subr.bf16.mxu0 0
      %2989 = vmatpush1.bf16.msra.mxu0 0
      %2990 = vmatprep.subr.bf16.mxu0 0
      %2991 = vmatpush1.bf16.msra.mxu0 0
      %2992 = vmatprep.subr.bf16.mxu0 0
      %2993 = vmatpush1.bf16.msra.mxu0 0
      %2994 = vmatprep.mubr.bf16.mxu0 0
      %2995 = vmatmul.mubr.bf16.gmra.mrb[0].mxu0 %v2960
      %v2996 = vpop.f32.mrb[0].mxu0
      %v2997 = vadd.f32 0.0, %v2996
      %v2998 = vpop.f32.mrb[0].mxu0
      %v2999 = vpop.f32.mrb[0].mxu0
      %v3000 = vpop.f32.mrb[0].mxu0
      %3001 = vdwg.mxu0
      %v3002 = vadd.f32 %v2924, %v2997
      %s3003 = scalar_lea.vmem %s6, 192
      %v3004 = vld [vmem:[%s3003] sm:$0xf]
      %v3005 = vld [vmem:[%s3003 + $0x4] sm:$0xf]
      %v3006 = vld [vmem:[%s3003 + $0x8] sm:$0xf]
      %v3007 = vld [vmem:[%s3003 + $0xc] sm:$0xf]
      %v3008 = vld [vmem:[%s3003 + $0x10] sm:$0xf]
      %v3009 = vld [vmem:[%s3003 + $0x14] sm:$0xf]
      %v3010 = vld [vmem:[%s3003 + $0x18] sm:$0xf]
      %v3011 = vld [vmem:[%s3003 + $0x1c] sm:$0xf]
      %v3012 = vrot.slane %v2536, 3
      %v3021 = vunpack.c.l.b16 %v3004
      %v3022 = vunpack.c.l.b16 %v3005
      %v3023 = vunpack.c.l.b16 %v3006
      %v3024 = vunpack.c.l.b16 %v3007
      %v3025 = vunpack.c.l.b16 %v3008
      %v3026 = vunpack.c.l.b16 %v3009
      %v3027 = vunpack.c.l.b16 %v3010
      %v3028 = vunpack.c.l.b16 %v3011
      %v3029 = vpack.c.b16 %v3022, %v3021
      %v3030 = vpack.c.b16 %v3024, %v3023
      %v3031 = vpack.c.b16 %v3026, %v3025
      %v3032 = vpack.c.b16 %v3028, %v3027
      %v3038 = vsel %vm680, %v3012, 0
      %3040 = vmatprep.subr.bf16.mxu0 0
      %3041 = vmatpush1.bf16.msra.mxu0 %v3029
      %3042 = vmatprep.subr.bf16.mxu0 0
      %3043 = vmatpush1.bf16.msra.mxu0 %v3030
      %3044 = vmatprep.subr.bf16.mxu0 0
      %3045 = vmatpush1.bf16.msra.mxu0 %v3031
      %3046 = vmatprep.subr.bf16.mxu0 0
      %3047 = vmatpush1.bf16.msra.mxu0 %v3032
      %3048 = vmatprep.subr.bf16.mxu0 0
      %3049 = vmatpush1.bf16.msra.mxu0 0
      %3050 = vmatprep.subr.bf16.mxu0 0
      %3051 = vmatpush1.bf16.msra.mxu0 0
      %3052 = vmatprep.subr.bf16.mxu0 0
      %3053 = vmatpush1.bf16.msra.mxu0 0
      %3054 = vmatprep.subr.bf16.mxu0 0
      %3055 = vmatpush1.bf16.msra.mxu0 0
      %3056 = vmatprep.subr.bf16.mxu0 0
      %3057 = vmatpush1.bf16.msra.mxu0 0
      %3058 = vmatprep.subr.bf16.mxu0 0
      %3059 = vmatpush1.bf16.msra.mxu0 0
      %3060 = vmatprep.subr.bf16.mxu0 0
      %3061 = vmatpush1.bf16.msra.mxu0 0
      %3062 = vmatprep.subr.bf16.mxu0 0
      %3063 = vmatpush1.bf16.msra.mxu0 0
      %3064 = vmatprep.subr.bf16.mxu0 0
      %3065 = vmatpush1.bf16.msra.mxu0 0
      %3066 = vmatprep.subr.bf16.mxu0 0
      %3067 = vmatpush1.bf16.msra.mxu0 0
      %3068 = vmatprep.subr.bf16.mxu0 0
      %3069 = vmatpush1.bf16.msra.mxu0 0
      %3070 = vmatprep.subr.bf16.mxu0 0
      %3071 = vmatpush1.bf16.msra.mxu0 0
      %3072 = vmatprep.mubr.bf16.mxu0 0
      %3073 = vmatmul.mubr.bf16.gmra.mrb[0].mxu0 %v3038
      %v3074 = vpop.f32.mrb[0].mxu0
      %v3075 = vadd.f32 0.0, %v3074
      %v3076 = vpop.f32.mrb[0].mxu0
      %v3077 = vpop.f32.mrb[0].mxu0
      %v3078 = vpop.f32.mrb[0].mxu0
      %3079 = vdwg.mxu0
      %v3080 = vadd.f32 %v3002, %v3075
      %s3081 = scalar_lea.vmem %s6, 224
      %v3082 = vld [vmem:[%s3081] sm:$0xf]
      %v3083 = vld [vmem:[%s3081 + $0x4] sm:$0xf]
      %v3084 = vld [vmem:[%s3081 + $0x8] sm:$0xf]
      %v3085 = vld [vmem:[%s3081 + $0xc] sm:$0xf]
      %v3086 = vld [vmem:[%s3081 + $0x10] sm:$0xf]
      %v3087 = vld [vmem:[%s3081 + $0x14] sm:$0xf]
      %v3088 = vld [vmem:[%s3081 + $0x18] sm:$0xf]
      %v3089 = vld [vmem:[%s3081 + $0x1c] sm:$0xf]
      %v3090 = vrot.slane %v2555, 3
      %v3099 = vunpack.c.l.b16 %v3082
      %v3100 = vunpack.c.l.b16 %v3083
      %v3101 = vunpack.c.l.b16 %v3084
      %v3102 = vunpack.c.l.b16 %v3085
      %v3103 = vunpack.c.l.b16 %v3086
      %v3104 = vunpack.c.l.b16 %v3087
      %v3105 = vunpack.c.l.b16 %v3088
      %v3106 = vunpack.c.l.b16 %v3089
      %v3107 = vpack.c.b16 %v3100, %v3099
      %v3108 = vpack.c.b16 %v3102, %v3101
      %v3109 = vpack.c.b16 %v3104, %v3103
      %v3110 = vpack.c.b16 %v3106, %v3105
      %v3116 = vsel %vm680, %v3090, 0
      %3118 = vmatprep.subr.bf16.mxu0 0
      %3119 = vmatpush1.bf16.msra.mxu0 %v3107
      %3120 = vmatprep.subr.bf16.mxu0 0
      %3121 = vmatpush1.bf16.msra.mxu0 %v3108
      %3122 = vmatprep.subr.bf16.mxu0 0
      %3123 = vmatpush1.bf16.msra.mxu0 %v3109
      %3124 = vmatprep.subr.bf16.mxu0 0
      %3125 = vmatpush1.bf16.msra.mxu0 %v3110
      %3126 = vmatprep.subr.bf16.mxu0 0
      %3127 = vmatpush1.bf16.msra.mxu0 0
      %3128 = vmatprep.subr.bf16.mxu0 0
      %3129 = vmatpush1.bf16.msra.mxu0 0
      %3130 = vmatprep.subr.bf16.mxu0 0
      %3131 = vmatpush1.bf16.msra.mxu0 0
      %3132 = vmatprep.subr.bf16.mxu0 0
      %3133 = vmatpush1.bf16.msra.mxu0 0
      %3134 = vmatprep.subr.bf16.mxu0 0
      %3135 = vmatpush1.bf16.msra.mxu0 0
      %3136 = vmatprep.subr.bf16.mxu0 0
      %3137 = vmatpush1.bf16.msra.mxu0 0
      %3138 = vmatprep.subr.bf16.mxu0 0
      %3139 = vmatpush1.bf16.msra.mxu0 0
      %3140 = vmatprep.subr.bf16.mxu0 0
      %3141 = vmatpush1.bf16.msra.mxu0 0
      %3142 = vmatprep.subr.bf16.mxu0 0
      %3143 = vmatpush1.bf16.msra.mxu0 0
      %3144 = vmatprep.subr.bf16.mxu0 0
      %3145 = vmatpush1.bf16.msra.mxu0 0
      %3146 = vmatprep.subr.bf16.mxu0 0
      %3147 = vmatpush1.bf16.msra.mxu0 0
      %3148 = vmatprep.subr.bf16.mxu0 0
      %3149 = vmatpush1.bf16.msra.mxu0 0
      %3150 = vmatprep.mubr.bf16.mxu0 0
      %3151 = vmatmul.mubr.bf16.gmra.mrb[0].mxu0 %v3116
      %v3152 = vpop.f32.mrb[0].mxu0
      %v3153 = vadd.f32 0.0, %v3152
      %v3154 = vpop.f32.mrb[0].mxu0
      %v3155 = vpop.f32.mrb[0].mxu0
      %v3156 = vpop.f32.mrb[0].mxu0
      %3157 = vdwg.mxu0
      %v3158 = vadd.f32 %v3080, %v3153
      %v3159 = vpack.c.bf16 %v2535, %v2535
      %s3160 = scalar_lea.vmem %s6, 256
      %v3161 = vld [vmem:[%s3160] sm:$0xf]
      %v3162 = vld [vmem:[%s3160 + $0x4] sm:$0xf]
      %v3163 = vld [vmem:[%s3160 + $0x8] sm:$0xf]
      %v3164 = vld [vmem:[%s3160 + $0xc] sm:$0xf]
      %v3165 = vld [vmem:[%s3160 + $0x10] sm:$0xf]
      %v3166 = vld [vmem:[%s3160 + $0x14] sm:$0xf]
      %v3167 = vld [vmem:[%s3160 + $0x18] sm:$0xf]
      %v3168 = vld [vmem:[%s3160 + $0x1c] sm:$0xf]
      %v3177 = vunpack.c.l.b16 %v3161
      %v3178 = vunpack.c.l.b16 %v3162
      %v3179 = vunpack.c.l.b16 %v3163
      %v3180 = vunpack.c.l.b16 %v3164
      %v3181 = vunpack.c.l.b16 %v3165
      %v3182 = vunpack.c.l.b16 %v3166
      %v3183 = vunpack.c.l.b16 %v3167
      %v3184 = vunpack.c.l.b16 %v3168
      %v3185 = vpack.c.b16 %v3178, %v3177
      %v3186 = vpack.c.b16 %v3180, %v3179
      %v3187 = vpack.c.b16 %v3182, %v3181
      %v3188 = vpack.c.b16 %v3184, %v3183
      %v3194 = vsel %vm680, %v3159, 0
      %3196 = vmatprep.subr.bf16.mxu0 0
      %3197 = vmatpush1.bf16.msra.mxu0 %v3185
      %3198 = vmatprep.subr.bf16.mxu0 0
      %3199 = vmatpush1.bf16.msra.mxu0 %v3186
      %3200 = vmatprep.subr.bf16.mxu0 0
      %3201 = vmatpush1.bf16.msra.mxu0 %v3187
      %3202 = vmatprep.subr.bf16.mxu0 0
      %3203 = vmatpush1.bf16.msra.mxu0 %v3188
      %3204 = vmatprep.subr.bf16.mxu0 0
      %3205 = vmatpush1.bf16.msra.mxu0 0
      %3206 = vmatprep.subr.bf16.mxu0 0
      %3207 = vmatpush1.bf16.msra.mxu0 0
      %3208 = vmatprep.subr.bf16.mxu0 0
      %3209 = vmatpush1.bf16.msra.mxu0 0
      %3210 = vmatprep.subr.bf16.mxu0 0
      %3211 = vmatpush1.bf16.msra.mxu0 0
      %3212 = vmatprep.subr.bf16.mxu0 0
      %3213 = vmatpush1.bf16.msra.mxu0 0
      %3214 = vmatprep.subr.bf16.mxu0 0
      %3215 = vmatpush1.bf16.msra.mxu0 0
      %3216 = vmatprep.subr.bf16.mxu0 0
      %3217 = vmatpush1.bf16.msra.mxu0 0
      %3218 = vmatprep.subr.bf16.mxu0 0
      %3219 = vmatpush1.bf16.msra.mxu0 0
      %3220 = vmatprep.subr.bf16.mxu0 0
      %3221 = vmatpush1.bf16.msra.mxu0 0
      %3222 = vmatprep.subr.bf16.mxu0 0
      %3223 = vmatpush1.bf16.msra.mxu0 0
      %3224 = vmatprep.subr.bf16.mxu0 0
      %3225 = vmatpush1.bf16.msra.mxu0 0
      %3226 = vmatprep.subr.bf16.mxu0 0
      %3227 = vmatpush1.bf16.msra.mxu0 0
      %3228 = vmatprep.mubr.bf16.mxu0 0
      %3229 = vmatmul.mubr.bf16.gmra.mrb[0].mxu0 %v3194
      %v3230 = vpop.f32.mrb[0].mxu0
      %v3231 = vadd.f32 0.0, %v3230
      %v3232 = vpop.f32.mrb[0].mxu0
      %v3233 = vpop.f32.mrb[0].mxu0
      %v3234 = vpop.f32.mrb[0].mxu0
      %3235 = vdwg.mxu0
      %v3236 = vadd.f32 %v3158, %v3231
      %v3237 = vld [vmem:[%s7] sm:$0x1]
      %v3238 = vadd.f32 %v3236, %v3237
      %v3239 = vmax.f32 %v3238, 0.0
      %v3240 = vpack.c.bf16 %v3239, %v3239
      %v3241 = vld [vmem:[%s8] sm:$0xff]
      %v3242 = vld [vmem:[%s8 + $0x8] sm:$0xff]
      %v3243 = vld [vmem:[%s8 + $0x10] sm:$0xff]
      %v3244 = vld [vmem:[%s8 + $0x18] sm:$0xff]
      %v3245 = vld [vmem:[%s8 + $0x20] sm:$0xff]
      %v3246 = vld [vmem:[%s8 + $0x28] sm:$0xff]
      %v3247 = vld [vmem:[%s8 + $0x30] sm:$0xff]
      %v3248 = vld [vmem:[%s8 + $0x38] sm:$0xff]
      %v3249 = vld [vmem:[%s8 + $0x40] sm:$0xff]
      %v3250 = vld [vmem:[%s8 + $0x48] sm:$0xff]
      %v3251 = vld [vmem:[%s8 + $0x50] sm:$0xff]
      %v3252 = vld [vmem:[%s8 + $0x58] sm:$0xff]
      %v3253 = vld [vmem:[%s8 + $0x60] sm:$0xff]
      %v3254 = vld [vmem:[%s8 + $0x68] sm:$0xff]
      %v3255 = vld [vmem:[%s8 + $0x70] sm:$0xff]
      %v3256 = vld [vmem:[%s8 + $0x78] sm:$0xff]
      %v3257 = vld [vmem:[%s9] sm:$0xf]
      %v3274 = vunpack.c.l.b16 %v3241
      %v3275 = vunpack.c.h.b16 %v3241
      %v3276 = vunpack.c.l.b16 %v3242
      %v3277 = vunpack.c.h.b16 %v3242
      %v3278 = vunpack.c.l.b16 %v3243
      %v3279 = vunpack.c.h.b16 %v3243
      %v3280 = vunpack.c.l.b16 %v3244
      %v3281 = vunpack.c.h.b16 %v3244
      %v3282 = vunpack.c.l.b16 %v3245
      %v3283 = vunpack.c.h.b16 %v3245
      %v3284 = vunpack.c.l.b16 %v3246
      %v3285 = vunpack.c.h.b16 %v3246
      %v3286 = vunpack.c.l.b16 %v3247
      %v3287 = vunpack.c.h.b16 %v3247
      %v3288 = vunpack.c.l.b16 %v3248
      %v3289 = vunpack.c.h.b16 %v3248
      %v3290 = vunpack.c.l.b16 %v3249
      %v3291 = vunpack.c.h.b16 %v3249
      %v3292 = vunpack.c.l.b16 %v3250
      %v3293 = vunpack.c.h.b16 %v3250
      %v3294 = vunpack.c.l.b16 %v3251
      %v3295 = vunpack.c.h.b16 %v3251
      %v3296 = vunpack.c.l.b16 %v3252
      %v3297 = vunpack.c.h.b16 %v3252
      %v3298 = vunpack.c.l.b16 %v3253
      %v3299 = vunpack.c.h.b16 %v3253
      %v3300 = vunpack.c.l.b16 %v3254
      %v3301 = vunpack.c.h.b16 %v3254
      %v3302 = vunpack.c.l.b16 %v3255
      %v3303 = vunpack.c.h.b16 %v3255
      %v3304 = vunpack.c.l.b16 %v3256
      %v3305 = vunpack.c.h.b16 %v3256
      %v3306 = vpack.c.b16 %v3278, %v3274
      %v3307 = vpack.c.b16 %v3279, %v3275
      %v3308 = vpack.c.b16 %v3280, %v3276
      %v3309 = vpack.c.b16 %v3281, %v3277
      %v3310 = vpack.c.b16 %v3286, %v3282
      %v3311 = vpack.c.b16 %v3287, %v3283
      %v3312 = vpack.c.b16 %v3288, %v3284
      %v3313 = vpack.c.b16 %v3289, %v3285
      %v3314 = vpack.c.b16 %v3294, %v3290
      %v3315 = vpack.c.b16 %v3295, %v3291
      %v3316 = vpack.c.b16 %v3296, %v3292
      %v3317 = vpack.c.b16 %v3297, %v3293
      %v3318 = vpack.c.b16 %v3302, %v3298
      %v3319 = vpack.c.b16 %v3303, %v3299
      %v3320 = vpack.c.b16 %v3304, %v3300
      %v3321 = vpack.c.b16 %v3305, %v3301
      %v3339 = vlaneseq
      %v3340 = vshrl.u32 %v3339, 7
      %v3341 = vsub.s32 0, %v3340
      %v3342 = vrot.slane %v3257, %v3341
      %v3343 = vlaneseq
      %v3344 = vshrl.u32 %v3343, 7
      %v3345 = vsub.s32 1, %v3344
      %v3346 = vrot.slane %v3257, %v3345
      %v3347 = vlaneseq
      %v3348 = vshrl.u32 %v3347, 7
      %v3349 = vsub.s32 2, %v3348
      %v3350 = vrot.slane %v3257, %v3349
      %v3351 = vlaneseq
      %v3352 = vshrl.u32 %v3351, 7
      %v3353 = vsub.s32 3, %v3352
      %v3354 = vrot.slane %v3257, %v3353
      %v3360 = vsel %vm680, %v3240, 0
      %3362 = vmatprep.subr.bf16.mxu0 %v3307
      %3363 = vmatpush1.bf16.msra.mxu0 %v3306
      %3364 = vmatprep.subr.bf16.mxu0 %v3311
      %3365 = vmatpush1.bf16.msra.mxu0 %v3310
      %3366 = vmatprep.subr.bf16.mxu0 %v3315
      %3367 = vmatpush1.bf16.msra.mxu0 %v3314
      %3368 = vmatprep.subr.bf16.mxu0 %v3319
      %3369 = vmatpush1.bf16.msra.mxu0 %v3318
      %3370 = vmatprep.subr.bf16.mxu0 0
      %3371 = vmatpush1.bf16.msra.mxu0 0
      %3372 = vmatprep.subr.bf16.mxu0 0
      %3373 = vmatpush1.bf16.msra.mxu0 0
      %3374 = vmatprep.subr.bf16.mxu0 0
      %3375 = vmatpush1.bf16.msra.mxu0 0
      %3376 = vmatprep.subr.bf16.mxu0 0
      %3377 = vmatpush1.bf16.msra.mxu0 0
      %3378 = vmatprep.subr.bf16.mxu0 0
      %3379 = vmatpush1.bf16.msra.mxu0 0
      %3380 = vmatprep.subr.bf16.mxu0 0
      %3381 = vmatpush1.bf16.msra.mxu0 0
      %3382 = vmatprep.subr.bf16.mxu0 0
      %3383 = vmatpush1.bf16.msra.mxu0 0
      %3384 = vmatprep.subr.bf16.mxu0 0
      %3385 = vmatpush1.bf16.msra.mxu0 0
      %3386 = vmatprep.subr.bf16.mxu0 0
      %3387 = vmatpush1.bf16.msra.mxu0 0
      %3388 = vmatprep.subr.bf16.mxu0 0
      %3389 = vmatpush1.bf16.msra.mxu0 0
      %3390 = vmatprep.subr.bf16.mxu0 0
      %3391 = vmatpush1.bf16.msra.mxu0 0
      %3392 = vmatprep.subr.bf16.mxu0 0
      %3393 = vmatpush1.bf16.msra.mxu0 0
      %3394 = vmatprep.mubr.bf16.mxu0 0
      %3395 = vmatmul.mubr.bf16.gmra.mrb[0].mxu0 %v3360
      %v3396 = vpop.f32.mrb[0].mxu0
      %v3397 = vadd.f32 %v3342, %v3396
      %v3398 = vpop.f32.mrb[0].mxu0
      %v3399 = vadd.f32 %v3346, %v3398
      %v3400 = vpop.f32.mrb[0].mxu0
      %v3401 = vpop.f32.mrb[0].mxu0
      %3402 = vdwg.mxu0
      %3403 = vmatprep.subr.bf16.mxu0 %v3309
      %3404 = vmatpush1.bf16.msra.mxu0 %v3308
      %3405 = vmatprep.subr.bf16.mxu0 %v3313
      %3406 = vmatpush1.bf16.msra.mxu0 %v3312
      %3407 = vmatprep.subr.bf16.mxu0 %v3317
      %3408 = vmatpush1.bf16.msra.mxu0 %v3316
      %3409 = vmatprep.subr.bf16.mxu0 %v3321
      %3410 = vmatpush1.bf16.msra.mxu0 %v3320
      %3411 = vmatprep.subr.bf16.mxu0 0
      %3412 = vmatpush1.bf16.msra.mxu0 0
      %3413 = vmatprep.subr.bf16.mxu0 0
      %3414 = vmatpush1.bf16.msra.mxu0 0
      %3415 = vmatprep.subr.bf16.mxu0 0
      %3416 = vmatpush1.bf16.msra.mxu0 0
      %3417 = vmatprep.subr.bf16.mxu0 0
      %3418 = vmatpush1.bf16.msra.mxu0 0
      %3419 = vmatprep.subr.bf16.mxu0 0
      %3420 = vmatpush1.bf16.msra.mxu0 0
      %3421 = vmatprep.subr.bf16.mxu0 0
      %3422 = vmatpush1.bf16.msra.mxu0 0
      %3423 = vmatprep.subr.bf16.mxu0 0
      %3424 = vmatpush1.bf16.msra.mxu0 0
      %3425 = vmatprep.subr.bf16.mxu0 0
      %3426 = vmatpush1.bf16.msra.mxu0 0
      %3427 = vmatprep.subr.bf16.mxu0 0
      %3428 = vmatpush1.bf16.msra.mxu0 0
      %3429 = vmatprep.subr.bf16.mxu0 0
      %3430 = vmatpush1.bf16.msra.mxu0 0
      %3431 = vmatprep.subr.bf16.mxu0 0
      %3432 = vmatpush1.bf16.msra.mxu0 0
      %3433 = vmatprep.subr.bf16.mxu0 0
      %3434 = vmatpush1.bf16.msra.mxu0 0
      %3435 = vmatprep.mubr.bf16.mxu0 0
      %3436 = vmatmul.mubr.bf16.gmra.mrb[0].mxu0 %v3360
      %v3437 = vpop.f32.mrb[0].mxu0
      %v3438 = vadd.f32 %v3350, %v3437
      %v3439 = vpop.f32.mrb[0].mxu0
      %v3440 = vadd.f32 %v3354, %v3439
      %v3441 = vpop.f32.mrb[0].mxu0
      %v3442 = vpop.f32.mrb[0].mxu0
      %3443 = vdwg.mxu0
      %v3444 = vmax.f32 %v3397, 0.0
      %v3445 = vmax.f32 %v3399, 0.0
      %v3446 = vmax.f32 %v3438, 0.0
      %v3447 = vmax.f32 %v3440, 0.0
      %v3448 = vld [vmem:[%s10] sm:$0xf]
      %v3450 = vlaneseq
      %v3451 = vshrl.u32 %v3450, 7
      %v3452 = vsub.s32 0, %v3451
      %v3453 = vrot.slane %v3448, %v3452
      %v3454 = vlaneseq
      %v3455 = vshrl.u32 %v3454, 7
      %v3456 = vsub.s32 1, %v3455
      %v3457 = vrot.slane %v3448, %v3456
      %v3458 = vlaneseq
      %v3459 = vshrl.u32 %v3458, 7
      %v3460 = vsub.s32 2, %v3459
      %v3461 = vrot.slane %v3448, %v3460
      %v3462 = vlaneseq
      %v3463 = vshrl.u32 %v3462, 7
      %v3464 = vsub.s32 3, %v3463
      %v3465 = vrot.slane %v3448, %v3464
      %v3470 = vmul.f32 %v3444, %v3453
      %v3471 = vmul.f32 %v3445, %v3457
      %v3472 = vmul.f32 %v3446, %v3461
      %v3473 = vmul.f32 %v3447, %v3465
      %vm3474 = vcmask 1040384
      %v3475 = vsel %vm3474, %v3470, 0.0
      %v3476 = vsel %vm3474, %v3471, 0.0
      %v3477 = vadd.f32 %v3475, %v3476
      %v3478 = vsel %vm3474, %v3472, 0.0
      %v3479 = vadd.f32 %v3477, %v3478
      %v3480 = vsel %vm3474, %v3473, 0.0
      %v3481 = vadd.f32 %v3479, %v3480
      %3482 = vadd.xlane.f32.xlu0 %v3481
      %v3483 = vpop.xlane.xlu0 %3482
      %v3484 = vlaneseq
      %v3485 = vshrl.u32 %v3484, 7
      %v3486 = vsub.s32 0, %v3485
      %v3487 = vrot.slane %v3483, %v3486
      %v3488 = vld [vmem:[%s11] sm:$0x1]
      %v3490 = vlaneseq
      %v3491 = vshrl.u32 %v3490, 7
      %v3492 = vsub.s32 0, %v3491
      %v3493 = vrot.slane %v3488, %v3492
      %v3495 = vadd.f32 %v3487, %v3493
      %3496 = vst [vmem:[%s411] sm:$0xff] %v3495
      %p3497 = scmp.lt.s32.totalorder %s23, 1
      %s3498 = scalar_select %p3497, %s23, 1
      %s3499 = smul.addr %s3498, 8
      %s3500 = scalar_lea.vmem %s12, %s3499
      // Predicated region
      $region69: #{critic_forward.1} parent=67 // pred_check
        %p3501 = pneg %p298
      $region70: #{critic_forward.1} parent=67 // pred_check_branch
        %3503 = sbr.rel (%p3501) target = $region72
      $region71: #{critic_forward.1} parent=67 // pred_region
        _
      $region72: #{critic_forward.1} parent=67 // pred_fallthru
        _
    $region68: #{critic_forward.1} parent=5 // pred_fallthru
      _
    %p3504 = scmp.le.s32.totalorder 2, %s18
    // Predicated region
    $region73: #{critic_forward.1} parent=5 // pred_check
      %p3505 = pneg %p3504
    $region74: #{critic_forward.1} parent=5 // pred_check_branch
      %3507 = sbr.rel (%p3505) target = $region76
    $region75: #{critic_forward.1} parent=5 // pred_region
      %s3508 = ssub.s32 %s18, 2
      // Predicated region
      $region77: #{critic_forward.1} parent=75 // pred_check
        %p3509 = pneg %p304
      $region78: #{critic_forward.1} parent=75 // pred_check_branch
        %3511 = sbr.rel (%p3509) target = $region80
      $region79: #{critic_forward.1} parent=75 // pred_region
        %p3512 = scmp.lt.s32.totalorder %s24, 1
        %s3513 = scalar_select %p3512, %s24, 1
        %s3514 = smul.addr %s3513, 8
        %s3515 = scalar_lea.vmem %s12, %s3514
      $region80: #{critic_forward.1} parent=75 // pred_fallthru
        _
    $region76: #{critic_forward.1} parent=5 // pred_fallthru
      _
  $region6: #{critic_forward.1} parent=0 // loop_footer
    %s22 = sadd.s32 1, %s18
  $region7: #{critic_forward.1} parent=0 // loop_footer_branch
    %17 = sbr.rel target = $region3
  $region8: #{critic_forward.1} parent=0 // loop_exit
    _

</llo_original>
